<compile_context>
chip_gen: v7x
topology: tpu7x:2x2x1
jax: 0.10.0
libtpu: 0.0.40
codegen_flags: <defaults>
</compile_context>

<pallas_src>
import math
import functools
import numpy as np

import jax
import jax.numpy as jnp
from jax.experimental import pallas as pl
from jax.experimental.pallas import tpu as pltpu

SQRT_HALF = np.float32(math.sqrt(0.5))


# -----------------------------------------------------------------------------
# Fused kernel: front conv + all residual blocks + final conv, per batch elem.
# -----------------------------------------------------------------------------
def _wavenet_fused_kernel(xp_ref, c_ref, fw_ref, fb_ref,
                          wfg_ref, bfg_ref, wrs_ref, brs_ref,
                          w1_ref, b1_ref, w2_ref, b2_ref,
                          o_ref, hbuf_ref, slab_ref,
                          *, dilations, K, Kf, Cres, Cg, Csk, Ccond, T, PADL):
    # ---- one-time per grid step: zero causal halo, load layer-invariant c ----
    hbuf_ref[:, 0:PADL] = jnp.zeros((Cres, PADL), jnp.float32)
    slab_ref[K * Cres:K * Cres + Ccond, :] = c_ref[0]          # (Ccond, T)

    # ---- front conv: causal Conv1d(1 -> Cres, kernel=Kf) + ReLU (VPU) -------
    xp = xp_ref[0]                                             # (1, T + Kf - 1)
    fw = fw_ref[...]                                           # (Cres, Kf)
    acc = jnp.zeros((Cres, T), jnp.float32)
    for j in range(Kf):                                        # static taps
        acc = acc + fw[:, j:j + 1] * xp[:, j:j + T]            # (Cres,1)*(1,T)
    h = jnp.maximum(acc + fb_ref[...], 0.0)                    # (Cres, T)

    skip = jnp.zeros((Csk, T), jnp.float32)

    # ---- residual blocks: statically unrolled, VMEM-resident h / skip -------
    for li, d in enumerate(dilations):
        # stash h with a left halo of zeros so shifted taps are static slices
        hbuf_ref[:, PADL:PADL + T] = h
        for j in range(K):                                     # im2col slab rows
            s = d * (K - 1 - j)                                # causal shift
            slab_ref[j * Cres:(j + 1) * Cres, :] = \
                hbuf_ref[:, PADL - s:PADL - s + T]

        # fused filter||gate dilated conv + conditioning 1x1  (one MXU matmul)
        hfg = jnp.dot(wfg_ref[li], slab_ref[...],
                      preferred_element_type=jnp.float32) + bfg_ref[li]
        gated = jnp.tanh(hfg[:Cg]) * jax.nn.sigmoid(hfg[Cg:])  # (Cg, T)

        # fused residual||skip 1x1 convs                       (one MXU matmul)
        rs = jnp.dot(wrs_ref[li], gated,
                     preferred_element_type=jnp.float32) + brs_ref[li]
        h = (h + rs[:Cres]) * SQRT_HALF
        skip = skip + rs[Cres:]

    # ---- final conv: ReLU -> 1x1 -> ReLU -> 1x1 ------------------------------
    s = jnp.maximum(skip, 0.0)
    hm = jnp.dot(w1_ref[...], s, preferred_element_type=jnp.float32) + b1_ref[...]
    hm = jnp.maximum(hm, 0.0)
    o = jnp.dot(w2_ref[...], hm, preferred_element_type=jnp.float32) + b2_ref[...]
    o_ref[0] = o.astype(o_ref.dtype)


# -----------------------------------------------------------------------------
# One-time parameter re-packing into the fused kernel layout.
# -----------------------------------------------------------------------------
def prepare_params(params, cfg):
    Cres, Cg = cfg["residual_channels"], cfg["gate_channels"]
    K = cfg["kernel_size"]

    fw = params["front_w"][:, 0, :]                            # (Cres, Kf)
    fb = params["front_b"][:, None]

    wfg, bfg, wrs, brs = [], [], [], []
    for lp in params["layers"]:
        # tap-major contraction layout: column block j holds W[:, :, j]
        f_taps = jnp.transpose(lp["wf"], (0, 2, 1)).reshape(Cg, K * Cres)
        g_taps = jnp.transpose(lp["wg"], (0, 2, 1)).reshape(Cg, K * Cres)
        top = jnp.concatenate([f_taps, lp["wfc"]], axis=1)     # filter + cond
        bot = jnp.concatenate([g_taps, lp["wgc"]], axis=1)     # gate   + cond
        wfg.append(jnp.concatenate([top, bot], axis=0))        # (2Cg, K*Cres+Ccond)
        bfg.append(jnp.concatenate([lp["bf"] + lp["bfc"],
                                    lp["bg"] + lp["bgc"]])[:, None])
        wrs.append(jnp.concatenate([lp["wr"], lp["ws"]], axis=0))  # (Cres+Csk, Cg)
        brs.append(jnp.concatenate([lp["br"], lp["bs"]])[:, None])

    return dict(
        fw=fw, fb=fb,
        wfg=jnp.stack(wfg), bfg=jnp.stack(bfg),
        wrs=jnp.stack(wrs), brs=jnp.stack(brs),
        w1=params["fin_w1"], b1=params["fin_b1"][:, None],
        w2=params["fin_w2"], b2=params["fin_b2"][:, None],
    )


# -----------------------------------------------------------------------------
# Wrapper: lane-align time, build grid/BlockSpecs, single pallas_call.
# -----------------------------------------------------------------------------
def wavenet_flow_pallas(x, c, prep, cfg):
    B, _, T = x.shape
    Cres, Cg = cfg["residual_channels"], cfg["gate_channels"]
    Csk, Ccond = cfg["skip_channels"], cfg["cout_channels"]
    Cout, K, Kf = cfg["out_channels"], cfg["kernel_size"], cfg["front_channels"]
    L = cfg["num_blocks"] * cfg["num_layers"]
    dilations = tuple(2 ** (i % cfg["num_layers"]) for i in range(L))

    # lane-align time (multiple of 128); right padding is inert (causal net)
    Tp = ((T + 127) // 128) * 128
    # causal halo for the deepest dilation, rounded up to a lane multiple
    PADL = max(128, ((max(dilations) * (K - 1) + 127) // 128) * 128)

    xp = jnp.pad(x, ((0, 0), (0, 0), (Kf - 1, Tp - T)))        # front halo + lane pad
    cp = jnp.pad(c, ((0, 0), (0, 0), (0, Tp - T)))

    KC = K * Cres + Ccond
    kernel = functools.partial(
        _wavenet_fused_kernel, dilations=dilations, K=K, Kf=Kf,
        Cres=Cres, Cg=Cg, Csk=Csk, Ccond=Ccond, T=Tp, PADL=PADL)

    out = pl.pallas_call(
        kernel,
        out_shape=jax.ShapeDtypeStruct((B, Cout, Tp), jnp.float32),
        grid_spec=pltpu.PrefetchScalarGridSpec(
            num_scalar_prefetch=0,
            grid=(B,),
            in_specs=[
                pl.BlockSpec((1, 1, Tp + Kf - 1), lambda b: (b, 0, 0)),     # xp
                pl.BlockSpec((1, Ccond, Tp), lambda b: (b, 0, 0)),          # c
                pl.BlockSpec((Cres, Kf), lambda b: (0, 0)),                 # fw
                pl.BlockSpec((Cres, 1), lambda b: (0, 0)),                  # fb
                pl.BlockSpec((L, 2 * Cg, KC), lambda b: (0, 0, 0)),         # wfg
                pl.BlockSpec((L, 2 * Cg, 1), lambda b: (0, 0, 0)),          # bfg
                pl.BlockSpec((L, Cres + Csk, Cg), lambda b: (0, 0, 0)),     # wrs
                pl.BlockSpec((L, Cres + Csk, 1), lambda b: (0, 0, 0)),      # brs
                pl.BlockSpec((Csk, Csk), lambda b: (0, 0)),                 # w1
                pl.BlockSpec((Csk, 1), lambda b: (0, 0)),                   # b1
                pl.BlockSpec((Cout, Csk), lambda b: (0, 0)),                # w2
                pl.BlockSpec((Cout, 1), lambda b: (0, 0)),                  # b2
            ],
            out_specs=pl.BlockSpec((1, Cout, Tp), lambda b: (b, 0, 0)),
            scratch_shapes=[
                pltpu.VMEM((Cres, PADL + Tp), jnp.float32),                 # hbuf
                pltpu.VMEM((KC, Tp), jnp.float32),                          # slab
            ],
        ),
        compiler_params=pltpu.CompilerParams(
            dimension_semantics=("parallel",)),
    )(xp, cp, prep["fw"], prep["fb"], prep["wfg"], prep["bfg"],
      prep["wrs"], prep["brs"], prep["w1"], prep["b1"], prep["w2"], prep["b2"])
    return out[:, :, :T]


# -----------------------------------------------------------------------------
# Pure-JAX reference (numerics oracle)
# -----------------------------------------------------------------------------
def _conv1d_causal_ref(x, w, b, dilation):
    K = w.shape[-1]
    pad = dilation * (K - 1)
    out = jax.lax.conv_general_dilated(
        x, w, window_strides=(1,), padding=[(pad, 0)],
        rhs_dilation=(dilation,), dimension_numbers=("NCH", "OIH", "NCH"))
    return out + b[None, :, None]


def wavenet_flow_ref(x, c, params, cfg):
    h = jax.nn.relu(_conv1d_causal_ref(x, params["front_w"], params["front_b"], 1))
    skip = jnp.zeros((x.shape[0], cfg["skip_channels"], x.shape[2]), jnp.float32)
    for i, lp in enumerate(params["layers"]):
        d = 2 ** (i % cfg["num_layers"])
        hf = _conv1d_causal_ref(h, lp["wf"], lp["bf"], d)
        hg = _conv1d_causal_ref(h, lp["wg"], lp["bg"], d)
        hf = hf + jnp.einsum("oc,bct->bot", lp["wfc"], c) + lp["bfc"][None, :, None]
        hg = hg + jnp.einsum("oc,bct->bot", lp["wgc"], c) + lp["bgc"][None, :, None]
        out = jnp.tanh(hf) * jax.nn.sigmoid(hg)
        res = jnp.einsum("oc,bct->bot", lp["wr"], out) + lp["br"][None, :, None]
        s = jnp.einsum("oc,bct->bot", lp["ws"], out) + lp["bs"][None, :, None]
        h = (h + res) * math.sqrt(0.5)
        skip = skip + s
    s = jax.nn.relu(skip)
    hm = jax.nn.relu(jnp.einsum("oc,bct->bot", params["fin_w1"], s)
                     + params["fin_b1"][None, :, None])
    return (jnp.einsum("oc,bct->bot", params["fin_w2"], hm)
            + params["fin_b2"][None, :, None])


# -----------------------------------------------------------------------------
# Deterministic synthetic parameters (shapes follow the module __init__)
# -----------------------------------------------------------------------------
def init_params(key, cfg):
    n_layers = cfg["num_blocks"] * cfg["num_layers"]
    keys = iter(jax.random.split(key, 6 + 12 * n_layers))

    def nrm(shape, scale=0.1):
        return (scale * jax.random.normal(next(keys), shape)).astype(jnp.float32)

    Cres, Cg, Csk = cfg["residual_channels"], cfg["gate_channels"], cfg["skip_channels"]
    Ccond, K = cfg["cout_channels"], cfg["kernel_size"]

    params = {
        "front_w": nrm((Cres, 1, cfg["front_channels"])),    # Conv(1,Cres,k=front)
        "front_b": nrm((Cres,), 0.01),
        "layers": [],
        "fin_w1": nrm((Csk, Csk)),                            # Conv(Csk,Csk,1)
        "fin_b1": nrm((Csk,), 0.01),
        "fin_w2": nrm((cfg["out_channels"], Csk)),            # Conv(Csk,out,1)
        "fin_b2": nrm((cfg["out_channels"],), 0.01),
    }
    for _ in range(n_layers):
        params["layers"].append(dict(
            wf=nrm((Cg, Cres, K)), bf=nrm((Cg,), 0.01),       # filter_conv
            wg=nrm((Cg, Cres, K)), bg=nrm((Cg,), 0.01),       # gate_conv
            wfc=nrm((Cg, Ccond)), bfc=nrm((Cg,), 0.01),       # filter_conv_c (1x1)
            wgc=nrm((Cg, Ccond)), bgc=nrm((Cg,), 0.01),       # gate_conv_c (1x1)
            wr=nrm((Cres, Cg)), br=nrm((Cres,), 0.01),        # res_conv (1x1)
            ws=nrm((Csk, Cg)), bs=nrm((Csk,), 0.01),          # skip_conv (1x1)
        ))
    return params


# -----------------------------------------------------------------------------
if __name__ == "__main__":
    cfg = dict(out_channels=1, num_blocks=1, num_layers=4, front_channels=8,
               residual_channels=32, gate_channels=32, skip_channels=32,
               kernel_size=3, cout_channels=32, causal=True)
    B, T = 2, 100     # T deliberately not a multiple of 128 to exercise padding

    key = jax.random.PRNGKey(0)
    kx, kc, kp = jax.random.split(key, 3)
    x = jax.random.normal(kx, (B, 1, T), jnp.float32)                     # audio (NCL)
    c = jax.random.normal(kc, (B, cfg["cout_channels"], T), jnp.float32)  # conditioning
    params = init_params(kp, cfg)
    prep = prepare_params(params, cfg)    # one-time kernel-layout re-pack

    forward = jax.jit(lambda x_, c_, p_: wavenet_flow_pallas(x_, c_, p_, cfg))
    out = jax.block_until_ready(forward(x, c, prep))

    ref = jax.block_until_ready(wavenet_flow_ref(x, c, params, cfg))
    assert out.shape == (B, cfg["out_channels"], T)
    np.testing.assert_allclose(np.asarray(out), np.asarray(ref), rtol=1e-4, atol=1e-4)

    print("KERNEL_OK")
</pallas_src>

<mosaic_0001>
module attributes {stable_mosaic.version = 11 : i64} {
  func.func @_wavenet_fused_kernel(%arg0: i32, %arg1: memref<1x1x135xf32, #tpu.memory_space<vmem>>, %arg2: memref<1x32x128xf32, #tpu.memory_space<vmem>>, %arg3: memref<32x8xf32, #tpu.memory_space<vmem>>, %arg4: memref<32x1xf32, #tpu.memory_space<vmem>>, %arg5: memref<4x64x128xf32, #tpu.memory_space<vmem>>, %arg6: memref<4x64x1xf32, #tpu.memory_space<vmem>>, %arg7: memref<4x64x32xf32, #tpu.memory_space<vmem>>, %arg8: memref<4x64x1xf32, #tpu.memory_space<vmem>>, %arg9: memref<32x32xf32, #tpu.memory_space<vmem>>, %arg10: memref<32x1xf32, #tpu.memory_space<vmem>>, %arg11: memref<1x32xf32, #tpu.memory_space<vmem>>, %arg12: memref<1x1xf32, #tpu.memory_space<vmem>>, %arg13: memref<1x1x128xf32, #tpu.memory_space<vmem>>, %arg14: memref<32x256xf32, #tpu.memory_space<vmem>>, %arg15: memref<128x128xf32, #tpu.memory_space<vmem>>) attributes {dimension_semantics = [#tpu.dimension_semantics<parallel>], iteration_bounds = array<i64: 2>, scalar_prefetch = 0 : i64, scratch_operands = 2 : i64, tpu.core_type = #tpu.core_type<tc>, window_params = [{transform_indices = @transform_0, window_bounds = array<i64: 1, 1, 135>}, {transform_indices = @transform_1, window_bounds = array<i64: 1, 32, 128>}, {pipeline_mode = #tpu.pipeline_mode<synchronous>, transform_indices = @transform_2, window_bounds = array<i64: 32, 8>}, {pipeline_mode = #tpu.pipeline_mode<synchronous>, transform_indices = @transform_3, window_bounds = array<i64: 32, 1>}, {pipeline_mode = #tpu.pipeline_mode<synchronous>, transform_indices = @transform_4, window_bounds = array<i64: 4, 64, 128>}, {pipeline_mode = #tpu.pipeline_mode<synchronous>, transform_indices = @transform_5, window_bounds = array<i64: 4, 64, 1>}, {pipeline_mode = #tpu.pipeline_mode<synchronous>, transform_indices = @transform_6, window_bounds = array<i64: 4, 64, 32>}, {pipeline_mode = #tpu.pipeline_mode<synchronous>, transform_indices = @transform_7, window_bounds = array<i64: 4, 64, 1>}, {pipeline_mode = #tpu.pipeline_mode<synchronous>, transform_indices = @transform_8, window_bounds = array<i64: 32, 32>}, {pipeline_mode = #tpu.pipeline_mode<synchronous>, transform_indices = @transform_9, window_bounds = array<i64: 32, 1>}, {pipeline_mode = #tpu.pipeline_mode<synchronous>, transform_indices = @transform_10, window_bounds = array<i64: 1, 32>}, {pipeline_mode = #tpu.pipeline_mode<synchronous>, transform_indices = @transform_11, window_bounds = array<i64: 1, 1>}, {transform_indices = @transform_12, window_bounds = array<i64: 1, 1, 128>}]} {
    %cst = arith.constant 0.000000e+00 : f32
    %0 = vector.broadcast %cst : f32 to vector<32x128xf32>
    %c0 = arith.constant 0 : index
    %c0_0 = arith.constant 0 : index
    %1 = vector.load %arg14[%c0, %c0_0] : memref<32x256xf32, #tpu.memory_space<vmem>>, vector<32x128xf32>
    tpu.vector_store %arg14[%c0, %c0_0], %0 {strides = array<i32>} : memref<32x256xf32, #tpu.memory_space<vmem>>, vector<32x128xf32>,
    %c0_1 = arith.constant 0 : index
    %c0_2 = arith.constant 0 : index
    %c0_3 = arith.constant 0 : index
    %2 = vector.load %arg2[%c0_1, %c0_2, %c0_3] : memref<1x32x128xf32, #tpu.memory_space<vmem>>, vector<1x32x128xf32>
    %3 = vector.shape_cast %2 : vector<1x32x128xf32> to vector<32x128xf32>
    %c96 = arith.constant 96 : index
    %c0_4 = arith.constant 0 : index
    %4 = vector.load %arg15[%c96, %c0_4] : memref<128x128xf32, #tpu.memory_space<vmem>>, vector<32x128xf32>
    tpu.vector_store %arg15[%c96, %c0_4], %3 {strides = array<i32>} : memref<128x128xf32, #tpu.memory_space<vmem>>, vector<32x128xf32>,
    %c0_5 = arith.constant 0 : index
    %c0_6 = arith.constant 0 : index
    %c0_7 = arith.constant 0 : index
    %5 = vector.load %arg1[%c0_5, %c0_6, %c0_7] : memref<1x1x135xf32, #tpu.memory_space<vmem>>, vector<1x1x135xf32>
    %6 = vector.shape_cast %5 : vector<1x1x135xf32> to vector<1x135xf32>
    %c0_8 = arith.constant 0 : index
    %c0_9 = arith.constant 0 : index
    %7 = vector.load %arg3[%c0_8, %c0_9] : memref<32x8xf32, #tpu.memory_space<vmem>>, vector<32x8xf32>
    %cst_10 = arith.constant 0.000000e+00 : f32
    %8 = vector.broadcast %cst_10 : f32 to vector<32x128xf32>
    %9 = vector.extract_strided_slice %7 {offsets = [0, 0], sizes = [32, 1], strides = [1, 1]} : vector<32x8xf32> to vector<32x1xf32>
    %10 = vector.extract_strided_slice %6 {offsets = [0, 0], sizes = [1, 128], strides = [1, 1]} : vector<1x135xf32> to vector<1x128xf32>
    %11 = vector.broadcast %9 : vector<32x1xf32> to vector<32x128xf32>
    %12 = vector.broadcast %10 : vector<1x128xf32> to vector<32x128xf32>
    %13 = arith.mulf %11, %12 : vector<32x128xf32>
    %14 = arith.addf %8, %13 : vector<32x128xf32>
    %15 = vector.extract_strided_slice %7 {offsets = [0, 1], sizes = [32, 1], strides = [1, 1]} : vector<32x8xf32> to vector<32x1xf32>
    %16 = vector.extract_strided_slice %6 {offsets = [0, 1], sizes = [1, 128], strides = [1, 1]} : vector<1x135xf32> to vector<1x128xf32>
    %17 = vector.broadcast %15 : vector<32x1xf32> to vector<32x128xf32>
    %18 = vector.broadcast %16 : vector<1x128xf32> to vector<32x128xf32>
    %19 = arith.mulf %17, %18 : vector<32x128xf32>
    %20 = arith.addf %14, %19 : vector<32x128xf32>
    %21 = vector.extract_strided_slice %7 {offsets = [0, 2], sizes = [32, 1], strides = [1, 1]} : vector<32x8xf32> to vector<32x1xf32>
    %22 = vector.extract_strided_slice %6 {offsets = [0, 2], sizes = [1, 128], strides = [1, 1]} : vector<1x135xf32> to vector<1x128xf32>
    %23 = vector.broadcast %21 : vector<32x1xf32> to vector<32x128xf32>
    %24 = vector.broadcast %22 : vector<1x128xf32> to vector<32x128xf32>
    %25 = arith.mulf %23, %24 : vector<32x128xf32>
    %26 = arith.addf %20, %25 : vector<32x128xf32>
    %27 = vector.extract_strided_slice %7 {offsets = [0, 3], sizes = [32, 1], strides = [1, 1]} : vector<32x8xf32> to vector<32x1xf32>
    %28 = vector.extract_strided_slice %6 {offsets = [0, 3], sizes = [1, 128], strides = [1, 1]} : vector<1x135xf32> to vector<1x128xf32>
    %29 = vector.broadcast %27 : vector<32x1xf32> to vector<32x128xf32>
    %30 = vector.broadcast %28 : vector<1x128xf32> to vector<32x128xf32>
    %31 = arith.mulf %29, %30 : vector<32x128xf32>
    %32 = arith.addf %26, %31 : vector<32x128xf32>
    %33 = vector.extract_strided_slice %7 {offsets = [0, 4], sizes = [32, 1], strides = [1, 1]} : vector<32x8xf32> to vector<32x1xf32>
    %34 = vector.extract_strided_slice %6 {offsets = [0, 4], sizes = [1, 128], strides = [1, 1]} : vector<1x135xf32> to vector<1x128xf32>
    %35 = vector.broadcast %33 : vector<32x1xf32> to vector<32x128xf32>
    %36 = vector.broadcast %34 : vector<1x128xf32> to vector<32x128xf32>
    %37 = arith.mulf %35, %36 : vector<32x128xf32>
    %38 = arith.addf %32, %37 : vector<32x128xf32>
    %39 = vector.extract_strided_slice %7 {offsets = [0, 5], sizes = [32, 1], strides = [1, 1]} : vector<32x8xf32> to vector<32x1xf32>
    %40 = vector.extract_strided_slice %6 {offsets = [0, 5], sizes = [1, 128], strides = [1, 1]} : vector<1x135xf32> to vector<1x128xf32>
    %41 = vector.broadcast %39 : vector<32x1xf32> to vector<32x128xf32>
    %42 = vector.broadcast %40 : vector<1x128xf32> to vector<32x128xf32>
    %43 = arith.mulf %41, %42 : vector<32x128xf32>
    %44 = arith.addf %38, %43 : vector<32x128xf32>
    %45 = vector.extract_strided_slice %7 {offsets = [0, 6], sizes = [32, 1], strides = [1, 1]} : vector<32x8xf32> to vector<32x1xf32>
    %46 = vector.extract_strided_slice %6 {offsets = [0, 6], sizes = [1, 128], strides = [1, 1]} : vector<1x135xf32> to vector<1x128xf32>
    %47 = vector.broadcast %45 : vector<32x1xf32> to vector<32x128xf32>
    %48 = vector.broadcast %46 : vector<1x128xf32> to vector<32x128xf32>
    %49 = arith.mulf %47, %48 : vector<32x128xf32>
    %50 = arith.addf %44, %49 : vector<32x128xf32>
    %51 = vector.extract_strided_slice %7 {offsets = [0, 7], sizes = [32, 1], strides = [1, 1]} : vector<32x8xf32> to vector<32x1xf32>
    %52 = vector.extract_strided_slice %6 {offsets = [0, 7], sizes = [1, 128], strides = [1, 1]} : vector<1x135xf32> to vector<1x128xf32>
    %53 = vector.broadcast %51 : vector<32x1xf32> to vector<32x128xf32>
    %54 = vector.broadcast %52 : vector<1x128xf32> to vector<32x128xf32>
    %55 = arith.mulf %53, %54 : vector<32x128xf32>
    %56 = arith.addf %50, %55 : vector<32x128xf32>
    %c0_11 = arith.constant 0 : index
    %c0_12 = arith.constant 0 : index
    %57 = vector.load %arg4[%c0_11, %c0_12] : memref<32x1xf32, #tpu.memory_space<vmem>>, vector<32x1xf32>
    %58 = vector.broadcast %57 : vector<32x1xf32> to vector<32x128xf32>
    %59 = arith.addf %56, %58 : vector<32x128xf32>
    %cst_13 = arith.constant 0.000000e+00 : f32
    %60 = vector.broadcast %cst_13 : f32 to vector<32x128xf32>
    %61 = arith.maximumf %59, %60 : vector<32x128xf32>
    %cst_14 = arith.constant 0.000000e+00 : f32
    %62 = vector.broadcast %cst_14 : f32 to vector<32x128xf32>
    %c0_15 = arith.constant 0 : index
    %c128 = arith.constant 128 : index
    %63 = vector.load %arg14[%c0_15, %c128] : memref<32x256xf32, #tpu.memory_space<vmem>>, vector<32x128xf32>
    tpu.vector_store %arg14[%c0_15, %c128], %61 {strides = array<i32>} : memref<32x256xf32, #tpu.memory_space<vmem>>, vector<32x128xf32>,
    %c0_16 = arith.constant 0 : index
    %c126 = arith.constant 126 : index
    %64 = vector.load %arg14[%c0_16, %c126] : memref<32x256xf32, #tpu.memory_space<vmem>>, vector<32x128xf32>
    %c0_17 = arith.constant 0 : index
    %c0_18 = arith.constant 0 : index
    %65 = vector.load %arg15[%c0_17, %c0_18] : memref<128x128xf32, #tpu.memory_space<vmem>>, vector<32x128xf32>
    tpu.vector_store %arg15[%c0_17, %c0_18], %64 {strides = array<i32>} : memref<128x128xf32, #tpu.memory_space<vmem>>, vector<32x128xf32>,
    %c0_19 = arith.constant 0 : index
    %c127 = arith.constant 127 : index
    %66 = vector.load %arg14[%c0_19, %c127] : memref<32x256xf32, #tpu.memory_space<vmem>>, vector<32x128xf32>
    %c32 = arith.constant 32 : index
    %c0_20 = arith.constant 0 : index
    %67 = vector.load %arg15[%c32, %c0_20] : memref<128x128xf32, #tpu.memory_space<vmem>>, vector<32x128xf32>
    tpu.vector_store %arg15[%c32, %c0_20], %66 {strides = array<i32>} : memref<128x128xf32, #tpu.memory_space<vmem>>, vector<32x128xf32>,
    %c0_21 = arith.constant 0 : index
    %c128_22 = arith.constant 128 : index
    %68 = vector.load %arg14[%c0_21, %c128_22] : memref<32x256xf32, #tpu.memory_space<vmem>>, vector<32x128xf32>
    %c64 = arith.constant 64 : index
    %c0_23 = arith.constant 0 : index
    %69 = vector.load %arg15[%c64, %c0_23] : memref<128x128xf32, #tpu.memory_space<vmem>>, vector<32x128xf32>
    tpu.vector_store %arg15[%c64, %c0_23], %68 {strides = array<i32>} : memref<128x128xf32, #tpu.memory_space<vmem>>, vector<32x128xf32>,
    %c0_24 = arith.constant 0 : index
    %c0_25 = arith.constant 0 : index
    %c0_26 = arith.constant 0 : index
    %70 = vector.load %arg5[%c0_24, %c0_25, %c0_26] : memref<4x64x128xf32, #tpu.memory_space<vmem>>, vector<1x64x128xf32>
    %71 = vector.shape_cast %70 : vector<1x64x128xf32> to vector<64x128xf32>
    %c0_27 = arith.constant 0 : index
    %c0_28 = arith.constant 0 : index
    %72 = vector.load %arg15[%c0_27, %c0_28] : memref<128x128xf32, #tpu.memory_space<vmem>>, vector<128x128xf32>
    %cst_29 = arith.constant dense<0.000000e+00> : vector<64x128xf32>
    %73 = tpu.matmul %71, %72, %cst_29 {dimension_numbers = #tpu.dot_dimension_numbers<[1], [0], [0], [1], [0, 0, 1, 1], [], []>} : vector<64x128xf32>, vector<128x128xf32>, vector<64x128xf32> -> vector<64x128xf32>
    %c0_30 = arith.constant 0 : index
    %c0_31 = arith.constant 0 : index
    %c0_32 = arith.constant 0 : index
    %74 = vector.load %arg6[%c0_30, %c0_31, %c0_32] : memref<4x64x1xf32, #tpu.memory_space<vmem>>, vector<1x64x1xf32>
    %75 = vector.shape_cast %74 : vector<1x64x1xf32> to vector<64x1xf32>
    %76 = vector.broadcast %75 : vector<64x1xf32> to vector<64x128xf32>
    %77 = arith.addf %73, %76 : vector<64x128xf32>
    %78 = vector.extract_strided_slice %77 {offsets = [0, 0], sizes = [32, 128], strides = [1, 1]} : vector<64x128xf32> to vector<32x128xf32>
    %79 = math.tanh %78 : vector<32x128xf32>
    %80 = vector.extract_strided_slice %77 {offsets = [32, 0], sizes = [32, 128], strides = [1, 1]} : vector<64x128xf32> to vector<32x128xf32>
    %81 = arith.negf %80 : vector<32x128xf32>
    %82 = math.exp %81 : vector<32x128xf32>
    %cst_33 = arith.constant 1.000000e+00 : f32
    %83 = vector.broadcast %cst_33 : f32 to vector<32x128xf32>
    %84 = arith.addf %83, %82 : vector<32x128xf32>
    %85 = arith.divf %83, %84 : vector<32x128xf32>
    %86 = arith.mulf %79, %85 : vector<32x128xf32>
    %c0_34 = arith.constant 0 : index
    %c0_35 = arith.constant 0 : index
    %c0_36 = arith.constant 0 : index
    %87 = vector.load %arg7[%c0_34, %c0_35, %c0_36] : memref<4x64x32xf32, #tpu.memory_space<vmem>>, vector<1x64x32xf32>
    %88 = vector.shape_cast %87 : vector<1x64x32xf32> to vector<64x32xf32>
    %cst_37 = arith.constant dense<0.000000e+00> : vector<64x128xf32>
    %89 = tpu.matmul %88, %86, %cst_37 {dimension_numbers = #tpu.dot_dimension_numbers<[1], [0], [0], [1], [0, 0, 1, 1], [], []>} : vector<64x32xf32>, vector<32x128xf32>, vector<64x128xf32> -> vector<64x128xf32>
    %c0_38 = arith.constant 0 : index
    %c0_39 = arith.constant 0 : index
    %c0_40 = arith.constant 0 : index
    %90 = vector.load %arg8[%c0_38, %c0_39, %c0_40] : memref<4x64x1xf32, #tpu.memory_space<vmem>>, vector<1x64x1xf32>
    %91 = vector.shape_cast %90 : vector<1x64x1xf32> to vector<64x1xf32>
    %92 = vector.broadcast %91 : vector<64x1xf32> to vector<64x128xf32>
    %93 = arith.addf %89, %92 : vector<64x128xf32>
    %94 = vector.extract_strided_slice %93 {offsets = [0, 0], sizes = [32, 128], strides = [1, 1]} : vector<64x128xf32> to vector<32x128xf32>
    %95 = arith.addf %61, %94 : vector<32x128xf32>
    %cst_41 = arith.constant 0.707106769 : f32
    %96 = vector.broadcast %cst_41 : f32 to vector<32x128xf32>
    %97 = arith.mulf %95, %96 : vector<32x128xf32>
    %98 = vector.extract_strided_slice %93 {offsets = [32, 0], sizes = [32, 128], strides = [1, 1]} : vector<64x128xf32> to vector<32x128xf32>
    %99 = arith.addf %62, %98 : vector<32x128xf32>
    %c0_42 = arith.constant 0 : index
    %c128_43 = arith.constant 128 : index
    %100 = vector.load %arg14[%c0_42, %c128_43] : memref<32x256xf32, #tpu.memory_space<vmem>>, vector<32x128xf32>
    tpu.vector_store %arg14[%c0_42, %c128_43], %97 {strides = array<i32>} : memref<32x256xf32, #tpu.memory_space<vmem>>, vector<32x128xf32>,
    %c0_44 = arith.constant 0 : index
    %c124 = arith.constant 124 : index
    %101 = vector.load %arg14[%c0_44, %c124] : memref<32x256xf32, #tpu.memory_space<vmem>>, vector<32x128xf32>
    %c0_45 = arith.constant 0 : index
    %c0_46 = arith.constant 0 : index
    %102 = vector.load %arg15[%c0_45, %c0_46] : memref<128x128xf32, #tpu.memory_space<vmem>>, vector<32x128xf32>
    tpu.vector_store %arg15[%c0_45, %c0_46], %101 {strides = array<i32>} : memref<128x128xf32, #tpu.memory_space<vmem>>, vector<32x128xf32>,
    %c0_47 = arith.constant 0 : index
    %c126_48 = arith.constant 126 : index
    %103 = vector.load %arg14[%c0_47, %c126_48] : memref<32x256xf32, #tpu.memory_space<vmem>>, vector<32x128xf32>
    %c32_49 = arith.constant 32 : index
    %c0_50 = arith.constant 0 : index
    %104 = vector.load %arg15[%c32_49, %c0_50] : memref<128x128xf32, #tpu.memory_space<vmem>>, vector<32x128xf32>
    tpu.vector_store %arg15[%c32_49, %c0_50], %103 {strides = array<i32>} : memref<128x128xf32, #tpu.memory_space<vmem>>, vector<32x128xf32>,
    %c0_51 = arith.constant 0 : index
    %c128_52 = arith.constant 128 : index
    %105 = vector.load %arg14[%c0_51, %c128_52] : memref<32x256xf32, #tpu.memory_space<vmem>>, vector<32x128xf32>
    %c64_53 = arith.constant 64 : index
    %c0_54 = arith.constant 0 : index
    %106 = vector.load %arg15[%c64_53, %c0_54] : memref<128x128xf32, #tpu.memory_space<vmem>>, vector<32x128xf32>
    tpu.vector_store %arg15[%c64_53, %c0_54], %105 {strides = array<i32>} : memref<128x128xf32, #tpu.memory_space<vmem>>, vector<32x128xf32>,
    %c1 = arith.constant 1 : index
    %c0_55 = arith.constant 0 : index
    %c0_56 = arith.constant 0 : index
    %107 = vector.load %arg5[%c1, %c0_55, %c0_56] : memref<4x64x128xf32, #tpu.memory_space<vmem>>, vector<1x64x128xf32>
    %108 = vector.shape_cast %107 : vector<1x64x128xf32> to vector<64x128xf32>
    %c0_57 = arith.constant 0 : index
    %c0_58 = arith.constant 0 : index
    %109 = vector.load %arg15[%c0_57, %c0_58] : memref<128x128xf32, #tpu.memory_space<vmem>>, vector<128x128xf32>
    %cst_59 = arith.constant dense<0.000000e+00> : vector<64x128xf32>
    %110 = tpu.matmul %108, %109, %cst_59 {dimension_numbers = #tpu.dot_dimension_numbers<[1], [0], [0], [1], [0, 0, 1, 1], [], []>} : vector<64x128xf32>, vector<128x128xf32>, vector<64x128xf32> -> vector<64x128xf32>
    %c1_60 = arith.constant 1 : index
    %c0_61 = arith.constant 0 : index
    %c0_62 = arith.constant 0 : index
    %111 = vector.load %arg6[%c1_60, %c0_61, %c0_62] : memref<4x64x1xf32, #tpu.memory_space<vmem>>, vector<1x64x1xf32>
    %112 = vector.shape_cast %111 : vector<1x64x1xf32> to vector<64x1xf32>
    %113 = vector.broadcast %112 : vector<64x1xf32> to vector<64x128xf32>
    %114 = arith.addf %110, %113 : vector<64x128xf32>
    %115 = vector.extract_strided_slice %114 {offsets = [0, 0], sizes = [32, 128], strides = [1, 1]} : vector<64x128xf32> to vector<32x128xf32>
    %116 = math.tanh %115 : vector<32x128xf32>
    %117 = vector.extract_strided_slice %114 {offsets = [32, 0], sizes = [32, 128], strides = [1, 1]} : vector<64x128xf32> to vector<32x128xf32>
    %118 = arith.negf %117 : vector<32x128xf32>
    %119 = math.exp %118 : vector<32x128xf32>
    %cst_63 = arith.constant 1.000000e+00 : f32
    %120 = vector.broadcast %cst_63 : f32 to vector<32x128xf32>
    %121 = arith.addf %120, %119 : vector<32x128xf32>
    %122 = arith.divf %120, %121 : vector<32x128xf32>
    %123 = arith.mulf %116, %122 : vector<32x128xf32>
    %c1_64 = arith.constant 1 : index
    %c0_65 = arith.constant 0 : index
    %c0_66 = arith.constant 0 : index
    %124 = vector.load %arg7[%c1_64, %c0_65, %c0_66] : memref<4x64x32xf32, #tpu.memory_space<vmem>>, vector<1x64x32xf32>
    %125 = vector.shape_cast %124 : vector<1x64x32xf32> to vector<64x32xf32>
    %cst_67 = arith.constant dense<0.000000e+00> : vector<64x128xf32>
    %126 = tpu.matmul %125, %123, %cst_67 {dimension_numbers = #tpu.dot_dimension_numbers<[1], [0], [0], [1], [0, 0, 1, 1], [], []>} : vector<64x32xf32>, vector<32x128xf32>, vector<64x128xf32> -> vector<64x128xf32>
    %c1_68 = arith.constant 1 : index
    %c0_69 = arith.constant 0 : index
    %c0_70 = arith.constant 0 : index
    %127 = vector.load %arg8[%c1_68, %c0_69, %c0_70] : memref<4x64x1xf32, #tpu.memory_space<vmem>>, vector<1x64x1xf32>
    %128 = vector.shape_cast %127 : vector<1x64x1xf32> to vector<64x1xf32>
    %129 = vector.broadcast %128 : vector<64x1xf32> to vector<64x128xf32>
    %130 = arith.addf %126, %129 : vector<64x128xf32>
    %131 = vector.extract_strided_slice %130 {offsets = [0, 0], sizes = [32, 128], strides = [1, 1]} : vector<64x128xf32> to vector<32x128xf32>
    %132 = arith.addf %97, %131 : vector<32x128xf32>
    %cst_71 = arith.constant 0.707106769 : f32
    %133 = vector.broadcast %cst_71 : f32 to vector<32x128xf32>
    %134 = arith.mulf %132, %133 : vector<32x128xf32>
    %135 = vector.extract_strided_slice %130 {offsets = [32, 0], sizes = [32, 128], strides = [1, 1]} : vector<64x128xf32> to vector<32x128xf32>
    %136 = arith.addf %99, %135 : vector<32x128xf32>
    %c0_72 = arith.constant 0 : index
    %c128_73 = arith.constant 128 : index
    %137 = vector.load %arg14[%c0_72, %c128_73] : memref<32x256xf32, #tpu.memory_space<vmem>>, vector<32x128xf32>
    tpu.vector_store %arg14[%c0_72, %c128_73], %134 {strides = array<i32>} : memref<32x256xf32, #tpu.memory_space<vmem>>, vector<32x128xf32>,
    %c0_74 = arith.constant 0 : index
    %c120 = arith.constant 120 : index
    %138 = vector.load %arg14[%c0_74, %c120] : memref<32x256xf32, #tpu.memory_space<vmem>>, vector<32x128xf32>
    %c0_75 = arith.constant 0 : index
    %c0_76 = arith.constant 0 : index
    %139 = vector.load %arg15[%c0_75, %c0_76] : memref<128x128xf32, #tpu.memory_space<vmem>>, vector<32x128xf32>
    tpu.vector_store %arg15[%c0_75, %c0_76], %138 {strides = array<i32>} : memref<128x128xf32, #tpu.memory_space<vmem>>, vector<32x128xf32>,
    %c0_77 = arith.constant 0 : index
    %c124_78 = arith.constant 124 : index
    %140 = vector.load %arg14[%c0_77, %c124_78] : memref<32x256xf32, #tpu.memory_space<vmem>>, vector<32x128xf32>
    %c32_79 = arith.constant 32 : index
    %c0_80 = arith.constant 0 : index
    %141 = vector.load %arg15[%c32_79, %c0_80] : memref<128x128xf32, #tpu.memory_space<vmem>>, vector<32x128xf32>
    tpu.vector_store %arg15[%c32_79, %c0_80], %140 {strides = array<i32>} : memref<128x128xf32, #tpu.memory_space<vmem>>, vector<32x128xf32>,
    %c0_81 = arith.constant 0 : index
    %c128_82 = arith.constant 128 : index
    %142 = vector.load %arg14[%c0_81, %c128_82] : memref<32x256xf32, #tpu.memory_space<vmem>>, vector<32x128xf32>
    %c64_83 = arith.constant 64 : index
    %c0_84 = arith.constant 0 : index
    %143 = vector.load %arg15[%c64_83, %c0_84] : memref<128x128xf32, #tpu.memory_space<vmem>>, vector<32x128xf32>
    tpu.vector_store %arg15[%c64_83, %c0_84], %142 {strides = array<i32>} : memref<128x128xf32, #tpu.memory_space<vmem>>, vector<32x128xf32>,
    %c2 = arith.constant 2 : index
    %c0_85 = arith.constant 0 : index
    %c0_86 = arith.constant 0 : index
    %144 = vector.load %arg5[%c2, %c0_85, %c0_86] : memref<4x64x128xf32, #tpu.memory_space<vmem>>, vector<1x64x128xf32>
    %145 = vector.shape_cast %144 : vector<1x64x128xf32> to vector<64x128xf32>
    %c0_87 = arith.constant 0 : index
    %c0_88 = arith.constant 0 : index
    %146 = vector.load %arg15[%c0_87, %c0_88] : memref<128x128xf32, #tpu.memory_space<vmem>>, vector<128x128xf32>
    %cst_89 = arith.constant dense<0.000000e+00> : vector<64x128xf32>
    %147 = tpu.matmul %145, %146, %cst_89 {dimension_numbers = #tpu.dot_dimension_numbers<[1], [0], [0], [1], [0, 0, 1, 1], [], []>} : vector<64x128xf32>, vector<128x128xf32>, vector<64x128xf32> -> vector<64x128xf32>
    %c2_90 = arith.constant 2 : index
    %c0_91 = arith.constant 0 : index
    %c0_92 = arith.constant 0 : index
    %148 = vector.load %arg6[%c2_90, %c0_91, %c0_92] : memref<4x64x1xf32, #tpu.memory_space<vmem>>, vector<1x64x1xf32>
    %149 = vector.shape_cast %148 : vector<1x64x1xf32> to vector<64x1xf32>
    %150 = vector.broadcast %149 : vector<64x1xf32> to vector<64x128xf32>
    %151 = arith.addf %147, %150 : vector<64x128xf32>
    %152 = vector.extract_strided_slice %151 {offsets = [0, 0], sizes = [32, 128], strides = [1, 1]} : vector<64x128xf32> to vector<32x128xf32>
    %153 = math.tanh %152 : vector<32x128xf32>
    %154 = vector.extract_strided_slice %151 {offsets = [32, 0], sizes = [32, 128], strides = [1, 1]} : vector<64x128xf32> to vector<32x128xf32>
    %155 = arith.negf %154 : vector<32x128xf32>
    %156 = math.exp %155 : vector<32x128xf32>
    %cst_93 = arith.constant 1.000000e+00 : f32
    %157 = vector.broadcast %cst_93 : f32 to vector<32x128xf32>
    %158 = arith.addf %157, %156 : vector<32x128xf32>
    %159 = arith.divf %157, %158 : vector<32x128xf32>
    %160 = arith.mulf %153, %159 : vector<32x128xf32>
    %c2_94 = arith.constant 2 : index
    %c0_95 = arith.constant 0 : index
    %c0_96 = arith.constant 0 : index
    %161 = vector.load %arg7[%c2_94, %c0_95, %c0_96] : memref<4x64x32xf32, #tpu.memory_space<vmem>>, vector<1x64x32xf32>
    %162 = vector.shape_cast %161 : vector<1x64x32xf32> to vector<64x32xf32>
    %cst_97 = arith.constant dense<0.000000e+00> : vector<64x128xf32>
    %163 = tpu.matmul %162, %160, %cst_97 {dimension_numbers = #tpu.dot_dimension_numbers<[1], [0], [0], [1], [0, 0, 1, 1], [], []>} : vector<64x32xf32>, vector<32x128xf32>, vector<64x128xf32> -> vector<64x128xf32>
    %c2_98 = arith.constant 2 : index
    %c0_99 = arith.constant 0 : index
    %c0_100 = arith.constant 0 : index
    %164 = vector.load %arg8[%c2_98, %c0_99, %c0_100] : memref<4x64x1xf32, #tpu.memory_space<vmem>>, vector<1x64x1xf32>
    %165 = vector.shape_cast %164 : vector<1x64x1xf32> to vector<64x1xf32>
    %166 = vector.broadcast %165 : vector<64x1xf32> to vector<64x128xf32>
    %167 = arith.addf %163, %166 : vector<64x128xf32>
    %168 = vector.extract_strided_slice %167 {offsets = [0, 0], sizes = [32, 128], strides = [1, 1]} : vector<64x128xf32> to vector<32x128xf32>
    %169 = arith.addf %134, %168 : vector<32x128xf32>
    %cst_101 = arith.constant 0.707106769 : f32
    %170 = vector.broadcast %cst_101 : f32 to vector<32x128xf32>
    %171 = arith.mulf %169, %170 : vector<32x128xf32>
    %172 = vector.extract_strided_slice %167 {offsets = [32, 0], sizes = [32, 128], strides = [1, 1]} : vector<64x128xf32> to vector<32x128xf32>
    %173 = arith.addf %136, %172 : vector<32x128xf32>
    %c0_102 = arith.constant 0 : index
    %c128_103 = arith.constant 128 : index
    %174 = vector.load %arg14[%c0_102, %c128_103] : memref<32x256xf32, #tpu.memory_space<vmem>>, vector<32x128xf32>
    tpu.vector_store %arg14[%c0_102, %c128_103], %171 {strides = array<i32>} : memref<32x256xf32, #tpu.memory_space<vmem>>, vector<32x128xf32>,
    %c0_104 = arith.constant 0 : index
    %c112 = arith.constant 112 : index
    %175 = vector.load %arg14[%c0_104, %c112] : memref<32x256xf32, #tpu.memory_space<vmem>>, vector<32x128xf32>
    %c0_105 = arith.constant 0 : index
    %c0_106 = arith.constant 0 : index
    %176 = vector.load %arg15[%c0_105, %c0_106] : memref<128x128xf32, #tpu.memory_space<vmem>>, vector<32x128xf32>
    tpu.vector_store %arg15[%c0_105, %c0_106], %175 {strides = array<i32>} : memref<128x128xf32, #tpu.memory_space<vmem>>, vector<32x128xf32>,
    %c0_107 = arith.constant 0 : index
    %c120_108 = arith.constant 120 : index
    %177 = vector.load %arg14[%c0_107, %c120_108] : memref<32x256xf32, #tpu.memory_space<vmem>>, vector<32x128xf32>
    %c32_109 = arith.constant 32 : index
    %c0_110 = arith.constant 0 : index
    %178 = vector.load %arg15[%c32_109, %c0_110] : memref<128x128xf32, #tpu.memory_space<vmem>>, vector<32x128xf32>
    tpu.vector_store %arg15[%c32_109, %c0_110], %177 {strides = array<i32>} : memref<128x128xf32, #tpu.memory_space<vmem>>, vector<32x128xf32>,
    %c0_111 = arith.constant 0 : index
    %c128_112 = arith.constant 128 : index
    %179 = vector.load %arg14[%c0_111, %c128_112] : memref<32x256xf32, #tpu.memory_space<vmem>>, vector<32x128xf32>
    %c64_113 = arith.constant 64 : index
    %c0_114 = arith.constant 0 : index
    %180 = vector.load %arg15[%c64_113, %c0_114] : memref<128x128xf32, #tpu.memory_space<vmem>>, vector<32x128xf32>
    tpu.vector_store %arg15[%c64_113, %c0_114], %179 {strides = array<i32>} : memref<128x128xf32, #tpu.memory_space<vmem>>, vector<32x128xf32>,
    %c3 = arith.constant 3 : index
    %c0_115 = arith.constant 0 : index
    %c0_116 = arith.constant 0 : index
    %181 = vector.load %arg5[%c3, %c0_115, %c0_116] : memref<4x64x128xf32, #tpu.memory_space<vmem>>, vector<1x64x128xf32>
    %182 = vector.shape_cast %181 : vector<1x64x128xf32> to vector<64x128xf32>
    %c0_117 = arith.constant 0 : index
    %c0_118 = arith.constant 0 : index
    %183 = vector.load %arg15[%c0_117, %c0_118] : memref<128x128xf32, #tpu.memory_space<vmem>>, vector<128x128xf32>
    %cst_119 = arith.constant dense<0.000000e+00> : vector<64x128xf32>
    %184 = tpu.matmul %182, %183, %cst_119 {dimension_numbers = #tpu.dot_dimension_numbers<[1], [0], [0], [1], [0, 0, 1, 1], [], []>} : vector<64x128xf32>, vector<128x128xf32>, vector<64x128xf32> -> vector<64x128xf32>
    %c3_120 = arith.constant 3 : index
    %c0_121 = arith.constant 0 : index
    %c0_122 = arith.constant 0 : index
    %185 = vector.load %arg6[%c3_120, %c0_121, %c0_122] : memref<4x64x1xf32, #tpu.memory_space<vmem>>, vector<1x64x1xf32>
    %186 = vector.shape_cast %185 : vector<1x64x1xf32> to vector<64x1xf32>
    %187 = vector.broadcast %186 : vector<64x1xf32> to vector<64x128xf32>
    %188 = arith.addf %184, %187 : vector<64x128xf32>
    %189 = vector.extract_strided_slice %188 {offsets = [0, 0], sizes = [32, 128], strides = [1, 1]} : vector<64x128xf32> to vector<32x128xf32>
    %190 = math.tanh %189 : vector<32x128xf32>
    %191 = vector.extract_strided_slice %188 {offsets = [32, 0], sizes = [32, 128], strides = [1, 1]} : vector<64x128xf32> to vector<32x128xf32>
    %192 = arith.negf %191 : vector<32x128xf32>
    %193 = math.exp %192 : vector<32x128xf32>
    %cst_123 = arith.constant 1.000000e+00 : f32
    %194 = vector.broadcast %cst_123 : f32 to vector<32x128xf32>
    %195 = arith.addf %194, %193 : vector<32x128xf32>
    %196 = arith.divf %194, %195 : vector<32x128xf32>
    %197 = arith.mulf %190, %196 : vector<32x128xf32>
    %c3_124 = arith.constant 3 : index
    %c0_125 = arith.constant 0 : index
    %c0_126 = arith.constant 0 : index
    %198 = vector.load %arg7[%c3_124, %c0_125, %c0_126] : memref<4x64x32xf32, #tpu.memory_space<vmem>>, vector<1x64x32xf32>
    %199 = vector.shape_cast %198 : vector<1x64x32xf32> to vector<64x32xf32>
    %cst_127 = arith.constant dense<0.000000e+00> : vector<64x128xf32>
    %200 = tpu.matmul %199, %197, %cst_127 {dimension_numbers = #tpu.dot_dimension_numbers<[1], [0], [0], [1], [0, 0, 1, 1], [], []>} : vector<64x32xf32>, vector<32x128xf32>, vector<64x128xf32> -> vector<64x128xf32>
    %c3_128 = arith.constant 3 : index
    %c0_129 = arith.constant 0 : index
    %c0_130 = arith.constant 0 : index
    %201 = vector.load %arg8[%c3_128, %c0_129, %c0_130] : memref<4x64x1xf32, #tpu.memory_space<vmem>>, vector<1x64x1xf32>
    %202 = vector.shape_cast %201 : vector<1x64x1xf32> to vector<64x1xf32>
    %203 = vector.broadcast %202 : vector<64x1xf32> to vector<64x128xf32>
    %204 = arith.addf %200, %203 : vector<64x128xf32>
    %205 = vector.extract_strided_slice %204 {offsets = [32, 0], sizes = [32, 128], strides = [1, 1]} : vector<64x128xf32> to vector<32x128xf32>
    %206 = arith.addf %173, %205 : vector<32x128xf32>
    %cst_131 = arith.constant 0.000000e+00 : f32
    %207 = vector.broadcast %cst_131 : f32 to vector<32x128xf32>
    %208 = arith.maximumf %206, %207 : vector<32x128xf32>
    %c0_132 = arith.constant 0 : index
    %c0_133 = arith.constant 0 : index
    %209 = vector.load %arg9[%c0_132, %c0_133] : memref<32x32xf32, #tpu.memory_space<vmem>>, vector<32x32xf32>
    %cst_134 = arith.constant dense<0.000000e+00> : vector<32x128xf32>
    %210 = tpu.matmul %209, %208, %cst_134 {dimension_numbers = #tpu.dot_dimension_numbers<[1], [0], [0], [1], [0, 0, 1, 1], [], []>} : vector<32x32xf32>, vector<32x128xf32>, vector<32x128xf32> -> vector<32x128xf32>
    %c0_135 = arith.constant 0 : index
    %c0_136 = arith.constant 0 : index
    %211 = vector.load %arg10[%c0_135, %c0_136] : memref<32x1xf32, #tpu.memory_space<vmem>>, vector<32x1xf32>
    %212 = vector.broadcast %211 : vector<32x1xf32> to vector<32x128xf32>
    %213 = arith.addf %210, %212 : vector<32x128xf32>
    %cst_137 = arith.constant 0.000000e+00 : f32
    %214 = vector.broadcast %cst_137 : f32 to vector<32x128xf32>
    %215 = arith.maximumf %213, %214 : vector<32x128xf32>
    %c0_138 = arith.constant 0 : index
    %c0_139 = arith.constant 0 : index
    %216 = vector.load %arg11[%c0_138, %c0_139] : memref<1x32xf32, #tpu.memory_space<vmem>>, vector<1x32xf32>
    %cst_140 = arith.constant dense<0.000000e+00> : vector<1x128xf32>
    %217 = tpu.matmul %216, %215, %cst_140 {dimension_numbers = #tpu.dot_dimension_numbers<[1], [0], [0], [1], [0, 0, 1, 1], [], []>} : vector<1x32xf32>, vector<32x128xf32>, vector<1x128xf32> -> vector<1x128xf32>
    %c0_141 = arith.constant 0 : index
    %c0_142 = arith.constant 0 : index
    %218 = vector.load %arg12[%c0_141, %c0_142] : memref<1x1xf32, #tpu.memory_space<vmem>>, vector<1x1xf32>
    %219 = vector.broadcast %218 : vector<1x1xf32> to vector<1x128xf32>
    %220 = arith.addf %217, %219 : vector<1x128xf32>
    %c0_143 = arith.constant 0 : index
    %c0_144 = arith.constant 0 : index
    %c0_145 = arith.constant 0 : index
    %221 = vector.load %arg13[%c0_143, %c0_144, %c0_145] : memref<1x1x128xf32, #tpu.memory_space<vmem>>, vector<1x1x128xf32>
    %222 = vector.shape_cast %221 : vector<1x1x128xf32> to vector<1x128xf32>
    %223 = vector.shape_cast %220 : vector<1x128xf32> to vector<1x1x128xf32>
    tpu.vector_store %arg13[%c0_143, %c0_144, %c0_145], %223 {strides = array<i32>} : memref<1x1x128xf32, #tpu.memory_space<vmem>>, vector<1x1x128xf32>,
    return
  }
  func.func @transform_0(%arg0: i32) -> (i32, i32, i32) {
    %c0_i32 = arith.constant 0 : i32
    %c0_i32_0 = arith.constant 0 : i32
    %c0_i32_1 = arith.constant 0 : i32
    return %arg0, %c0_i32, %c0_i32_0 : i32, i32, i32
  }
  func.func @transform_1(%arg0: i32) -> (i32, i32, i32) {
    %c0_i32 = arith.constant 0 : i32
    %c0_i32_0 = arith.constant 0 : i32
    %c0_i32_1 = arith.constant 0 : i32
    return %arg0, %c0_i32, %c0_i32_0 : i32, i32, i32
  }
  func.func @transform_2(%arg0: i32) -> (i32, i32) {
    %c0_i32 = arith.constant 0 : i32
    %c0_i32_0 = arith.constant 0 : i32
    %c0_i32_1 = arith.constant 0 : i32
    return %c0_i32, %c0_i32_0 : i32, i32
  }
  func.func @transform_3(%arg0: i32) -> (i32, i32) {
    %c0_i32 = arith.constant 0 : i32
    %c0_i32_0 = arith.constant 0 : i32
    %c0_i32_1 = arith.constant 0 : i32
    return %c0_i32, %c0_i32_0 : i32, i32
  }
  func.func @transform_4(%arg0: i32) -> (i32, i32, i32) {
    %c0_i32 = arith.constant 0 : i32
    %c0_i32_0 = arith.constant 0 : i32
    %c0_i32_1 = arith.constant 0 : i32
    %c0_i32_2 = arith.constant 0 : i32
    return %c0_i32, %c0_i32_0, %c0_i32_1 : i32, i32, i32
  }
  func.func @transform_5(%arg0: i32) -> (i32, i32, i32) {
    %c0_i32 = arith.constant 0 : i32
    %c0_i32_0 = arith.constant 0 : i32
    %c0_i32_1 = arith.constant 0 : i32
    %c0_i32_2 = arith.constant 0 : i32
    return %c0_i32, %c0_i32_0, %c0_i32_1 : i32, i32, i32
  }
  func.func @transform_6(%arg0: i32) -> (i32, i32, i32) {
    %c0_i32 = arith.constant 0 : i32
    %c0_i32_0 = arith.constant 0 : i32
    %c0_i32_1 = arith.constant 0 : i32
    %c0_i32_2 = arith.constant 0 : i32
    return %c0_i32, %c0_i32_0, %c0_i32_1 : i32, i32, i32
  }
  func.func @transform_7(%arg0: i32) -> (i32, i32, i32) {
    %c0_i32 = arith.constant 0 : i32
    %c0_i32_0 = arith.constant 0 : i32
    %c0_i32_1 = arith.constant 0 : i32
    %c0_i32_2 = arith.constant 0 : i32
    return %c0_i32, %c0_i32_0, %c0_i32_1 : i32, i32, i32
  }
  func.func @transform_8(%arg0: i32) -> (i32, i32) {
    %c0_i32 = arith.constant 0 : i32
    %c0_i32_0 = arith.constant 0 : i32
    %c0_i32_1 = arith.constant 0 : i32
    return %c0_i32, %c0_i32_0 : i32, i32
  }
  func.func @transform_9(%arg0: i32) -> (i32, i32) {
    %c0_i32 = arith.constant 0 : i32
    %c0_i32_0 = arith.constant 0 : i32
    %c0_i32_1 = arith.constant 0 : i32
    return %c0_i32, %c0_i32_0 : i32, i32
  }
  func.func @transform_10(%arg0: i32) -> (i32, i32) {
    %c0_i32 = arith.constant 0 : i32
    %c0_i32_0 = arith.constant 0 : i32
    %c0_i32_1 = arith.constant 0 : i32
    return %c0_i32, %c0_i32_0 : i32, i32
  }
  func.func @transform_11(%arg0: i32) -> (i32, i32) {
    %c0_i32 = arith.constant 0 : i32
    %c0_i32_0 = arith.constant 0 : i32
    %c0_i32_1 = arith.constant 0 : i32
    return %c0_i32, %c0_i32_0 : i32, i32
  }
  func.func @transform_12(%arg0: i32) -> (i32, i32, i32) {
    %c0_i32 = arith.constant 0 : i32
    %c0_i32_0 = arith.constant 0 : i32
    %c0_i32_1 = arith.constant 0 : i32
    return %arg0, %c0_i32, %c0_i32_0 : i32, i32, i32
  }
}

</mosaic_0001>

<llo_original>
// kernel: _lambda_.1
$region0: #{_lambda_.1}
  #allocation0 [shape = 'u32[]', space=smem, size = 0x4, offset = 0x4, fixed_abs, tag = 'smem constant byte address 0x4 - core index']
  #allocation1 [shape = 'u32[144,128]{1,0:T(1,128)}', space=vmem, size = 0x12000, scoped, tag = 'internal scratch']
  #allocation2 [shape = 'f32[32,256]{1,0:T(8,128)}', space=vmem, size = 0x8000, scoped, tag = 'scratch operand']
  #allocation3 [shape = 'f32[128,128]{1,0:T(8,128)}', space=vmem, size = 0x10000, scoped, tag = 'scratch operand']
  #allocation4 [shape = 'f32[1,1]{1,0:T(1,128)S(1)}', space=vmem, size = 0x200, scoped, tag = 'scoped memory for _lambda_.1']
  %s0 = inlined_call_operand.vmem [shape: f32[2,1,135], index: 0, kind: input, shape index: {}]
  %s1 = inlined_call_operand.vmem [shape: f32[2,32,128], index: 1, kind: input, shape index: {}]
  %s2 = inlined_call_operand.vmem [shape: f32[32,8], index: 2, kind: input, shape index: {}]
  %s3 = inlined_call_operand.vmem [shape: f32[32,1], index: 3, kind: input, shape index: {}]
  %s4 = inlined_call_operand.vmem [shape: f32[4,64,128], index: 4, kind: input, shape index: {}]
  %s5 = inlined_call_operand.vmem [shape: f32[4,64,1], index: 5, kind: input, shape index: {}]
  %s6 = inlined_call_operand.vmem [shape: f32[4,64,32], index: 6, kind: input, shape index: {}]
  %s7 = inlined_call_operand.vmem [shape: f32[4,64,1], index: 7, kind: input, shape index: {}]
  %s8 = inlined_call_operand.vmem [shape: f32[32,32], index: 8, kind: input, shape index: {}]
  %s9 = inlined_call_operand.vmem [shape: f32[32,1], index: 9, kind: input, shape index: {}]
  %s10 = inlined_call_operand.vmem [shape: f32[1,32], index: 10, kind: input, shape index: {}]
  %s11 = inlined_call_operand.<no memory space> [shape: f32[1,1], index: 11, kind: input, shape index: {}]
  %s12 = inlined_call_operand.hbm [shape: f32[2,1,128], index: 12, kind: output, shape index: {}]
  %s13 = sld [smem:[#allocation0]]
  $region81: #{_lambda_.1} parent=0
    _
  %s15 = ssub.s32 1, %s13
  %s16 = scalar_select 0, %s15, %s13
  %v17 = vstv %s11
  %18 = vst [vmem:[#allocation4] sm:$0x1] %v17
  $region1: #{_lambda_.1} parent=0
    #allocation5 [shape = 'u8[1024]{0}', space=vmem, size = 0x400, scoped, tag = 'output window, operand 0']
    #allocation6 [shape = 's32[2]{0}', space=sflag, size = 0x8, scoped, tag = 'scoped memory for _lambda_.1']
    %19 = vsyncpa [#allocation6], 0
    %s20 = scalar_lea.sflag [#allocation6], 1
    %21 = vsyncpa %s20, 0
    loop: start=0, step=1, limit=4
    $region2: #{_lambda_.1} parent=1 // loop_pre_header
      _
    $region3: #{_lambda_.1} parent=1 // loop_header
      %s23 = sphi 0, %s27
      %p24 = scmp.ge.s32.totalorder %s23, 4
      %s33 = sphi 0, %s35
      %s36 = sphi 0, %s33
      %s37 = sphi 0, %s36
      %s53 = sphi 0, %s37
      %s59 = sphi 0, %s61
      %s62 = sphi 0, %s59
      %s63 = sphi 0, %s62
      %s79 = sphi 0, %s63
      %s83 = sphi 0, %s83
      %s85 = sphi 0, %s83
      %s86 = sphi 0, %s85
      %s100 = sphi 0, %s86
      %s104 = sphi 0, %s104
      %s106 = sphi 0, %s104
      %s107 = sphi 0, %s106
      %s121 = sphi 0, %s107
      %s125 = sphi 0, %s125
      %s127 = sphi 0, %s125
      %s128 = sphi 0, %s127
      %s142 = sphi 0, %s128
      %s146 = sphi 0, %s146
      %s148 = sphi 0, %s146
      %s149 = sphi 0, %s148
      %s163 = sphi 0, %s149
      %s167 = sphi 0, %s167
      %s169 = sphi 0, %s167
      %s170 = sphi 0, %s169
      %s184 = sphi 0, %s170
      %s188 = sphi 0, %s188
      %s190 = sphi 0, %s188
      %s191 = sphi 0, %s190
      %s205 = sphi 0, %s191
      %s209 = sphi 0, %s209
      %s211 = sphi 0, %s209
      %s212 = sphi 0, %s211
      %s226 = sphi 0, %s212
      %s230 = sphi 0, %s230
      %s232 = sphi 0, %s230
      %s233 = sphi 0, %s232
      %s247 = sphi 0, %s233
      %s251 = sphi 0, %s251
      %s253 = sphi 0, %s251
      %s254 = sphi 0, %s253
      %s268 = sphi 0, %s254
      %s272 = sphi 0, %s272
      %s274 = sphi 0, %s272
      %s275 = sphi 0, %s274
      %s289 = sphi 0, %s275
      %s295 = sphi 0, %s297
      %s298 = sphi 0, %s295
      %s299 = sphi 0, %s298
      %s315 = sphi 0, %s299
    $region4: #{_lambda_.1} parent=1 // loop_header_branch
      %26 = sbr.rel (%p24) target = $region8
    $region5: #{_lambda_.1} parent=1 // loop_body
      %s28 = ssub.s32 %s23, 1
      %s29 = ssub.s32 %s23, 2
      %s30 = sadd.s32 %s23, 1
      %s31 = ssub.s32 %s23, %s30
      %p32 = scmp.eq.s32.totalorder %s31, 0
      %s34 = sadd.s32 %s33, 1
      %s35 = scalar_select %p32, %s33, %s34
      %p38 = pneg %p32
      %p39 = scmp.eq.s32.totalorder %s23, 1
      %p40 = por %p38, %p39
      %p41 = scmp.ne.s32.totalorder %s33, %s36
      %p42 = scmp.eq.s32.totalorder %s23, 0
      %p43 = por %p41, %p42
      %p44 = scmp.ne.s32.totalorder %s33, %s36
      %p45 = scmp.eq.s32.totalorder %s28, 1
      %p46 = por %p44, %p45
      %p47 = scmp.ne.s32.totalorder %s36, %s37
      %p48 = scmp.eq.s32.totalorder %s28, 0
      %p49 = por %p47, %p48
      %p50 = scmp.ne.s32.totalorder %s36, %s37
      %p51 = scmp.eq.s32.totalorder %s29, 1
      %p52 = por %p50, %p51
      %p54 = scmp.ne.s32.totalorder %s37, %s53
      %p55 = scmp.eq.s32.totalorder %s29, 0
      %p56 = por %p54, %p55
      %s57 = ssub.s32 %s23, %s30
      %p58 = scmp.eq.s32.totalorder %s57, 0
      %s60 = sadd.s32 %s59, 1
      %s61 = scalar_select %p58, %s59, %s60
      %p64 = pneg %p58
      %p65 = scmp.eq.s32.totalorder %s23, 1
      %p66 = por %p64, %p65
      %p67 = scmp.ne.s32.totalorder %s59, %s62
      %p68 = scmp.eq.s32.totalorder %s23, 0
      %p69 = por %p67, %p68
      %p70 = scmp.ne.s32.totalorder %s59, %s62
      %p71 = scmp.eq.s32.totalorder %s28, 1
      %p72 = por %p70, %p71
      %p73 = scmp.ne.s32.totalorder %s62, %s63
      %p74 = scmp.eq.s32.totalorder %s28, 0
      %p75 = por %p73, %p74
      %p76 = scmp.ne.s32.totalorder %s62, %s63
      %p77 = scmp.eq.s32.totalorder %s29, 1
      %p78 = por %p76, %p77
      %p80 = scmp.ne.s32.totalorder %s63, %s79
      %p81 = scmp.eq.s32.totalorder %s29, 0
      %p82 = por %p80, %p81
      %s84 = sadd.s32 %s83, 1
      %p87 = scmp.eq.s32.totalorder %s23, 1
      %p88 = scmp.ne.s32.totalorder %s83, %s85
      %p89 = scmp.eq.s32.totalorder %s23, 0
      %p90 = por %p88, %p89
      %p91 = scmp.ne.s32.totalorder %s83, %s85
      %p92 = scmp.eq.s32.totalorder %s28, 1
      %p93 = por %p91, %p92
      %p94 = scmp.ne.s32.totalorder %s85, %s86
      %p95 = scmp.eq.s32.totalorder %s28, 0
      %p96 = por %p94, %p95
      %p97 = scmp.ne.s32.totalorder %s85, %s86
      %p98 = scmp.eq.s32.totalorder %s29, 1
      %p99 = por %p97, %p98
      %p101 = scmp.ne.s32.totalorder %s86, %s100
      %p102 = scmp.eq.s32.totalorder %s29, 0
      %p103 = por %p101, %p102
      %s105 = sadd.s32 %s104, 1
      %p108 = scmp.eq.s32.totalorder %s23, 1
      %p109 = scmp.ne.s32.totalorder %s104, %s106
      %p110 = scmp.eq.s32.totalorder %s23, 0
      %p111 = por %p109, %p110
      %p112 = scmp.ne.s32.totalorder %s104, %s106
      %p113 = scmp.eq.s32.totalorder %s28, 1
      %p114 = por %p112, %p113
      %p115 = scmp.ne.s32.totalorder %s106, %s107
      %p116 = scmp.eq.s32.totalorder %s28, 0
      %p117 = por %p115, %p116
      %p118 = scmp.ne.s32.totalorder %s106, %s107
      %p119 = scmp.eq.s32.totalorder %s29, 1
      %p120 = por %p118, %p119
      %p122 = scmp.ne.s32.totalorder %s107, %s121
      %p123 = scmp.eq.s32.totalorder %s29, 0
      %p124 = por %p122, %p123
      %s126 = sadd.s32 %s125, 1
      %p129 = scmp.eq.s32.totalorder %s23, 1
      %p130 = scmp.ne.s32.totalorder %s125, %s127
      %p131 = scmp.eq.s32.totalorder %s23, 0
      %p132 = por %p130, %p131
      %p133 = scmp.ne.s32.totalorder %s125, %s127
      %p134 = scmp.eq.s32.totalorder %s28, 1
      %p135 = por %p133, %p134
      %p136 = scmp.ne.s32.totalorder %s127, %s128
      %p137 = scmp.eq.s32.totalorder %s28, 0
      %p138 = por %p136, %p137
      %p139 = scmp.ne.s32.totalorder %s127, %s128
      %p140 = scmp.eq.s32.totalorder %s29, 1
      %p141 = por %p139, %p140
      %p143 = scmp.ne.s32.totalorder %s128, %s142
      %p144 = scmp.eq.s32.totalorder %s29, 0
      %p145 = por %p143, %p144
      %s147 = sadd.s32 %s146, 1
      %p150 = scmp.eq.s32.totalorder %s23, 1
      %p151 = scmp.ne.s32.totalorder %s146, %s148
      %p152 = scmp.eq.s32.totalorder %s23, 0
      %p153 = por %p151, %p152
      %p154 = scmp.ne.s32.totalorder %s146, %s148
      %p155 = scmp.eq.s32.totalorder %s28, 1
      %p156 = por %p154, %p155
      %p157 = scmp.ne.s32.totalorder %s148, %s149
      %p158 = scmp.eq.s32.totalorder %s28, 0
      %p159 = por %p157, %p158
      %p160 = scmp.ne.s32.totalorder %s148, %s149
      %p161 = scmp.eq.s32.totalorder %s29, 1
      %p162 = por %p160, %p161
      %p164 = scmp.ne.s32.totalorder %s149, %s163
      %p165 = scmp.eq.s32.totalorder %s29, 0
      %p166 = por %p164, %p165
      %s168 = sadd.s32 %s167, 1
      %p171 = scmp.eq.s32.totalorder %s23, 1
      %p172 = scmp.ne.s32.totalorder %s167, %s169
      %p173 = scmp.eq.s32.totalorder %s23, 0
      %p174 = por %p172, %p173
      %p175 = scmp.ne.s32.totalorder %s167, %s169
      %p176 = scmp.eq.s32.totalorder %s28, 1
      %p177 = por %p175, %p176
      %p178 = scmp.ne.s32.totalorder %s169, %s170
      %p179 = scmp.eq.s32.totalorder %s28, 0
      %p180 = por %p178, %p179
      %p181 = scmp.ne.s32.totalorder %s169, %s170
      %p182 = scmp.eq.s32.totalorder %s29, 1
      %p183 = por %p181, %p182
      %p185 = scmp.ne.s32.totalorder %s170, %s184
      %p186 = scmp.eq.s32.totalorder %s29, 0
      %p187 = por %p185, %p186
      %s189 = sadd.s32 %s188, 1
      %p192 = scmp.eq.s32.totalorder %s23, 1
      %p193 = scmp.ne.s32.totalorder %s188, %s190
      %p194 = scmp.eq.s32.totalorder %s23, 0
      %p195 = por %p193, %p194
      %p196 = scmp.ne.s32.totalorder %s188, %s190
      %p197 = scmp.eq.s32.totalorder %s28, 1
      %p198 = por %p196, %p197
      %p199 = scmp.ne.s32.totalorder %s190, %s191
      %p200 = scmp.eq.s32.totalorder %s28, 0
      %p201 = por %p199, %p200
      %p202 = scmp.ne.s32.totalorder %s190, %s191
      %p203 = scmp.eq.s32.totalorder %s29, 1
      %p204 = por %p202, %p203
      %p206 = scmp.ne.s32.totalorder %s191, %s205
      %p207 = scmp.eq.s32.totalorder %s29, 0
      %p208 = por %p206, %p207
      %s210 = sadd.s32 %s209, 1
      %p213 = scmp.eq.s32.totalorder %s23, 1
      %p214 = scmp.ne.s32.totalorder %s209, %s211
      %p215 = scmp.eq.s32.totalorder %s23, 0
      %p216 = por %p214, %p215
      %p217 = scmp.ne.s32.totalorder %s209, %s211
      %p218 = scmp.eq.s32.totalorder %s28, 1
      %p219 = por %p217, %p218
      %p220 = scmp.ne.s32.totalorder %s211, %s212
      %p221 = scmp.eq.s32.totalorder %s28, 0
      %p222 = por %p220, %p221
      %p223 = scmp.ne.s32.totalorder %s211, %s212
      %p224 = scmp.eq.s32.totalorder %s29, 1
      %p225 = por %p223, %p224
      %p227 = scmp.ne.s32.totalorder %s212, %s226
      %p228 = scmp.eq.s32.totalorder %s29, 0
      %p229 = por %p227, %p228
      %s231 = sadd.s32 %s230, 1
      %p234 = scmp.eq.s32.totalorder %s23, 1
      %p235 = scmp.ne.s32.totalorder %s230, %s232
      %p236 = scmp.eq.s32.totalorder %s23, 0
      %p237 = por %p235, %p236
      %p238 = scmp.ne.s32.totalorder %s230, %s232
      %p239 = scmp.eq.s32.totalorder %s28, 1
      %p240 = por %p238, %p239
      %p241 = scmp.ne.s32.totalorder %s232, %s233
      %p242 = scmp.eq.s32.totalorder %s28, 0
      %p243 = por %p241, %p242
      %p244 = scmp.ne.s32.totalorder %s232, %s233
      %p245 = scmp.eq.s32.totalorder %s29, 1
      %p246 = por %p244, %p245
      %p248 = scmp.ne.s32.totalorder %s233, %s247
      %p249 = scmp.eq.s32.totalorder %s29, 0
      %p250 = por %p248, %p249
      %s252 = sadd.s32 %s251, 1
      %p255 = scmp.eq.s32.totalorder %s23, 1
      %p256 = scmp.ne.s32.totalorder %s251, %s253
      %p257 = scmp.eq.s32.totalorder %s23, 0
      %p258 = por %p256, %p257
      %p259 = scmp.ne.s32.totalorder %s251, %s253
      %p260 = scmp.eq.s32.totalorder %s28, 1
      %p261 = por %p259, %p260
      %p262 = scmp.ne.s32.totalorder %s253, %s254
      %p263 = scmp.eq.s32.totalorder %s28, 0
      %p264 = por %p262, %p263
      %p265 = scmp.ne.s32.totalorder %s253, %s254
      %p266 = scmp.eq.s32.totalorder %s29, 1
      %p267 = por %p265, %p266
      %p269 = scmp.ne.s32.totalorder %s254, %s268
      %p270 = scmp.eq.s32.totalorder %s29, 0
      %p271 = por %p269, %p270
      %s273 = sadd.s32 %s272, 1
      %p276 = scmp.eq.s32.totalorder %s23, 1
      %p277 = scmp.ne.s32.totalorder %s272, %s274
      %p278 = scmp.eq.s32.totalorder %s23, 0
      %p279 = por %p277, %p278
      %p280 = scmp.ne.s32.totalorder %s272, %s274
      %p281 = scmp.eq.s32.totalorder %s28, 1
      %p282 = por %p280, %p281
      %p283 = scmp.ne.s32.totalorder %s274, %s275
      %p284 = scmp.eq.s32.totalorder %s28, 0
      %p285 = por %p283, %p284
      %p286 = scmp.ne.s32.totalorder %s274, %s275
      %p287 = scmp.eq.s32.totalorder %s29, 1
      %p288 = por %p286, %p287
      %p290 = scmp.ne.s32.totalorder %s275, %s289
      %p291 = scmp.eq.s32.totalorder %s29, 0
      %p292 = por %p290, %p291
      %s293 = ssub.s32 %s23, %s30
      %p294 = scmp.eq.s32.totalorder %s293, 0
      %s296 = sadd.s32 %s295, 1
      %s297 = scalar_select %p294, %s295, %s296
      %p300 = pneg %p294
      %p301 = scmp.eq.s32.totalorder %s23, 1
      %p302 = por %p300, %p301
      %p303 = scmp.ne.s32.totalorder %s295, %s298
      %p304 = scmp.eq.s32.totalorder %s23, 0
      %p305 = por %p303, %p304
      %p306 = scmp.ne.s32.totalorder %s295, %s298
      %p307 = scmp.eq.s32.totalorder %s28, 1
      %p308 = por %p306, %p307
      %p309 = scmp.ne.s32.totalorder %s298, %s299
      %p310 = scmp.eq.s32.totalorder %s28, 0
      %p311 = por %p309, %p310
      %p312 = scmp.ne.s32.totalorder %s298, %s299
      %p313 = scmp.eq.s32.totalorder %s29, 1
      %p314 = por %p312, %p313
      %p316 = scmp.ne.s32.totalorder %s299, %s315
      %p317 = scmp.eq.s32.totalorder %s29, 0
      %p318 = por %p316, %p317
      %p319 = scmp.le.s32.totalorder 1, %s23
      %p320 = scmp.lt.s32.totalorder %s23, 3
      %p321 = pnand %p319, %p320
      %p322 = pneg %p321
      // Predicated region
      $region9: #{_lambda_.1} parent=5 // pred_check
        _
      $region10: #{_lambda_.1} parent=5 // pred_check_branch
        %324 = sbr.rel (%p321) target = $region12
      $region11: #{_lambda_.1} parent=5 // pred_region
        %s325 = ssub.s32 %s23, 1
        // Predicated region
        $region13: #{_lambda_.1} parent=11 // pred_check
          %p326 = pneg %p96
        $region14: #{_lambda_.1} parent=11 // pred_check_branch
          %328 = sbr.rel (%p326) target = $region16
        $region15: #{_lambda_.1} parent=11 // pred_region
          _
        $region16: #{_lambda_.1} parent=11 // pred_fallthru
          _
        // Predicated region
        $region17: #{_lambda_.1} parent=11 // pred_check
          %p329 = pneg %p117
        $region18: #{_lambda_.1} parent=11 // pred_check_branch
          %331 = sbr.rel (%p329) target = $region20
        $region19: #{_lambda_.1} parent=11 // pred_region
          _
        $region20: #{_lambda_.1} parent=11 // pred_fallthru
          _
        // Predicated region
        $region21: #{_lambda_.1} parent=11 // pred_check
          %p332 = pneg %p138
        $region22: #{_lambda_.1} parent=11 // pred_check_branch
          %334 = sbr.rel (%p332) target = $region24
        $region23: #{_lambda_.1} parent=11 // pred_region
          _
        $region24: #{_lambda_.1} parent=11 // pred_fallthru
          _
        // Predicated region
        $region25: #{_lambda_.1} parent=11 // pred_check
          %p335 = pneg %p159
        $region26: #{_lambda_.1} parent=11 // pred_check_branch
          %337 = sbr.rel (%p335) target = $region28
        $region27: #{_lambda_.1} parent=11 // pred_region
          _
        $region28: #{_lambda_.1} parent=11 // pred_fallthru
          _
        // Predicated region
        $region29: #{_lambda_.1} parent=11 // pred_check
          %p338 = pneg %p180
        $region30: #{_lambda_.1} parent=11 // pred_check_branch
          %340 = sbr.rel (%p338) target = $region32
        $region31: #{_lambda_.1} parent=11 // pred_region
          _
        $region32: #{_lambda_.1} parent=11 // pred_fallthru
          _
        // Predicated region
        $region33: #{_lambda_.1} parent=11 // pred_check
          %p341 = pneg %p201
        $region34: #{_lambda_.1} parent=11 // pred_check_branch
          %343 = sbr.rel (%p341) target = $region36
        $region35: #{_lambda_.1} parent=11 // pred_region
          _
        $region36: #{_lambda_.1} parent=11 // pred_fallthru
          _
        // Predicated region
        $region37: #{_lambda_.1} parent=11 // pred_check
          %p344 = pneg %p222
        $region38: #{_lambda_.1} parent=11 // pred_check_branch
          %346 = sbr.rel (%p344) target = $region40
        $region39: #{_lambda_.1} parent=11 // pred_region
          _
        $region40: #{_lambda_.1} parent=11 // pred_fallthru
          _
        // Predicated region
        $region41: #{_lambda_.1} parent=11 // pred_check
          %p347 = pneg %p243
        $region42: #{_lambda_.1} parent=11 // pred_check_branch
          %349 = sbr.rel (%p347) target = $region44
        $region43: #{_lambda_.1} parent=11 // pred_region
          _
        $region44: #{_lambda_.1} parent=11 // pred_fallthru
          _
        // Predicated region
        $region45: #{_lambda_.1} parent=11 // pred_check
          %p350 = pneg %p264
        $region46: #{_lambda_.1} parent=11 // pred_check_branch
          %352 = sbr.rel (%p350) target = $region48
        $region47: #{_lambda_.1} parent=11 // pred_region
          _
        $region48: #{_lambda_.1} parent=11 // pred_fallthru
          _
        // Predicated region
        $region49: #{_lambda_.1} parent=11 // pred_check
          %p353 = pneg %p285
        $region50: #{_lambda_.1} parent=11 // pred_check_branch
          %355 = sbr.rel (%p353) target = $region52
        $region51: #{_lambda_.1} parent=11 // pred_region
          _
        $region52: #{_lambda_.1} parent=11 // pred_fallthru
          _
      $region12: #{_lambda_.1} parent=5 // pred_fallthru
        _
      %p356 = scmp.lt.s32.totalorder %s23, 2
      // Predicated region
      $region53: #{_lambda_.1} parent=5 // pred_check
        %p357 = pneg %p356
      $region54: #{_lambda_.1} parent=5 // pred_check_branch
        %359 = sbr.rel (%p357) target = $region56
      $region55: #{_lambda_.1} parent=5 // pred_region
        // Predicated region
        $region57: #{_lambda_.1} parent=55 // pred_check
          %p360 = pneg %p43
        $region58: #{_lambda_.1} parent=55 // pred_check_branch
          %362 = sbr.rel (%p360) target = $region60
        $region59: #{_lambda_.1} parent=55 // pred_region
          %p363 = scmp.lt.s32.totalorder %s23, 1
          %s364 = scalar_select %p363, %s23, 1
          %s365 = smul.addr %s364, 2
          %s366 = scalar_lea.vmem %s0, %s365
        $region60: #{_lambda_.1} parent=55 // pred_fallthru
          _
        // Predicated region
        $region61: #{_lambda_.1} parent=55 // pred_check
          %p367 = pneg %p69
        $region62: #{_lambda_.1} parent=55 // pred_check_branch
          %369 = sbr.rel (%p367) target = $region64
        $region63: #{_lambda_.1} parent=55 // pred_region
          %p370 = scmp.lt.s32.totalorder %s23, 1
          %s371 = scalar_select %p370, %s23, 1
          %s372 = smul.addr %s371, 4
          %s373 = smul.addr %s372, 8
          %s374 = scalar_lea.vmem %s1, %s373
        $region64: #{_lambda_.1} parent=55 // pred_fallthru
          _
      $region56: #{_lambda_.1} parent=5 // pred_fallthru
        _
      %p375 = scmp.le.s32.totalorder 1, %s23
      %p376 = scmp.lt.s32.totalorder %s23, 3
      %p377 = pnand %p375, %p376
      %p378 = pneg %p377
      // Predicated region
      $region65: #{_lambda_.1} parent=5 // pred_check
        _
      $region66: #{_lambda_.1} parent=5 // pred_check_branch
        %380 = sbr.rel (%p377) target = $region68
      $region67: #{_lambda_.1} parent=5 // pred_region
        %s381 = ssub.s32 %s23, 1
        %p382 = scmp.lt.s32.totalorder %s28, 1
        %s383 = scalar_select %p382, %s28, 1
        %s384 = smul.addr %s383, 2
        %s385 = scalar_lea.vmem %s0, %s384
        %p386 = pneg %p49
        %p387 = pneg %p46
        %p388 = scmp.lt.s32.totalorder %s28, 1
        %s389 = scalar_select %p388, %s28, 1
        %s390 = smul.addr %s389, 4
        %s391 = smul.addr %s390, 8
        %s392 = scalar_lea.vmem %s1, %s391
        %p393 = pneg %p75
        %p394 = pneg %p72
        %p395 = pneg %p96
        %p396 = pneg %p93
        %p397 = pneg %p117
        %p398 = pneg %p114
        %p399 = pneg %p138
        %p400 = pneg %p135
        %p401 = pneg %p159
        %p402 = pneg %p156
        %p403 = pneg %p180
        %p404 = pneg %p177
        %p405 = pneg %p201
        %p406 = pneg %p198
        %p407 = pneg %p222
        %p408 = pneg %p219
        %p409 = pneg %p243
        %p410 = pneg %p240
        %p411 = pneg %p264
        %p412 = pneg %p261
        %p413 = pneg %p285
        %p414 = pneg %p282
        %p415 = pneg %p311
        %p416 = pneg %p308
        %s417 = sand.u32 %s298, 1
        %s418 = scalar_lea.sflag [#allocation6], %s417
        %s419 = sand.u32 %s298, 1
        %s420 = scalar_lea.vmem [#allocation5], %s419
        %p421 = scmp.lt.s32.totalorder %s28, 1
        %s422 = scalar_select %p421, %s28, 1
        %s423 = smul.addr %s422, 2
        %s424 = scalar_lea.vmem %s0, %s423
        %p425 = scmp.lt.s32.totalorder %s28, 1
        %s426 = scalar_select %p425, %s28, 1
        %s427 = smul.addr %s426, 4
        %s428 = smul.addr %s427, 8
        %s429 = scalar_lea.vmem %s1, %s428
        %430 = vst [vmem:[#allocation2] sm:$0xff] 0.0
        %431 = vst [vmem:[#allocation2 + $0x10] sm:$0xff] 0.0
        %432 = vst [vmem:[#allocation2 + $0x20] sm:$0xff] 0.0
        %433 = vst [vmem:[#allocation2 + $0x30] sm:$0xff] 0.0
        %v434 = vld [vmem:[%s429] sm:$0xff]
        %v435 = vld [vmem:[%s429 + $0x8] sm:$0xff]
        %v436 = vld [vmem:[%s429 + $0x10] sm:$0xff]
        %v437 = vld [vmem:[%s429 + $0x18] sm:$0xff]
        %438 = vst [vmem:[#allocation3 + $0x60] sm:$0xff] %v434
        %439 = vst [vmem:[#allocation3 + $0x68] sm:$0xff] %v435
        %440 = vst [vmem:[#allocation3 + $0x70] sm:$0xff] %v436
        %441 = vst [vmem:[#allocation3 + $0x78] sm:$0xff] %v437
        %v442 = vld [vmem:[%s424] sm:$0x3]
        %v443 = vld [vmem:[%s2] sm:$0xff]
        %v444 = vld [vmem:[%s2 + $0x8] sm:$0xff]
        %v445 = vld [vmem:[%s2 + $0x10] sm:$0xff]
        %v446 = vld [vmem:[%s2 + $0x18] sm:$0xff]
        %448 = vset.pattern.permute.xlu0 0
        %449 = vperm.xlu0 %448, %v443
        %v450 = vpop.permute.xlu0 %449
        %453 = vset.pattern.permute.xlu0 0
        %454 = vperm.xlu0 %453, %v444
        %v455 = vpop.permute.xlu0 %454
        %458 = vset.pattern.permute.xlu0 0
        %459 = vperm.xlu0 %458, %v445
        %v460 = vpop.permute.xlu0 %459
        %463 = vset.pattern.permute.xlu0 0
        %464 = vperm.xlu0 %463, %v446
        %v465 = vpop.permute.xlu0 %464
        %v468 = vlaneseq
        %v469 = vshrl.u32 %v468, 7
        %v470 = vsub.s32 0, %v469
        %v471 = vrot.slane %v442, %v470
        %v473 = vmul.f32 %v450, %v471
        %v474 = vmul.f32 %v455, %v471
        %v475 = vmul.f32 %v460, %v471
        %v476 = vmul.f32 %v465, %v471
        %v477 = vadd.f32 %v473, 0.0
        %v478 = vadd.f32 %v474, 0.0
        %v479 = vadd.f32 %v475, 0.0
        %v480 = vadd.f32 %v476, 0.0
        %481 = vset.pattern.permute.xlu0 1
        %482 = vperm.xlu0 %481, %v443
        %v483 = vpop.permute.xlu0 %482
        %485 = vset.pattern.permute.xlu0 1
        %486 = vperm.xlu0 %485, %v444
        %v487 = vpop.permute.xlu0 %486
        %489 = vset.pattern.permute.xlu0 1
        %490 = vperm.xlu0 %489, %v445
        %v491 = vpop.permute.xlu0 %490
        %493 = vset.pattern.permute.xlu0 1
        %494 = vperm.xlu0 %493, %v446
        %v495 = vpop.permute.xlu0 %494
        %v497 = vlaneseq
        %v498 = vshrl.u32 %v497, 7
        %v499 = vsub.s32 1, %v498
        %v500 = vrot.slane %v442, %v499
        %v502 = vmul.f32 %v483, %v471
        %v503 = vmul.f32 %v483, %v500
        %v504 = vmul.f32 %v487, %v471
        %v505 = vmul.f32 %v487, %v500
        %v506 = vmul.f32 %v491, %v471
        %v507 = vmul.f32 %v491, %v500
        %v508 = vmul.f32 %v495, %v471
        %v509 = vmul.f32 %v495, %v500
        %518 = vrot.lane.b32.xlu0 %v502, 127
        %v519 = vpop.permute.xlu0 %518
        %520 = vrot.lane.b32.xlu0 %v503, 127
        %v521 = vpop.permute.xlu0 %520
        %522 = vrot.lane.b32.xlu0 %v504, 127
        %v523 = vpop.permute.xlu0 %522
        %524 = vrot.lane.b32.xlu0 %v505, 127
        %v525 = vpop.permute.xlu0 %524
        %526 = vrot.lane.b32.xlu0 %v506, 127
        %v527 = vpop.permute.xlu0 %526
        %528 = vrot.lane.b32.xlu0 %v507, 127
        %v529 = vpop.permute.xlu0 %528
        %530 = vrot.lane.b32.xlu0 %v508, 127
        %v531 = vpop.permute.xlu0 %530
        %532 = vrot.lane.b32.xlu0 %v509, 127
        %v533 = vpop.permute.xlu0 %532
        %vm534 = vcmask 1039360
        %v535 = vsel %vm534, %v519, %v521
        %v536 = vsel %vm534, %v523, %v525
        %v537 = vsel %vm534, %v527, %v529
        %v538 = vsel %vm534, %v531, %v533
        %v543 = vadd.f32 %v477, %v535
        %v544 = vadd.f32 %v478, %v536
        %v545 = vadd.f32 %v479, %v537
        %v546 = vadd.f32 %v480, %v538
        %547 = vset.pattern.permute.xlu0 2
        %548 = vperm.xlu0 %547, %v443
        %v549 = vpop.permute.xlu0 %548
        %551 = vset.pattern.permute.xlu0 2
        %552 = vperm.xlu0 %551, %v444
        %v553 = vpop.permute.xlu0 %552
        %555 = vset.pattern.permute.xlu0 2
        %556 = vperm.xlu0 %555, %v445
        %v557 = vpop.permute.xlu0 %556
        %559 = vset.pattern.permute.xlu0 2
        %560 = vperm.xlu0 %559, %v446
        %v561 = vpop.permute.xlu0 %560
        %v563 = vmul.f32 %v549, %v471
        %v564 = vmul.f32 %v549, %v500
        %v565 = vmul.f32 %v553, %v471
        %v566 = vmul.f32 %v553, %v500
        %v567 = vmul.f32 %v557, %v471
        %v568 = vmul.f32 %v557, %v500
        %v569 = vmul.f32 %v561, %v471
        %v570 = vmul.f32 %v561, %v500
        %579 = vrot.lane.b32.xlu0 %v563, 126
        %v580 = vpop.permute.xlu0 %579
        %581 = vrot.lane.b32.xlu0 %v564, 126
        %v582 = vpop.permute.xlu0 %581
        %583 = vrot.lane.b32.xlu0 %v565, 126
        %v584 = vpop.permute.xlu0 %583
        %585 = vrot.lane.b32.xlu0 %v566, 126
        %v586 = vpop.permute.xlu0 %585
        %587 = vrot.lane.b32.xlu0 %v567, 126
        %v588 = vpop.permute.xlu0 %587
        %589 = vrot.lane.b32.xlu0 %v568, 126
        %v590 = vpop.permute.xlu0 %589
        %591 = vrot.lane.b32.xlu0 %v569, 126
        %v592 = vpop.permute.xlu0 %591
        %593 = vrot.lane.b32.xlu0 %v570, 126
        %v594 = vpop.permute.xlu0 %593
        %vm595 = vcmask 1031168
        %v596 = vsel %vm595, %v580, %v582
        %v597 = vsel %vm595, %v584, %v586
        %v598 = vsel %vm595, %v588, %v590
        %v599 = vsel %vm595, %v592, %v594
        %v604 = vadd.f32 %v543, %v596
        %v605 = vadd.f32 %v544, %v597
        %v606 = vadd.f32 %v545, %v598
        %v607 = vadd.f32 %v546, %v599
        %608 = vset.pattern.permute.xlu0 3
        %609 = vperm.xlu0 %608, %v443
        %v610 = vpop.permute.xlu0 %609
        %612 = vset.pattern.permute.xlu0 3
        %613 = vperm.xlu0 %612, %v444
        %v614 = vpop.permute.xlu0 %613
        %616 = vset.pattern.permute.xlu0 3
        %617 = vperm.xlu0 %616, %v445
        %v618 = vpop.permute.xlu0 %617
        %620 = vset.pattern.permute.xlu0 3
        %621 = vperm.xlu0 %620, %v446
        %v622 = vpop.permute.xlu0 %621
        %v624 = vmul.f32 %v610, %v471
        %v625 = vmul.f32 %v610, %v500
        %v626 = vmul.f32 %v614, %v471
        %v627 = vmul.f32 %v614, %v500
        %v628 = vmul.f32 %v618, %v471
        %v629 = vmul.f32 %v618, %v500
        %v630 = vmul.f32 %v622, %v471
        %v631 = vmul.f32 %v622, %v500
        %640 = vrot.lane.b32.xlu0 %v624, 125
        %v641 = vpop.permute.xlu0 %640
        %642 = vrot.lane.b32.xlu0 %v625, 125
        %v643 = vpop.permute.xlu0 %642
        %644 = vrot.lane.b32.xlu0 %v626, 125
        %v645 = vpop.permute.xlu0 %644
        %646 = vrot.lane.b32.xlu0 %v627, 125
        %v647 = vpop.permute.xlu0 %646
        %648 = vrot.lane.b32.xlu0 %v628, 125
        %v649 = vpop.permute.xlu0 %648
        %650 = vrot.lane.b32.xlu0 %v629, 125
        %v651 = vpop.permute.xlu0 %650
        %652 = vrot.lane.b32.xlu0 %v630, 125
        %v653 = vpop.permute.xlu0 %652
        %654 = vrot.lane.b32.xlu0 %v631, 125
        %v655 = vpop.permute.xlu0 %654
        %vm656 = vcmask 1022976
        %v657 = vsel %vm656, %v641, %v643
        %v658 = vsel %vm656, %v645, %v647
        %v659 = vsel %vm656, %v649, %v651
        %v660 = vsel %vm656, %v653, %v655
        %v665 = vadd.f32 %v604, %v657
        %v666 = vadd.f32 %v605, %v658
        %v667 = vadd.f32 %v606, %v659
        %v668 = vadd.f32 %v607, %v660
        %669 = vset.pattern.permute.xlu0 4
        %670 = vperm.xlu0 %669, %v443
        %v671 = vpop.permute.xlu0 %670
        %673 = vset.pattern.permute.xlu0 4
        %674 = vperm.xlu0 %673, %v444
        %v675 = vpop.permute.xlu0 %674
        %677 = vset.pattern.permute.xlu0 4
        %678 = vperm.xlu0 %677, %v445
        %v679 = vpop.permute.xlu0 %678
        %681 = vset.pattern.permute.xlu0 4
        %682 = vperm.xlu0 %681, %v446
        %v683 = vpop.permute.xlu0 %682
        %v685 = vmul.f32 %v671, %v471
        %v686 = vmul.f32 %v671, %v500
        %v687 = vmul.f32 %v675, %v471
        %v688 = vmul.f32 %v675, %v500
        %v689 = vmul.f32 %v679, %v471
        %v690 = vmul.f32 %v679, %v500
        %v691 = vmul.f32 %v683, %v471
        %v692 = vmul.f32 %v683, %v500
        %701 = vrot.lane.b32.xlu0 %v685, 124
        %v702 = vpop.permute.xlu0 %701
        %703 = vrot.lane.b32.xlu0 %v686, 124
        %v704 = vpop.permute.xlu0 %703
        %705 = vrot.lane.b32.xlu0 %v687, 124
        %v706 = vpop.permute.xlu0 %705
        %707 = vrot.lane.b32.xlu0 %v688, 124
        %v708 = vpop.permute.xlu0 %707
        %709 = vrot.lane.b32.xlu0 %v689, 124
        %v710 = vpop.permute.xlu0 %709
        %711 = vrot.lane.b32.xlu0 %v690, 124
        %v712 = vpop.permute.xlu0 %711
        %713 = vrot.lane.b32.xlu0 %v691, 124
        %v714 = vpop.permute.xlu0 %713
        %715 = vrot.lane.b32.xlu0 %v692, 124
        %v716 = vpop.permute.xlu0 %715
        %vm717 = vcmask 1014784
        %v718 = vsel %vm717, %v702, %v704
        %v719 = vsel %vm717, %v706, %v708
        %v720 = vsel %vm717, %v710, %v712
        %v721 = vsel %vm717, %v714, %v716
        %v726 = vadd.f32 %v665, %v718
        %v727 = vadd.f32 %v666, %v719
        %v728 = vadd.f32 %v667, %v720
        %v729 = vadd.f32 %v668, %v721
        %730 = vset.pattern.permute.xlu0 5
        %731 = vperm.xlu0 %730, %v443
        %v732 = vpop.permute.xlu0 %731
        %734 = vset.pattern.permute.xlu0 5
        %735 = vperm.xlu0 %734, %v444
        %v736 = vpop.permute.xlu0 %735
        %738 = vset.pattern.permute.xlu0 5
        %739 = vperm.xlu0 %738, %v445
        %v740 = vpop.permute.xlu0 %739
        %742 = vset.pattern.permute.xlu0 5
        %743 = vperm.xlu0 %742, %v446
        %v744 = vpop.permute.xlu0 %743
        %v746 = vmul.f32 %v732, %v471
        %v747 = vmul.f32 %v732, %v500
        %v748 = vmul.f32 %v736, %v471
        %v749 = vmul.f32 %v736, %v500
        %v750 = vmul.f32 %v740, %v471
        %v751 = vmul.f32 %v740, %v500
        %v752 = vmul.f32 %v744, %v471
        %v753 = vmul.f32 %v744, %v500
        %762 = vrot.lane.b32.xlu0 %v746, 123
        %v763 = vpop.permute.xlu0 %762
        %764 = vrot.lane.b32.xlu0 %v747, 123
        %v765 = vpop.permute.xlu0 %764
        %766 = vrot.lane.b32.xlu0 %v748, 123
        %v767 = vpop.permute.xlu0 %766
        %768 = vrot.lane.b32.xlu0 %v749, 123
        %v769 = vpop.permute.xlu0 %768
        %770 = vrot.lane.b32.xlu0 %v750, 123
        %v771 = vpop.permute.xlu0 %770
        %772 = vrot.lane.b32.xlu0 %v751, 123
        %v773 = vpop.permute.xlu0 %772
        %774 = vrot.lane.b32.xlu0 %v752, 123
        %v775 = vpop.permute.xlu0 %774
        %776 = vrot.lane.b32.xlu0 %v753, 123
        %v777 = vpop.permute.xlu0 %776
        %vm778 = vcmask 1006592
        %v779 = vsel %vm778, %v763, %v765
        %v780 = vsel %vm778, %v767, %v769
        %v781 = vsel %vm778, %v771, %v773
        %v782 = vsel %vm778, %v775, %v777
        %v787 = vadd.f32 %v726, %v779
        %v788 = vadd.f32 %v727, %v780
        %v789 = vadd.f32 %v728, %v781
        %v790 = vadd.f32 %v729, %v782
        %791 = vset.pattern.permute.xlu0 6
        %792 = vperm.xlu0 %791, %v443
        %v793 = vpop.permute.xlu0 %792
        %795 = vset.pattern.permute.xlu0 6
        %796 = vperm.xlu0 %795, %v444
        %v797 = vpop.permute.xlu0 %796
        %799 = vset.pattern.permute.xlu0 6
        %800 = vperm.xlu0 %799, %v445
        %v801 = vpop.permute.xlu0 %800
        %803 = vset.pattern.permute.xlu0 6
        %804 = vperm.xlu0 %803, %v446
        %v805 = vpop.permute.xlu0 %804
        %v807 = vmul.f32 %v793, %v471
        %v808 = vmul.f32 %v793, %v500
        %v809 = vmul.f32 %v797, %v471
        %v810 = vmul.f32 %v797, %v500
        %v811 = vmul.f32 %v801, %v471
        %v812 = vmul.f32 %v801, %v500
        %v813 = vmul.f32 %v805, %v471
        %v814 = vmul.f32 %v805, %v500
        %823 = vrot.lane.b32.xlu0 %v807, 122
        %v824 = vpop.permute.xlu0 %823
        %825 = vrot.lane.b32.xlu0 %v808, 122
        %v826 = vpop.permute.xlu0 %825
        %827 = vrot.lane.b32.xlu0 %v809, 122
        %v828 = vpop.permute.xlu0 %827
        %829 = vrot.lane.b32.xlu0 %v810, 122
        %v830 = vpop.permute.xlu0 %829
        %831 = vrot.lane.b32.xlu0 %v811, 122
        %v832 = vpop.permute.xlu0 %831
        %833 = vrot.lane.b32.xlu0 %v812, 122
        %v834 = vpop.permute.xlu0 %833
        %835 = vrot.lane.b32.xlu0 %v813, 122
        %v836 = vpop.permute.xlu0 %835
        %837 = vrot.lane.b32.xlu0 %v814, 122
        %v838 = vpop.permute.xlu0 %837
        %vm839 = vcmask 998400
        %v840 = vsel %vm839, %v824, %v826
        %v841 = vsel %vm839, %v828, %v830
        %v842 = vsel %vm839, %v832, %v834
        %v843 = vsel %vm839, %v836, %v838
        %v848 = vadd.f32 %v787, %v840
        %v849 = vadd.f32 %v788, %v841
        %v850 = vadd.f32 %v789, %v842
        %v851 = vadd.f32 %v790, %v843
        %852 = vset.pattern.permute.xlu0 7
        %853 = vperm.xlu0 %852, %v443
        %v854 = vpop.permute.xlu0 %853
        %856 = vset.pattern.permute.xlu0 7
        %857 = vperm.xlu0 %856, %v444
        %v858 = vpop.permute.xlu0 %857
        %860 = vset.pattern.permute.xlu0 7
        %861 = vperm.xlu0 %860, %v445
        %v862 = vpop.permute.xlu0 %861
        %864 = vset.pattern.permute.xlu0 7
        %865 = vperm.xlu0 %864, %v446
        %v866 = vpop.permute.xlu0 %865
        %v868 = vmul.f32 %v854, %v471
        %v869 = vmul.f32 %v854, %v500
        %v870 = vmul.f32 %v858, %v471
        %v871 = vmul.f32 %v858, %v500
        %v872 = vmul.f32 %v862, %v471
        %v873 = vmul.f32 %v862, %v500
        %v874 = vmul.f32 %v866, %v471
        %v875 = vmul.f32 %v866, %v500
        %884 = vrot.lane.b32.xlu0 %v868, 121
        %v885 = vpop.permute.xlu0 %884
        %886 = vrot.lane.b32.xlu0 %v869, 121
        %v887 = vpop.permute.xlu0 %886
        %888 = vrot.lane.b32.xlu0 %v870, 121
        %v889 = vpop.permute.xlu0 %888
        %890 = vrot.lane.b32.xlu0 %v871, 121
        %v891 = vpop.permute.xlu0 %890
        %892 = vrot.lane.b32.xlu0 %v872, 121
        %v893 = vpop.permute.xlu0 %892
        %894 = vrot.lane.b32.xlu0 %v873, 121
        %v895 = vpop.permute.xlu0 %894
        %896 = vrot.lane.b32.xlu0 %v874, 121
        %v897 = vpop.permute.xlu0 %896
        %898 = vrot.lane.b32.xlu0 %v875, 121
        %v899 = vpop.permute.xlu0 %898
        %vm900 = vcmask 990208
        %v901 = vsel %vm900, %v885, %v887
        %v902 = vsel %vm900, %v889, %v891
        %v903 = vsel %vm900, %v893, %v895
        %v904 = vsel %vm900, %v897, %v899
        %v909 = vadd.f32 %v848, %v901
        %v910 = vadd.f32 %v849, %v902
        %v911 = vadd.f32 %v850, %v903
        %v912 = vadd.f32 %v851, %v904
        %v913 = vld [vmem:[%s3] sm:$0xff]
        %v914 = vld [vmem:[%s3 + $0x8] sm:$0xff]
        %v915 = vld [vmem:[%s3 + $0x10] sm:$0xff]
        %v916 = vld [vmem:[%s3 + $0x18] sm:$0xff]
        %918 = vset.pattern.permute.xlu0 0
        %919 = vperm.xlu0 %918, %v913
        %v920 = vpop.permute.xlu0 %919
        %923 = vset.pattern.permute.xlu0 0
        %924 = vperm.xlu0 %923, %v914
        %v925 = vpop.permute.xlu0 %924
        %928 = vset.pattern.permute.xlu0 0
        %929 = vperm.xlu0 %928, %v915
        %v930 = vpop.permute.xlu0 %929
        %933 = vset.pattern.permute.xlu0 0
        %934 = vperm.xlu0 %933, %v916
        %v935 = vpop.permute.xlu0 %934
        %v937 = vadd.f32 %v909, %v920
        %v938 = vadd.f32 %v910, %v925
        %v939 = vadd.f32 %v911, %v930
        %v940 = vadd.f32 %v912, %v935
        %v941 = vmax.f32 %v937, 0.0
        %v942 = vmax.f32 %v938, 0.0
        %v943 = vmax.f32 %v939, 0.0
        %v944 = vmax.f32 %v940, 0.0
        %945 = vst [vmem:[#allocation2 + $0x8] sm:$0xff] %v941
        %946 = vst [vmem:[#allocation2 + $0x18] sm:$0xff] %v942
        %947 = vst [vmem:[#allocation2 + $0x28] sm:$0xff] %v943
        %948 = vst [vmem:[#allocation2 + $0x38] sm:$0xff] %v944
        %v949 = vld [vmem:[#allocation2] sm:$0xff]
        %v950 = vld [vmem:[#allocation2 + $0x8] sm:$0xff]
        %v951 = vld [vmem:[#allocation2 + $0x10] sm:$0xff]
        %v952 = vld [vmem:[#allocation2 + $0x18] sm:$0xff]
        %v953 = vld [vmem:[#allocation2 + $0x20] sm:$0xff]
        %v954 = vld [vmem:[#allocation2 + $0x28] sm:$0xff]
        %v955 = vld [vmem:[#allocation2 + $0x30] sm:$0xff]
        %v956 = vld [vmem:[#allocation2 + $0x38] sm:$0xff]
        %965 = vrot.lane.b32.xlu0 %v949, 2
        %v966 = vpop.permute.xlu0 %965
        %967 = vrot.lane.b32.xlu0 %v950, 2
        %v968 = vpop.permute.xlu0 %967
        %969 = vrot.lane.b32.xlu0 %v951, 2
        %v970 = vpop.permute.xlu0 %969
        %971 = vrot.lane.b32.xlu0 %v952, 2
        %v972 = vpop.permute.xlu0 %971
        %973 = vrot.lane.b32.xlu0 %v953, 2
        %v974 = vpop.permute.xlu0 %973
        %975 = vrot.lane.b32.xlu0 %v954, 2
        %v976 = vpop.permute.xlu0 %975
        %977 = vrot.lane.b32.xlu0 %v955, 2
        %v978 = vpop.permute.xlu0 %977
        %979 = vrot.lane.b32.xlu0 %v956, 2
        %v980 = vpop.permute.xlu0 %979
        %vm981 = vcmask 15360
        %v982 = vsel %vm981, %v966, %v968
        %v983 = vsel %vm981, %v970, %v972
        %v984 = vsel %vm981, %v974, %v976
        %v985 = vsel %vm981, %v978, %v980
        %990 = vst [vmem:[#allocation3] sm:$0xff] %v982
        %991 = vst [vmem:[#allocation3 + $0x8] sm:$0xff] %v983
        %992 = vst [vmem:[#allocation3 + $0x10] sm:$0xff] %v984
        %993 = vst [vmem:[#allocation3 + $0x18] sm:$0xff] %v985
        %v994 = vld [vmem:[#allocation2] sm:$0xff]
        %v995 = vld [vmem:[#allocation2 + $0x8] sm:$0xff]
        %v996 = vld [vmem:[#allocation2 + $0x10] sm:$0xff]
        %v997 = vld [vmem:[#allocation2 + $0x18] sm:$0xff]
        %v998 = vld [vmem:[#allocation2 + $0x20] sm:$0xff]
        %v999 = vld [vmem:[#allocation2 + $0x28] sm:$0xff]
        %v1000 = vld [vmem:[#allocation2 + $0x30] sm:$0xff]
        %v1001 = vld [vmem:[#allocation2 + $0x38] sm:$0xff]
        %1010 = vrot.lane.b32.xlu0 %v994, 1
        %v1011 = vpop.permute.xlu0 %1010
        %1012 = vrot.lane.b32.xlu0 %v995, 1
        %v1013 = vpop.permute.xlu0 %1012
        %1014 = vrot.lane.b32.xlu0 %v996, 1
        %v1015 = vpop.permute.xlu0 %1014
        %1016 = vrot.lane.b32.xlu0 %v997, 1
        %v1017 = vpop.permute.xlu0 %1016
        %1018 = vrot.lane.b32.xlu0 %v998, 1
        %v1019 = vpop.permute.xlu0 %1018
        %1020 = vrot.lane.b32.xlu0 %v999, 1
        %v1021 = vpop.permute.xlu0 %1020
        %1022 = vrot.lane.b32.xlu0 %v1000, 1
        %v1023 = vpop.permute.xlu0 %1022
        %1024 = vrot.lane.b32.xlu0 %v1001, 1
        %v1025 = vpop.permute.xlu0 %1024
        %vm1026 = vcmask 7168
        %v1027 = vsel %vm1026, %v1011, %v1013
        %v1028 = vsel %vm1026, %v1015, %v1017
        %v1029 = vsel %vm1026, %v1019, %v1021
        %v1030 = vsel %vm1026, %v1023, %v1025
        %1035 = vst [vmem:[#allocation3 + $0x20] sm:$0xff] %v1027
        %1036 = vst [vmem:[#allocation3 + $0x28] sm:$0xff] %v1028
        %1037 = vst [vmem:[#allocation3 + $0x30] sm:$0xff] %v1029
        %1038 = vst [vmem:[#allocation3 + $0x38] sm:$0xff] %v1030
        %v1039 = vld [vmem:[#allocation2 + $0x8] sm:$0xff]
        %v1040 = vld [vmem:[#allocation2 + $0x18] sm:$0xff]
        %v1041 = vld [vmem:[#allocation2 + $0x28] sm:$0xff]
        %v1042 = vld [vmem:[#allocation2 + $0x38] sm:$0xff]
        %1043 = vst [vmem:[#allocation3 + $0x40] sm:$0xff] %v1039
        %1044 = vst [vmem:[#allocation3 + $0x48] sm:$0xff] %v1040
        %1045 = vst [vmem:[#allocation3 + $0x50] sm:$0xff] %v1041
        %1046 = vst [vmem:[#allocation3 + $0x58] sm:$0xff] %v1042
        %v1047 = vld [vmem:[%s4] sm:$0xff]
        %v1048 = vld [vmem:[%s4 + $0x8] sm:$0xff]
        %v1049 = vld [vmem:[%s4 + $0x10] sm:$0xff]
        %v1050 = vld [vmem:[%s4 + $0x18] sm:$0xff]
        %v1051 = vld [vmem:[%s4 + $0x20] sm:$0xff]
        %v1052 = vld [vmem:[%s4 + $0x28] sm:$0xff]
        %v1053 = vld [vmem:[%s4 + $0x30] sm:$0xff]
        %v1054 = vld [vmem:[%s4 + $0x38] sm:$0xff]
        %v1055 = vld [vmem:[#allocation3] sm:$0xff]
        %v1056 = vld [vmem:[#allocation3 + $0x8] sm:$0xff]
        %v1057 = vld [vmem:[#allocation3 + $0x10] sm:$0xff]
        %v1058 = vld [vmem:[#allocation3 + $0x18] sm:$0xff]
        %v1059 = vld [vmem:[#allocation3 + $0x20] sm:$0xff]
        %v1060 = vld [vmem:[#allocation3 + $0x28] sm:$0xff]
        %v1061 = vld [vmem:[#allocation3 + $0x30] sm:$0xff]
        %v1062 = vld [vmem:[#allocation3 + $0x38] sm:$0xff]
        %v1063 = vld [vmem:[#allocation3 + $0x40] sm:$0xff]
        %v1064 = vld [vmem:[#allocation3 + $0x48] sm:$0xff]
        %v1065 = vld [vmem:[#allocation3 + $0x50] sm:$0xff]
        %v1066 = vld [vmem:[#allocation3 + $0x58] sm:$0xff]
        %v1067 = vld [vmem:[#allocation3 + $0x60] sm:$0xff]
        %v1068 = vld [vmem:[#allocation3 + $0x68] sm:$0xff]
        %v1069 = vld [vmem:[#allocation3 + $0x70] sm:$0xff]
        %v1070 = vld [vmem:[#allocation3 + $0x78] sm:$0xff]
        %v1071 = vld [vmem:[%s5] sm:$0xff]
        %v1072 = vld [vmem:[%s5 + $0x8] sm:$0xff]
        %v1073 = vld [vmem:[%s5 + $0x10] sm:$0xff]
        %v1074 = vld [vmem:[%s5 + $0x18] sm:$0xff]
        %v1075 = vld [vmem:[%s5 + $0x20] sm:$0xff]
        %v1076 = vld [vmem:[%s5 + $0x28] sm:$0xff]
        %v1077 = vld [vmem:[%s5 + $0x30] sm:$0xff]
        %v1078 = vld [vmem:[%s5 + $0x38] sm:$0xff]
        %1080 = vset.pattern.permute.xlu0 0
        %1081 = vperm.xlu0 %1080, %v1071
        %v1082 = vpop.permute.xlu0 %1081
        %1085 = vset.pattern.permute.xlu0 0
        %1086 = vperm.xlu0 %1085, %v1072
        %v1087 = vpop.permute.xlu0 %1086
        %1090 = vset.pattern.permute.xlu0 0
        %1091 = vperm.xlu0 %1090, %v1073
        %v1092 = vpop.permute.xlu0 %1091
        %1095 = vset.pattern.permute.xlu0 0
        %1096 = vperm.xlu0 %1095, %v1074
        %v1097 = vpop.permute.xlu0 %1096
        %1100 = vset.pattern.permute.xlu0 0
        %1101 = vperm.xlu0 %1100, %v1075
        %v1102 = vpop.permute.xlu0 %1101
        %1105 = vset.pattern.permute.xlu0 0
        %1106 = vperm.xlu0 %1105, %v1076
        %v1107 = vpop.permute.xlu0 %1106
        %1110 = vset.pattern.permute.xlu0 0
        %1111 = vperm.xlu0 %1110, %v1077
        %v1112 = vpop.permute.xlu0 %1111
        %1115 = vset.pattern.permute.xlu0 0
        %1116 = vperm.xlu0 %1115, %v1078
        %v1117 = vpop.permute.xlu0 %1116
        %1119 = vmatprep.subr.mxu0 0.0
        %1120 = vmatpush1.msra.mxu0 %v1055
        %1121 = vmatprep.subr.mxu0 0.0
        %1122 = vmatpush1.msra.mxu0 %v1056
        %1123 = vmatprep.subr.mxu0 0.0
        %1124 = vmatpush1.msra.mxu0 %v1057
        %1125 = vmatprep.subr.mxu0 0.0
        %1126 = vmatpush1.msra.mxu0 %v1058
        %1127 = vmatprep.subr.mxu0 0.0
        %1128 = vmatpush1.msra.mxu0 %v1059
        %1129 = vmatprep.subr.mxu0 0.0
        %1130 = vmatpush1.msra.mxu0 %v1060
        %1131 = vmatprep.subr.mxu0 0.0
        %1132 = vmatpush1.msra.mxu0 %v1061
        %1133 = vmatprep.subr.mxu0 0.0
        %1134 = vmatpush1.msra.mxu0 %v1062
        %1135 = vmatprep.subr.mxu0 0.0
        %1136 = vmatpush1.msra.mxu0 %v1063
        %1137 = vmatprep.subr.mxu0 0.0
        %1138 = vmatpush1.msra.mxu0 %v1064
        %1139 = vmatprep.subr.mxu0 0.0
        %1140 = vmatpush1.msra.mxu0 %v1065
        %1141 = vmatprep.subr.mxu0 0.0
        %1142 = vmatpush1.msra.mxu0 %v1066
        %1143 = vmatprep.subr.mxu0 0.0
        %1144 = vmatpush1.msra.mxu0 %v1067
        %1145 = vmatprep.subr.mxu0 0.0
        %1146 = vmatpush1.msra.mxu0 %v1068
        %1147 = vmatprep.subr.mxu0 0.0
        %1148 = vmatpush1.msra.mxu0 %v1069
        %1149 = vmatprep.subr.mxu0 0.0
        %1150 = vmatpush1.msra.mxu0 %v1070
        %1151 = vmatprep.subr.mxu0 0.0
        %1152 = vmatpush1.msra.mxu0 0.0
        %1153 = vmatprep.subr.mxu0 0.0
        %1154 = vmatpush1.msra.mxu0 0.0
        %1155 = vmatprep.subr.mxu0 0.0
        %1156 = vmatpush1.msra.mxu0 0.0
        %1157 = vmatprep.subr.mxu0 0.0
        %1158 = vmatpush1.msra.mxu0 0.0
        %1159 = vmatprep.subr.mxu0 0.0
        %1160 = vmatpush1.msra.mxu0 0.0
        %1161 = vmatprep.subr.mxu0 0.0
        %1162 = vmatpush1.msra.mxu0 0.0
        %1163 = vmatprep.subr.mxu0 0.0
        %1164 = vmatpush1.msra.mxu0 0.0
        %1165 = vmatprep.subr.mxu0 0.0
        %1166 = vmatpush1.msra.mxu0 0.0
        %1167 = vmatprep.subr.mxu0 0.0
        %1168 = vmatpush1.msra.mxu0 0.0
        %1169 = vmatprep.subr.mxu0 0.0
        %1170 = vmatpush1.msra.mxu0 0.0
        %1171 = vmatprep.subr.mxu0 0.0
        %1172 = vmatpush1.msra.mxu0 0.0
        %1173 = vmatprep.subr.mxu0 0.0
        %1174 = vmatpush1.msra.mxu0 0.0
        %1175 = vmatprep.subr.mxu0 0.0
        %1176 = vmatpush1.msra.mxu0 0.0
        %1177 = vmatprep.subr.mxu0 0.0
        %1178 = vmatpush1.msra.mxu0 0.0
        %1179 = vmatprep.subr.mxu0 0.0
        %1180 = vmatpush1.msra.mxu0 0.0
        %1181 = vmatprep.subr.mxu0 0.0
        %1182 = vmatpush1.msra.mxu0 0.0
        %1183 = vmatprep.mubr.f32.mxu0 0.0
        %1184 = vmatmul.mubr.f32.gmra.mrb[0].mxu0 %v1047
        %v1185 = vpop.f32.mrb[0].mxu0
        %v1186 = vadd.f32 %v1082, %v1185
        %v1187 = vpop.f32.mrb[0].mxu0
        %1188 = vmatprep.mubr.f32.mxu0 0.0
        %1189 = vmatmul.mubr.f32.gmra.mrb[0].mxu0 %v1048
        %v1190 = vpop.f32.mrb[0].mxu0
        %v1191 = vadd.f32 %v1087, %v1190
        %v1192 = vpop.f32.mrb[0].mxu0
        %1193 = vmatprep.mubr.f32.mxu0 0.0
        %1194 = vmatmul.mubr.f32.gmra.mrb[0].mxu0 %v1049
        %v1195 = vpop.f32.mrb[0].mxu0
        %v1196 = vadd.f32 %v1092, %v1195
        %v1197 = vpop.f32.mrb[0].mxu0
        %1198 = vmatprep.mubr.f32.mxu0 0.0
        %1199 = vmatmul.mubr.f32.gmra.mrb[0].mxu0 %v1050
        %v1200 = vpop.f32.mrb[0].mxu0
        %v1201 = vadd.f32 %v1097, %v1200
        %v1202 = vpop.f32.mrb[0].mxu0
        %1203 = vmatprep.mubr.f32.mxu0 0.0
        %1204 = vmatmul.mubr.f32.gmra.mrb[0].mxu0 %v1051
        %v1205 = vpop.f32.mrb[0].mxu0
        %v1206 = vadd.f32 %v1102, %v1205
        %v1207 = vpop.f32.mrb[0].mxu0
        %1208 = vmatprep.mubr.f32.mxu0 0.0
        %1209 = vmatmul.mubr.f32.gmra.mrb[0].mxu0 %v1052
        %v1210 = vpop.f32.mrb[0].mxu0
        %v1211 = vadd.f32 %v1107, %v1210
        %v1212 = vpop.f32.mrb[0].mxu0
        %1213 = vmatprep.mubr.f32.mxu0 0.0
        %1214 = vmatmul.mubr.f32.gmra.mrb[0].mxu0 %v1053
        %v1215 = vpop.f32.mrb[0].mxu0
        %v1216 = vadd.f32 %v1112, %v1215
        %v1217 = vpop.f32.mrb[0].mxu0
        %1218 = vmatprep.mubr.f32.mxu0 0.0
        %1219 = vmatmul.mubr.f32.gmra.mrb[0].mxu0 %v1054
        %v1220 = vpop.f32.mrb[0].mxu0
        %v1221 = vadd.f32 %v1117, %v1220
        %v1222 = vpop.f32.mrb[0].mxu0
        %1223 = vdwg.mxu0
        %v1224 = vtanh.pop %v1186
        %v1225 = vtanh.pop %v1191
        %v1226 = vtanh.pop %v1196
        %v1227 = vtanh.pop %v1201
        %v1228 = vxor.u32 %v1206, 2147483648
        %v1229 = vxor.u32 %v1211, 2147483648
        %v1230 = vxor.u32 %v1216, 2147483648
        %v1231 = vxor.u32 %v1221, 2147483648
        %v1232 = vmul.f32 %v1228, 1.442695
        %v1233 = vpow.pop %v1232
        %v1234 = vmul.f32 %v1229, 1.442695
        %v1235 = vpow.pop %v1234
        %v1236 = vmul.f32 %v1230, 1.442695
        %v1237 = vpow.pop %v1236
        %v1238 = vmul.f32 %v1231, 1.442695
        %v1239 = vpow.pop %v1238
        %v1240 = vadd.f32 %v1233, 1.0
        %v1241 = vadd.f32 %v1235, 1.0
        %v1242 = vadd.f32 %v1237, 1.0
        %v1243 = vadd.f32 %v1239, 1.0
        %v1244 = vrcp.pop %v1240
        %v1245 = vmul.f32 1.0, %v1244
        %v1246 = vrcp.pop %v1241
        %v1247 = vmul.f32 1.0, %v1246
        %v1248 = vrcp.pop %v1242
        %v1249 = vmul.f32 1.0, %v1248
        %v1250 = vrcp.pop %v1243
        %v1251 = vmul.f32 1.0, %v1250
        %v1252 = vmul.f32 %v1224, %v1245
        %v1253 = vmul.f32 %v1225, %v1247
        %v1254 = vmul.f32 %v1226, %v1249
        %v1255 = vmul.f32 %v1227, %v1251
        %v1256 = vld [vmem:[%s6] sm:$0xff]
        %v1257 = vld [vmem:[%s6 + $0x8] sm:$0xff]
        %v1258 = vld [vmem:[%s6 + $0x10] sm:$0xff]
        %v1259 = vld [vmem:[%s6 + $0x18] sm:$0xff]
        %v1260 = vld [vmem:[%s6 + $0x20] sm:$0xff]
        %v1261 = vld [vmem:[%s6 + $0x28] sm:$0xff]
        %v1262 = vld [vmem:[%s6 + $0x30] sm:$0xff]
        %v1263 = vld [vmem:[%s6 + $0x38] sm:$0xff]
        %v1264 = vld [vmem:[%s7] sm:$0xff]
        %v1265 = vld [vmem:[%s7 + $0x8] sm:$0xff]
        %v1266 = vld [vmem:[%s7 + $0x10] sm:$0xff]
        %v1267 = vld [vmem:[%s7 + $0x18] sm:$0xff]
        %v1268 = vld [vmem:[%s7 + $0x20] sm:$0xff]
        %v1269 = vld [vmem:[%s7 + $0x28] sm:$0xff]
        %v1270 = vld [vmem:[%s7 + $0x30] sm:$0xff]
        %v1271 = vld [vmem:[%s7 + $0x38] sm:$0xff]
        %1273 = vset.pattern.permute.xlu0 0
        %1274 = vperm.xlu0 %1273, %v1264
        %v1275 = vpop.permute.xlu0 %1274
        %1278 = vset.pattern.permute.xlu0 0
        %1279 = vperm.xlu0 %1278, %v1265
        %v1280 = vpop.permute.xlu0 %1279
        %1283 = vset.pattern.permute.xlu0 0
        %1284 = vperm.xlu0 %1283, %v1266
        %v1285 = vpop.permute.xlu0 %1284
        %1288 = vset.pattern.permute.xlu0 0
        %1289 = vperm.xlu0 %1288, %v1267
        %v1290 = vpop.permute.xlu0 %1289
        %1293 = vset.pattern.permute.xlu0 0
        %1294 = vperm.xlu0 %1293, %v1268
        %v1295 = vpop.permute.xlu0 %1294
        %1298 = vset.pattern.permute.xlu0 0
        %1299 = vperm.xlu0 %1298, %v1269
        %v1300 = vpop.permute.xlu0 %1299
        %1303 = vset.pattern.permute.xlu0 0
        %1304 = vperm.xlu0 %1303, %v1270
        %v1305 = vpop.permute.xlu0 %1304
        %1308 = vset.pattern.permute.xlu0 0
        %1309 = vperm.xlu0 %1308, %v1271
        %v1310 = vpop.permute.xlu0 %1309
        %vm1312 = vcmask 261120
        %v1314 = vsel %vm1312, %v1256, 0
        %v1317 = vsel %vm1312, %v1257, 0
        %v1320 = vsel %vm1312, %v1258, 0
        %v1323 = vsel %vm1312, %v1259, 0
        %v1326 = vsel %vm1312, %v1260, 0
        %v1329 = vsel %vm1312, %v1261, 0
        %v1332 = vsel %vm1312, %v1262, 0
        %v1335 = vsel %vm1312, %v1263, 0
        %1337 = vmatprep.subr.mxu0 0.0
        %1338 = vmatpush1.msra.mxu0 %v1252
        %1339 = vmatprep.subr.mxu0 0.0
        %1340 = vmatpush1.msra.mxu0 %v1253
        %1341 = vmatprep.subr.mxu0 0.0
        %1342 = vmatpush1.msra.mxu0 %v1254
        %1343 = vmatprep.subr.mxu0 0.0
        %1344 = vmatpush1.msra.mxu0 %v1255
        %1345 = vmatprep.subr.mxu0 0.0
        %1346 = vmatpush1.msra.mxu0 0.0
        %1347 = vmatprep.subr.mxu0 0.0
        %1348 = vmatpush1.msra.mxu0 0.0
        %1349 = vmatprep.subr.mxu0 0.0
        %1350 = vmatpush1.msra.mxu0 0.0
        %1351 = vmatprep.subr.mxu0 0.0
        %1352 = vmatpush1.msra.mxu0 0.0
        %1353 = vmatprep.subr.mxu0 0.0
        %1354 = vmatpush1.msra.mxu0 0.0
        %1355 = vmatprep.subr.mxu0 0.0
        %1356 = vmatpush1.msra.mxu0 0.0
        %1357 = vmatprep.subr.mxu0 0.0
        %1358 = vmatpush1.msra.mxu0 0.0
        %1359 = vmatprep.subr.mxu0 0.0
        %1360 = vmatpush1.msra.mxu0 0.0
        %1361 = vmatprep.subr.mxu0 0.0
        %1362 = vmatpush1.msra.mxu0 0.0
        %1363 = vmatprep.subr.mxu0 0.0
        %1364 = vmatpush1.msra.mxu0 0.0
        %1365 = vmatprep.subr.mxu0 0.0
        %1366 = vmatpush1.msra.mxu0 0.0
        %1367 = vmatprep.subr.mxu0 0.0
        %1368 = vmatpush1.msra.mxu0 0.0
        %1369 = vmatprep.subr.mxu0 0.0
        %1370 = vmatpush1.msra.mxu0 0.0
        %1371 = vmatprep.subr.mxu0 0.0
        %1372 = vmatpush1.msra.mxu0 0.0
        %1373 = vmatprep.subr.mxu0 0.0
        %1374 = vmatpush1.msra.mxu0 0.0
        %1375 = vmatprep.subr.mxu0 0.0
        %1376 = vmatpush1.msra.mxu0 0.0
        %1377 = vmatprep.subr.mxu0 0.0
        %1378 = vmatpush1.msra.mxu0 0.0
        %1379 = vmatprep.subr.mxu0 0.0
        %1380 = vmatpush1.msra.mxu0 0.0
        %1381 = vmatprep.subr.mxu0 0.0
        %1382 = vmatpush1.msra.mxu0 0.0
        %1383 = vmatprep.subr.mxu0 0.0
        %1384 = vmatpush1.msra.mxu0 0.0
        %1385 = vmatprep.subr.mxu0 0.0
        %1386 = vmatpush1.msra.mxu0 0.0
        %1387 = vmatprep.subr.mxu0 0.0
        %1388 = vmatpush1.msra.mxu0 0.0
        %1389 = vmatprep.subr.mxu0 0.0
        %1390 = vmatpush1.msra.mxu0 0.0
        %1391 = vmatprep.subr.mxu0 0.0
        %1392 = vmatpush1.msra.mxu0 0.0
        %1393 = vmatprep.subr.mxu0 0.0
        %1394 = vmatpush1.msra.mxu0 0.0
        %1395 = vmatprep.subr.mxu0 0.0
        %1396 = vmatpush1.msra.mxu0 0.0
        %1397 = vmatprep.subr.mxu0 0.0
        %1398 = vmatpush1.msra.mxu0 0.0
        %1399 = vmatprep.subr.mxu0 0.0
        %1400 = vmatpush1.msra.mxu0 0.0
        %1401 = vmatprep.mubr.f32.mxu0 0.0
        %1402 = vmatmul.mubr.f32.gmra.mrb[0].mxu0 %v1314
        %v1403 = vpop.f32.mrb[0].mxu0
        %v1404 = vadd.f32 %v1275, %v1403
        %v1405 = vpop.f32.mrb[0].mxu0
        %1406 = vmatprep.mubr.f32.mxu0 0.0
        %1407 = vmatmul.mubr.f32.gmra.mrb[0].mxu0 %v1317
        %v1408 = vpop.f32.mrb[0].mxu0
        %v1409 = vadd.f32 %v1280, %v1408
        %v1410 = vpop.f32.mrb[0].mxu0
        %1411 = vmatprep.mubr.f32.mxu0 0.0
        %1412 = vmatmul.mubr.f32.gmra.mrb[0].mxu0 %v1320
        %v1413 = vpop.f32.mrb[0].mxu0
        %v1414 = vadd.f32 %v1285, %v1413
        %v1415 = vpop.f32.mrb[0].mxu0
        %1416 = vmatprep.mubr.f32.mxu0 0.0
        %1417 = vmatmul.mubr.f32.gmra.mrb[0].mxu0 %v1323
        %v1418 = vpop.f32.mrb[0].mxu0
        %v1419 = vadd.f32 %v1290, %v1418
        %v1420 = vpop.f32.mrb[0].mxu0
        %1421 = vmatprep.mubr.f32.mxu0 0.0
        %1422 = vmatmul.mubr.f32.gmra.mrb[0].mxu0 %v1326
        %v1423 = vpop.f32.mrb[0].mxu0
        %v1424 = vadd.f32 %v1295, %v1423
        %v1425 = vpop.f32.mrb[0].mxu0
        %1426 = vmatprep.mubr.f32.mxu0 0.0
        %1427 = vmatmul.mubr.f32.gmra.mrb[0].mxu0 %v1329
        %v1428 = vpop.f32.mrb[0].mxu0
        %v1429 = vadd.f32 %v1300, %v1428
        %v1430 = vpop.f32.mrb[0].mxu0
        %1431 = vmatprep.mubr.f32.mxu0 0.0
        %1432 = vmatmul.mubr.f32.gmra.mrb[0].mxu0 %v1332
        %v1433 = vpop.f32.mrb[0].mxu0
        %v1434 = vadd.f32 %v1305, %v1433
        %v1435 = vpop.f32.mrb[0].mxu0
        %1436 = vmatprep.mubr.f32.mxu0 0.0
        %1437 = vmatmul.mubr.f32.gmra.mrb[0].mxu0 %v1335
        %v1438 = vpop.f32.mrb[0].mxu0
        %v1439 = vadd.f32 %v1310, %v1438
        %v1440 = vpop.f32.mrb[0].mxu0
        %1441 = vdwg.mxu0
        %v1442 = vadd.f32 %v941, %v1404
        %v1443 = vadd.f32 %v942, %v1409
        %v1444 = vadd.f32 %v943, %v1414
        %v1445 = vadd.f32 %v944, %v1419
        %v1446 = vmul.f32 %v1442, 0.70710677
        %v1447 = vmul.f32 %v1443, 0.70710677
        %v1448 = vmul.f32 %v1444, 0.70710677
        %v1449 = vmul.f32 %v1445, 0.70710677
        %v1450 = vadd.f32 %v1424, 0.0
        %v1451 = vadd.f32 %v1429, 0.0
        %v1452 = vadd.f32 %v1434, 0.0
        %v1453 = vadd.f32 %v1439, 0.0
        %1454 = vst [vmem:[#allocation2 + $0x8] sm:$0xff] %v1446
        %1455 = vst [vmem:[#allocation2 + $0x18] sm:$0xff] %v1447
        %1456 = vst [vmem:[#allocation2 + $0x28] sm:$0xff] %v1448
        %1457 = vst [vmem:[#allocation2 + $0x38] sm:$0xff] %v1449
        %v1458 = vld [vmem:[#allocation2] sm:$0xff]
        %v1459 = vld [vmem:[#allocation2 + $0x8] sm:$0xff]
        %v1460 = vld [vmem:[#allocation2 + $0x10] sm:$0xff]
        %v1461 = vld [vmem:[#allocation2 + $0x18] sm:$0xff]
        %v1462 = vld [vmem:[#allocation2 + $0x20] sm:$0xff]
        %v1463 = vld [vmem:[#allocation2 + $0x28] sm:$0xff]
        %v1464 = vld [vmem:[#allocation2 + $0x30] sm:$0xff]
        %v1465 = vld [vmem:[#allocation2 + $0x38] sm:$0xff]
        %1474 = vrot.lane.b32.xlu0 %v1458, 4
        %v1475 = vpop.permute.xlu0 %1474
        %1476 = vrot.lane.b32.xlu0 %v1459, 4
        %v1477 = vpop.permute.xlu0 %1476
        %1478 = vrot.lane.b32.xlu0 %v1460, 4
        %v1479 = vpop.permute.xlu0 %1478
        %1480 = vrot.lane.b32.xlu0 %v1461, 4
        %v1481 = vpop.permute.xlu0 %1480
        %1482 = vrot.lane.b32.xlu0 %v1462, 4
        %v1483 = vpop.permute.xlu0 %1482
        %1484 = vrot.lane.b32.xlu0 %v1463, 4
        %v1485 = vpop.permute.xlu0 %1484
        %1486 = vrot.lane.b32.xlu0 %v1464, 4
        %v1487 = vpop.permute.xlu0 %1486
        %1488 = vrot.lane.b32.xlu0 %v1465, 4
        %v1489 = vpop.permute.xlu0 %1488
        %vm1490 = vcmask 31744
        %v1491 = vsel %vm1490, %v1475, %v1477
        %v1492 = vsel %vm1490, %v1479, %v1481
        %v1493 = vsel %vm1490, %v1483, %v1485
        %v1494 = vsel %vm1490, %v1487, %v1489
        %1499 = vst [vmem:[#allocation3] sm:$0xff] %v1491
        %1500 = vst [vmem:[#allocation3 + $0x8] sm:$0xff] %v1492
        %1501 = vst [vmem:[#allocation3 + $0x10] sm:$0xff] %v1493
        %1502 = vst [vmem:[#allocation3 + $0x18] sm:$0xff] %v1494
        %v1503 = vld [vmem:[#allocation2] sm:$0xff]
        %v1504 = vld [vmem:[#allocation2 + $0x8] sm:$0xff]
        %v1505 = vld [vmem:[#allocation2 + $0x10] sm:$0xff]
        %v1506 = vld [vmem:[#allocation2 + $0x18] sm:$0xff]
        %v1507 = vld [vmem:[#allocation2 + $0x20] sm:$0xff]
        %v1508 = vld [vmem:[#allocation2 + $0x28] sm:$0xff]
        %v1509 = vld [vmem:[#allocation2 + $0x30] sm:$0xff]
        %v1510 = vld [vmem:[#allocation2 + $0x38] sm:$0xff]
        %1519 = vrot.lane.b32.xlu0 %v1503, 2
        %v1520 = vpop.permute.xlu0 %1519
        %1521 = vrot.lane.b32.xlu0 %v1504, 2
        %v1522 = vpop.permute.xlu0 %1521
        %1523 = vrot.lane.b32.xlu0 %v1505, 2
        %v1524 = vpop.permute.xlu0 %1523
        %1525 = vrot.lane.b32.xlu0 %v1506, 2
        %v1526 = vpop.permute.xlu0 %1525
        %1527 = vrot.lane.b32.xlu0 %v1507, 2
        %v1528 = vpop.permute.xlu0 %1527
        %1529 = vrot.lane.b32.xlu0 %v1508, 2
        %v1530 = vpop.permute.xlu0 %1529
        %1531 = vrot.lane.b32.xlu0 %v1509, 2
        %v1532 = vpop.permute.xlu0 %1531
        %1533 = vrot.lane.b32.xlu0 %v1510, 2
        %v1534 = vpop.permute.xlu0 %1533
        %v1535 = vsel %vm981, %v1520, %v1522
        %v1536 = vsel %vm981, %v1524, %v1526
        %v1537 = vsel %vm981, %v1528, %v1530
        %v1538 = vsel %vm981, %v1532, %v1534
        %1543 = vst [vmem:[#allocation3 + $0x20] sm:$0xff] %v1535
        %1544 = vst [vmem:[#allocation3 + $0x28] sm:$0xff] %v1536
        %1545 = vst [vmem:[#allocation3 + $0x30] sm:$0xff] %v1537
        %1546 = vst [vmem:[#allocation3 + $0x38] sm:$0xff] %v1538
        %v1547 = vld [vmem:[#allocation2 + $0x8] sm:$0xff]
        %v1548 = vld [vmem:[#allocation2 + $0x18] sm:$0xff]
        %v1549 = vld [vmem:[#allocation2 + $0x28] sm:$0xff]
        %v1550 = vld [vmem:[#allocation2 + $0x38] sm:$0xff]
        %1551 = vst [vmem:[#allocation3 + $0x40] sm:$0xff] %v1547
        %1552 = vst [vmem:[#allocation3 + $0x48] sm:$0xff] %v1548
        %1553 = vst [vmem:[#allocation3 + $0x50] sm:$0xff] %v1549
        %1554 = vst [vmem:[#allocation3 + $0x58] sm:$0xff] %v1550
        %s1555 = scalar_lea.vmem %s4, 64
        %v1556 = vld [vmem:[%s1555] sm:$0xff]
        %v1557 = vld [vmem:[%s1555 + $0x8] sm:$0xff]
        %v1558 = vld [vmem:[%s1555 + $0x10] sm:$0xff]
        %v1559 = vld [vmem:[%s1555 + $0x18] sm:$0xff]
        %v1560 = vld [vmem:[%s1555 + $0x20] sm:$0xff]
        %v1561 = vld [vmem:[%s1555 + $0x28] sm:$0xff]
        %v1562 = vld [vmem:[%s1555 + $0x30] sm:$0xff]
        %v1563 = vld [vmem:[%s1555 + $0x38] sm:$0xff]
        %v1564 = vld [vmem:[#allocation3] sm:$0xff]
        %v1565 = vld [vmem:[#allocation3 + $0x8] sm:$0xff]
        %v1566 = vld [vmem:[#allocation3 + $0x10] sm:$0xff]
        %v1567 = vld [vmem:[#allocation3 + $0x18] sm:$0xff]
        %v1568 = vld [vmem:[#allocation3 + $0x20] sm:$0xff]
        %v1569 = vld [vmem:[#allocation3 + $0x28] sm:$0xff]
        %v1570 = vld [vmem:[#allocation3 + $0x30] sm:$0xff]
        %v1571 = vld [vmem:[#allocation3 + $0x38] sm:$0xff]
        %v1572 = vld [vmem:[#allocation3 + $0x40] sm:$0xff]
        %v1573 = vld [vmem:[#allocation3 + $0x48] sm:$0xff]
        %v1574 = vld [vmem:[#allocation3 + $0x50] sm:$0xff]
        %v1575 = vld [vmem:[#allocation3 + $0x58] sm:$0xff]
        %v1576 = vld [vmem:[#allocation3 + $0x60] sm:$0xff]
        %v1577 = vld [vmem:[#allocation3 + $0x68] sm:$0xff]
        %v1578 = vld [vmem:[#allocation3 + $0x70] sm:$0xff]
        %v1579 = vld [vmem:[#allocation3 + $0x78] sm:$0xff]
        %s1580 = scalar_lea.vmem %s5, 64
        %v1581 = vld [vmem:[%s1580] sm:$0xff]
        %v1582 = vld [vmem:[%s1580 + $0x8] sm:$0xff]
        %v1583 = vld [vmem:[%s1580 + $0x10] sm:$0xff]
        %v1584 = vld [vmem:[%s1580 + $0x18] sm:$0xff]
        %v1585 = vld [vmem:[%s1580 + $0x20] sm:$0xff]
        %v1586 = vld [vmem:[%s1580 + $0x28] sm:$0xff]
        %v1587 = vld [vmem:[%s1580 + $0x30] sm:$0xff]
        %v1588 = vld [vmem:[%s1580 + $0x38] sm:$0xff]
        %1590 = vset.pattern.permute.xlu0 0
        %1591 = vperm.xlu0 %1590, %v1581
        %v1592 = vpop.permute.xlu0 %1591
        %1595 = vset.pattern.permute.xlu0 0
        %1596 = vperm.xlu0 %1595, %v1582
        %v1597 = vpop.permute.xlu0 %1596
        %1600 = vset.pattern.permute.xlu0 0
        %1601 = vperm.xlu0 %1600, %v1583
        %v1602 = vpop.permute.xlu0 %1601
        %1605 = vset.pattern.permute.xlu0 0
        %1606 = vperm.xlu0 %1605, %v1584
        %v1607 = vpop.permute.xlu0 %1606
        %1610 = vset.pattern.permute.xlu0 0
        %1611 = vperm.xlu0 %1610, %v1585
        %v1612 = vpop.permute.xlu0 %1611
        %1615 = vset.pattern.permute.xlu0 0
        %1616 = vperm.xlu0 %1615, %v1586
        %v1617 = vpop.permute.xlu0 %1616
        %1620 = vset.pattern.permute.xlu0 0
        %1621 = vperm.xlu0 %1620, %v1587
        %v1622 = vpop.permute.xlu0 %1621
        %1625 = vset.pattern.permute.xlu0 0
        %1626 = vperm.xlu0 %1625, %v1588
        %v1627 = vpop.permute.xlu0 %1626
        %1629 = vmatprep.subr.mxu0 0.0
        %1630 = vmatpush1.msra.mxu0 %v1564
        %1631 = vmatprep.subr.mxu0 0.0
        %1632 = vmatpush1.msra.mxu0 %v1565
        %1633 = vmatprep.subr.mxu0 0.0
        %1634 = vmatpush1.msra.mxu0 %v1566
        %1635 = vmatprep.subr.mxu0 0.0
        %1636 = vmatpush1.msra.mxu0 %v1567
        %1637 = vmatprep.subr.mxu0 0.0
        %1638 = vmatpush1.msra.mxu0 %v1568
        %1639 = vmatprep.subr.mxu0 0.0
        %1640 = vmatpush1.msra.mxu0 %v1569
        %1641 = vmatprep.subr.mxu0 0.0
        %1642 = vmatpush1.msra.mxu0 %v1570
        %1643 = vmatprep.subr.mxu0 0.0
        %1644 = vmatpush1.msra.mxu0 %v1571
        %1645 = vmatprep.subr.mxu0 0.0
        %1646 = vmatpush1.msra.mxu0 %v1572
        %1647 = vmatprep.subr.mxu0 0.0
        %1648 = vmatpush1.msra.mxu0 %v1573
        %1649 = vmatprep.subr.mxu0 0.0
        %1650 = vmatpush1.msra.mxu0 %v1574
        %1651 = vmatprep.subr.mxu0 0.0
        %1652 = vmatpush1.msra.mxu0 %v1575
        %1653 = vmatprep.subr.mxu0 0.0
        %1654 = vmatpush1.msra.mxu0 %v1576
        %1655 = vmatprep.subr.mxu0 0.0
        %1656 = vmatpush1.msra.mxu0 %v1577
        %1657 = vmatprep.subr.mxu0 0.0
        %1658 = vmatpush1.msra.mxu0 %v1578
        %1659 = vmatprep.subr.mxu0 0.0
        %1660 = vmatpush1.msra.mxu0 %v1579
        %1661 = vmatprep.subr.mxu0 0.0
        %1662 = vmatpush1.msra.mxu0 0.0
        %1663 = vmatprep.subr.mxu0 0.0
        %1664 = vmatpush1.msra.mxu0 0.0
        %1665 = vmatprep.subr.mxu0 0.0
        %1666 = vmatpush1.msra.mxu0 0.0
        %1667 = vmatprep.subr.mxu0 0.0
        %1668 = vmatpush1.msra.mxu0 0.0
        %1669 = vmatprep.subr.mxu0 0.0
        %1670 = vmatpush1.msra.mxu0 0.0
        %1671 = vmatprep.subr.mxu0 0.0
        %1672 = vmatpush1.msra.mxu0 0.0
        %1673 = vmatprep.subr.mxu0 0.0
        %1674 = vmatpush1.msra.mxu0 0.0
        %1675 = vmatprep.subr.mxu0 0.0
        %1676 = vmatpush1.msra.mxu0 0.0
        %1677 = vmatprep.subr.mxu0 0.0
        %1678 = vmatpush1.msra.mxu0 0.0
        %1679 = vmatprep.subr.mxu0 0.0
        %1680 = vmatpush1.msra.mxu0 0.0
        %1681 = vmatprep.subr.mxu0 0.0
        %1682 = vmatpush1.msra.mxu0 0.0
        %1683 = vmatprep.subr.mxu0 0.0
        %1684 = vmatpush1.msra.mxu0 0.0
        %1685 = vmatprep.subr.mxu0 0.0
        %1686 = vmatpush1.msra.mxu0 0.0
        %1687 = vmatprep.subr.mxu0 0.0
        %1688 = vmatpush1.msra.mxu0 0.0
        %1689 = vmatprep.subr.mxu0 0.0
        %1690 = vmatpush1.msra.mxu0 0.0
        %1691 = vmatprep.subr.mxu0 0.0
        %1692 = vmatpush1.msra.mxu0 0.0
        %1693 = vmatprep.mubr.f32.mxu0 0.0
        %1694 = vmatmul.mubr.f32.gmra.mrb[0].mxu0 %v1556
        %v1695 = vpop.f32.mrb[0].mxu0
        %v1696 = vadd.f32 %v1592, %v1695
        %v1697 = vpop.f32.mrb[0].mxu0
        %1698 = vmatprep.mubr.f32.mxu0 0.0
        %1699 = vmatmul.mubr.f32.gmra.mrb[0].mxu0 %v1557
        %v1700 = vpop.f32.mrb[0].mxu0
        %v1701 = vadd.f32 %v1597, %v1700
        %v1702 = vpop.f32.mrb[0].mxu0
        %1703 = vmatprep.mubr.f32.mxu0 0.0
        %1704 = vmatmul.mubr.f32.gmra.mrb[0].mxu0 %v1558
        %v1705 = vpop.f32.mrb[0].mxu0
        %v1706 = vadd.f32 %v1602, %v1705
        %v1707 = vpop.f32.mrb[0].mxu0
        %1708 = vmatprep.mubr.f32.mxu0 0.0
        %1709 = vmatmul.mubr.f32.gmra.mrb[0].mxu0 %v1559
        %v1710 = vpop.f32.mrb[0].mxu0
        %v1711 = vadd.f32 %v1607, %v1710
        %v1712 = vpop.f32.mrb[0].mxu0
        %1713 = vmatprep.mubr.f32.mxu0 0.0
        %1714 = vmatmul.mubr.f32.gmra.mrb[0].mxu0 %v1560
        %v1715 = vpop.f32.mrb[0].mxu0
        %v1716 = vadd.f32 %v1612, %v1715
        %v1717 = vpop.f32.mrb[0].mxu0
        %1718 = vmatprep.mubr.f32.mxu0 0.0
        %1719 = vmatmul.mubr.f32.gmra.mrb[0].mxu0 %v1561
        %v1720 = vpop.f32.mrb[0].mxu0
        %v1721 = vadd.f32 %v1617, %v1720
        %v1722 = vpop.f32.mrb[0].mxu0
        %1723 = vmatprep.mubr.f32.mxu0 0.0
        %1724 = vmatmul.mubr.f32.gmra.mrb[0].mxu0 %v1562
        %v1725 = vpop.f32.mrb[0].mxu0
        %v1726 = vadd.f32 %v1622, %v1725
        %v1727 = vpop.f32.mrb[0].mxu0
        %1728 = vmatprep.mubr.f32.mxu0 0.0
        %1729 = vmatmul.mubr.f32.gmra.mrb[0].mxu0 %v1563
        %v1730 = vpop.f32.mrb[0].mxu0
        %v1731 = vadd.f32 %v1627, %v1730
        %v1732 = vpop.f32.mrb[0].mxu0
        %1733 = vdwg.mxu0
        %v1734 = vtanh.pop %v1696
        %v1735 = vtanh.pop %v1701
        %v1736 = vtanh.pop %v1706
        %v1737 = vtanh.pop %v1711
        %v1738 = vxor.u32 %v1716, 2147483648
        %v1739 = vxor.u32 %v1721, 2147483648
        %v1740 = vxor.u32 %v1726, 2147483648
        %v1741 = vxor.u32 %v1731, 2147483648
        %v1742 = vmul.f32 %v1738, 1.442695
        %v1743 = vpow.pop %v1742
        %v1744 = vmul.f32 %v1739, 1.442695
        %v1745 = vpow.pop %v1744
        %v1746 = vmul.f32 %v1740, 1.442695
        %v1747 = vpow.pop %v1746
        %v1748 = vmul.f32 %v1741, 1.442695
        %v1749 = vpow.pop %v1748
        %v1750 = vadd.f32 %v1743, 1.0
        %v1751 = vadd.f32 %v1745, 1.0
        %v1752 = vadd.f32 %v1747, 1.0
        %v1753 = vadd.f32 %v1749, 1.0
        %v1754 = vrcp.pop %v1750
        %v1755 = vmul.f32 1.0, %v1754
        %v1756 = vrcp.pop %v1751
        %v1757 = vmul.f32 1.0, %v1756
        %v1758 = vrcp.pop %v1752
        %v1759 = vmul.f32 1.0, %v1758
        %v1760 = vrcp.pop %v1753
        %v1761 = vmul.f32 1.0, %v1760
        %v1762 = vmul.f32 %v1734, %v1755
        %v1763 = vmul.f32 %v1735, %v1757
        %v1764 = vmul.f32 %v1736, %v1759
        %v1765 = vmul.f32 %v1737, %v1761
        %s1766 = scalar_lea.vmem %s6, 64
        %v1767 = vld [vmem:[%s1766] sm:$0xff]
        %v1768 = vld [vmem:[%s1766 + $0x8] sm:$0xff]
        %v1769 = vld [vmem:[%s1766 + $0x10] sm:$0xff]
        %v1770 = vld [vmem:[%s1766 + $0x18] sm:$0xff]
        %v1771 = vld [vmem:[%s1766 + $0x20] sm:$0xff]
        %v1772 = vld [vmem:[%s1766 + $0x28] sm:$0xff]
        %v1773 = vld [vmem:[%s1766 + $0x30] sm:$0xff]
        %v1774 = vld [vmem:[%s1766 + $0x38] sm:$0xff]
        %s1775 = scalar_lea.vmem %s7, 64
        %v1776 = vld [vmem:[%s1775] sm:$0xff]
        %v1777 = vld [vmem:[%s1775 + $0x8] sm:$0xff]
        %v1778 = vld [vmem:[%s1775 + $0x10] sm:$0xff]
        %v1779 = vld [vmem:[%s1775 + $0x18] sm:$0xff]
        %v1780 = vld [vmem:[%s1775 + $0x20] sm:$0xff]
        %v1781 = vld [vmem:[%s1775 + $0x28] sm:$0xff]
        %v1782 = vld [vmem:[%s1775 + $0x30] sm:$0xff]
        %v1783 = vld [vmem:[%s1775 + $0x38] sm:$0xff]
        %1785 = vset.pattern.permute.xlu0 0
        %1786 = vperm.xlu0 %1785, %v1776
        %v1787 = vpop.permute.xlu0 %1786
        %1790 = vset.pattern.permute.xlu0 0
        %1791 = vperm.xlu0 %1790, %v1777
        %v1792 = vpop.permute.xlu0 %1791
        %1795 = vset.pattern.permute.xlu0 0
        %1796 = vperm.xlu0 %1795, %v1778
        %v1797 = vpop.permute.xlu0 %1796
        %1800 = vset.pattern.permute.xlu0 0
        %1801 = vperm.xlu0 %1800, %v1779
        %v1802 = vpop.permute.xlu0 %1801
        %1805 = vset.pattern.permute.xlu0 0
        %1806 = vperm.xlu0 %1805, %v1780
        %v1807 = vpop.permute.xlu0 %1806
        %1810 = vset.pattern.permute.xlu0 0
        %1811 = vperm.xlu0 %1810, %v1781
        %v1812 = vpop.permute.xlu0 %1811
        %1815 = vset.pattern.permute.xlu0 0
        %1816 = vperm.xlu0 %1815, %v1782
        %v1817 = vpop.permute.xlu0 %1816
        %1820 = vset.pattern.permute.xlu0 0
        %1821 = vperm.xlu0 %1820, %v1783
        %v1822 = vpop.permute.xlu0 %1821
        %v1825 = vsel %vm1312, %v1767, 0
        %v1828 = vsel %vm1312, %v1768, 0
        %v1831 = vsel %vm1312, %v1769, 0
        %v1834 = vsel %vm1312, %v1770, 0
        %v1837 = vsel %vm1312, %v1771, 0
        %v1840 = vsel %vm1312, %v1772, 0
        %v1843 = vsel %vm1312, %v1773, 0
        %v1846 = vsel %vm1312, %v1774, 0
        %1848 = vmatprep.subr.mxu0 0.0
        %1849 = vmatpush1.msra.mxu0 %v1762
        %1850 = vmatprep.subr.mxu0 0.0
        %1851 = vmatpush1.msra.mxu0 %v1763
        %1852 = vmatprep.subr.mxu0 0.0
        %1853 = vmatpush1.msra.mxu0 %v1764
        %1854 = vmatprep.subr.mxu0 0.0
        %1855 = vmatpush1.msra.mxu0 %v1765
        %1856 = vmatprep.subr.mxu0 0.0
        %1857 = vmatpush1.msra.mxu0 0.0
        %1858 = vmatprep.subr.mxu0 0.0
        %1859 = vmatpush1.msra.mxu0 0.0
        %1860 = vmatprep.subr.mxu0 0.0
        %1861 = vmatpush1.msra.mxu0 0.0
        %1862 = vmatprep.subr.mxu0 0.0
        %1863 = vmatpush1.msra.mxu0 0.0
        %1864 = vmatprep.subr.mxu0 0.0
        %1865 = vmatpush1.msra.mxu0 0.0
        %1866 = vmatprep.subr.mxu0 0.0
        %1867 = vmatpush1.msra.mxu0 0.0
        %1868 = vmatprep.subr.mxu0 0.0
        %1869 = vmatpush1.msra.mxu0 0.0
        %1870 = vmatprep.subr.mxu0 0.0
        %1871 = vmatpush1.msra.mxu0 0.0
        %1872 = vmatprep.subr.mxu0 0.0
        %1873 = vmatpush1.msra.mxu0 0.0
        %1874 = vmatprep.subr.mxu0 0.0
        %1875 = vmatpush1.msra.mxu0 0.0
        %1876 = vmatprep.subr.mxu0 0.0
        %1877 = vmatpush1.msra.mxu0 0.0
        %1878 = vmatprep.subr.mxu0 0.0
        %1879 = vmatpush1.msra.mxu0 0.0
        %1880 = vmatprep.subr.mxu0 0.0
        %1881 = vmatpush1.msra.mxu0 0.0
        %1882 = vmatprep.subr.mxu0 0.0
        %1883 = vmatpush1.msra.mxu0 0.0
        %1884 = vmatprep.subr.mxu0 0.0
        %1885 = vmatpush1.msra.mxu0 0.0
        %1886 = vmatprep.subr.mxu0 0.0
        %1887 = vmatpush1.msra.mxu0 0.0
        %1888 = vmatprep.subr.mxu0 0.0
        %1889 = vmatpush1.msra.mxu0 0.0
        %1890 = vmatprep.subr.mxu0 0.0
        %1891 = vmatpush1.msra.mxu0 0.0
        %1892 = vmatprep.subr.mxu0 0.0
        %1893 = vmatpush1.msra.mxu0 0.0
        %1894 = vmatprep.subr.mxu0 0.0
        %1895 = vmatpush1.msra.mxu0 0.0
        %1896 = vmatprep.subr.mxu0 0.0
        %1897 = vmatpush1.msra.mxu0 0.0
        %1898 = vmatprep.subr.mxu0 0.0
        %1899 = vmatpush1.msra.mxu0 0.0
        %1900 = vmatprep.subr.mxu0 0.0
        %1901 = vmatpush1.msra.mxu0 0.0
        %1902 = vmatprep.subr.mxu0 0.0
        %1903 = vmatpush1.msra.mxu0 0.0
        %1904 = vmatprep.subr.mxu0 0.0
        %1905 = vmatpush1.msra.mxu0 0.0
        %1906 = vmatprep.subr.mxu0 0.0
        %1907 = vmatpush1.msra.mxu0 0.0
        %1908 = vmatprep.subr.mxu0 0.0
        %1909 = vmatpush1.msra.mxu0 0.0
        %1910 = vmatprep.subr.mxu0 0.0
        %1911 = vmatpush1.msra.mxu0 0.0
        %1912 = vmatprep.mubr.f32.mxu0 0.0
        %1913 = vmatmul.mubr.f32.gmra.mrb[0].mxu0 %v1825
        %v1914 = vpop.f32.mrb[0].mxu0
        %v1915 = vadd.f32 %v1787, %v1914
        %v1916 = vpop.f32.mrb[0].mxu0
        %1917 = vmatprep.mubr.f32.mxu0 0.0
        %1918 = vmatmul.mubr.f32.gmra.mrb[0].mxu0 %v1828
        %v1919 = vpop.f32.mrb[0].mxu0
        %v1920 = vadd.f32 %v1792, %v1919
        %v1921 = vpop.f32.mrb[0].mxu0
        %1922 = vmatprep.mubr.f32.mxu0 0.0
        %1923 = vmatmul.mubr.f32.gmra.mrb[0].mxu0 %v1831
        %v1924 = vpop.f32.mrb[0].mxu0
        %v1925 = vadd.f32 %v1797, %v1924
        %v1926 = vpop.f32.mrb[0].mxu0
        %1927 = vmatprep.mubr.f32.mxu0 0.0
        %1928 = vmatmul.mubr.f32.gmra.mrb[0].mxu0 %v1834
        %v1929 = vpop.f32.mrb[0].mxu0
        %v1930 = vadd.f32 %v1802, %v1929
        %v1931 = vpop.f32.mrb[0].mxu0
        %1932 = vmatprep.mubr.f32.mxu0 0.0
        %1933 = vmatmul.mubr.f32.gmra.mrb[0].mxu0 %v1837
        %v1934 = vpop.f32.mrb[0].mxu0
        %v1935 = vadd.f32 %v1807, %v1934
        %v1936 = vpop.f32.mrb[0].mxu0
        %1937 = vmatprep.mubr.f32.mxu0 0.0
        %1938 = vmatmul.mubr.f32.gmra.mrb[0].mxu0 %v1840
        %v1939 = vpop.f32.mrb[0].mxu0
        %v1940 = vadd.f32 %v1812, %v1939
        %v1941 = vpop.f32.mrb[0].mxu0
        %1942 = vmatprep.mubr.f32.mxu0 0.0
        %1943 = vmatmul.mubr.f32.gmra.mrb[0].mxu0 %v1843
        %v1944 = vpop.f32.mrb[0].mxu0
        %v1945 = vadd.f32 %v1817, %v1944
        %v1946 = vpop.f32.mrb[0].mxu0
        %1947 = vmatprep.mubr.f32.mxu0 0.0
        %1948 = vmatmul.mubr.f32.gmra.mrb[0].mxu0 %v1846
        %v1949 = vpop.f32.mrb[0].mxu0
        %v1950 = vadd.f32 %v1822, %v1949
        %v1951 = vpop.f32.mrb[0].mxu0
        %1952 = vdwg.mxu0
        %v1953 = vadd.f32 %v1446, %v1915
        %v1954 = vadd.f32 %v1447, %v1920
        %v1955 = vadd.f32 %v1448, %v1925
        %v1956 = vadd.f32 %v1449, %v1930
        %v1957 = vmul.f32 %v1953, 0.70710677
        %v1958 = vmul.f32 %v1954, 0.70710677
        %v1959 = vmul.f32 %v1955, 0.70710677
        %v1960 = vmul.f32 %v1956, 0.70710677
        %v1961 = vadd.f32 %v1450, %v1935
        %v1962 = vadd.f32 %v1451, %v1940
        %v1963 = vadd.f32 %v1452, %v1945
        %v1964 = vadd.f32 %v1453, %v1950
        %1965 = vst [vmem:[#allocation2 + $0x8] sm:$0xff] %v1957
        %1966 = vst [vmem:[#allocation2 + $0x18] sm:$0xff] %v1958
        %1967 = vst [vmem:[#allocation2 + $0x28] sm:$0xff] %v1959
        %1968 = vst [vmem:[#allocation2 + $0x38] sm:$0xff] %v1960
        %v1969 = vld [vmem:[#allocation2] sm:$0xff]
        %v1970 = vld [vmem:[#allocation2 + $0x8] sm:$0xff]
        %v1971 = vld [vmem:[#allocation2 + $0x10] sm:$0xff]
        %v1972 = vld [vmem:[#allocation2 + $0x18] sm:$0xff]
        %v1973 = vld [vmem:[#allocation2 + $0x20] sm:$0xff]
        %v1974 = vld [vmem:[#allocation2 + $0x28] sm:$0xff]
        %v1975 = vld [vmem:[#allocation2 + $0x30] sm:$0xff]
        %v1976 = vld [vmem:[#allocation2 + $0x38] sm:$0xff]
        %1985 = vrot.lane.b32.xlu0 %v1969, 8
        %v1986 = vpop.permute.xlu0 %1985
        %1987 = vrot.lane.b32.xlu0 %v1970, 8
        %v1988 = vpop.permute.xlu0 %1987
        %1989 = vrot.lane.b32.xlu0 %v1971, 8
        %v1990 = vpop.permute.xlu0 %1989
        %1991 = vrot.lane.b32.xlu0 %v1972, 8
        %v1992 = vpop.permute.xlu0 %1991
        %1993 = vrot.lane.b32.xlu0 %v1973, 8
        %v1994 = vpop.permute.xlu0 %1993
        %1995 = vrot.lane.b32.xlu0 %v1974, 8
        %v1996 = vpop.permute.xlu0 %1995
        %1997 = vrot.lane.b32.xlu0 %v1975, 8
        %v1998 = vpop.permute.xlu0 %1997
        %1999 = vrot.lane.b32.xlu0 %v1976, 8
        %v2000 = vpop.permute.xlu0 %1999
        %vm2001 = vcmask 64512
        %v2002 = vsel %vm2001, %v1986, %v1988
        %v2003 = vsel %vm2001, %v1990, %v1992
        %v2004 = vsel %vm2001, %v1994, %v1996
        %v2005 = vsel %vm2001, %v1998, %v2000
        %2010 = vst [vmem:[#allocation3] sm:$0xff] %v2002
        %2011 = vst [vmem:[#allocation3 + $0x8] sm:$0xff] %v2003
        %2012 = vst [vmem:[#allocation3 + $0x10] sm:$0xff] %v2004
        %2013 = vst [vmem:[#allocation3 + $0x18] sm:$0xff] %v2005
        %v2014 = vld [vmem:[#allocation2] sm:$0xff]
        %v2015 = vld [vmem:[#allocation2 + $0x8] sm:$0xff]
        %v2016 = vld [vmem:[#allocation2 + $0x10] sm:$0xff]
        %v2017 = vld [vmem:[#allocation2 + $0x18] sm:$0xff]
        %v2018 = vld [vmem:[#allocation2 + $0x20] sm:$0xff]
        %v2019 = vld [vmem:[#allocation2 + $0x28] sm:$0xff]
        %v2020 = vld [vmem:[#allocation2 + $0x30] sm:$0xff]
        %v2021 = vld [vmem:[#allocation2 + $0x38] sm:$0xff]
        %2030 = vrot.lane.b32.xlu0 %v2014, 4
        %v2031 = vpop.permute.xlu0 %2030
        %2032 = vrot.lane.b32.xlu0 %v2015, 4
        %v2033 = vpop.permute.xlu0 %2032
        %2034 = vrot.lane.b32.xlu0 %v2016, 4
        %v2035 = vpop.permute.xlu0 %2034
        %2036 = vrot.lane.b32.xlu0 %v2017, 4
        %v2037 = vpop.permute.xlu0 %2036
        %2038 = vrot.lane.b32.xlu0 %v2018, 4
        %v2039 = vpop.permute.xlu0 %2038
        %2040 = vrot.lane.b32.xlu0 %v2019, 4
        %v2041 = vpop.permute.xlu0 %2040
        %2042 = vrot.lane.b32.xlu0 %v2020, 4
        %v2043 = vpop.permute.xlu0 %2042
        %2044 = vrot.lane.b32.xlu0 %v2021, 4
        %v2045 = vpop.permute.xlu0 %2044
        %v2046 = vsel %vm1490, %v2031, %v2033
        %v2047 = vsel %vm1490, %v2035, %v2037
        %v2048 = vsel %vm1490, %v2039, %v2041
        %v2049 = vsel %vm1490, %v2043, %v2045
        %2054 = vst [vmem:[#allocation3 + $0x20] sm:$0xff] %v2046
        %2055 = vst [vmem:[#allocation3 + $0x28] sm:$0xff] %v2047
        %2056 = vst [vmem:[#allocation3 + $0x30] sm:$0xff] %v2048
        %2057 = vst [vmem:[#allocation3 + $0x38] sm:$0xff] %v2049
        %v2058 = vld [vmem:[#allocation2 + $0x8] sm:$0xff]
        %v2059 = vld [vmem:[#allocation2 + $0x18] sm:$0xff]
        %v2060 = vld [vmem:[#allocation2 + $0x28] sm:$0xff]
        %v2061 = vld [vmem:[#allocation2 + $0x38] sm:$0xff]
        %2062 = vst [vmem:[#allocation3 + $0x40] sm:$0xff] %v2058
        %2063 = vst [vmem:[#allocation3 + $0x48] sm:$0xff] %v2059
        %2064 = vst [vmem:[#allocation3 + $0x50] sm:$0xff] %v2060
        %2065 = vst [vmem:[#allocation3 + $0x58] sm:$0xff] %v2061
        %s2066 = scalar_lea.vmem %s4, 128
        %v2067 = vld [vmem:[%s2066] sm:$0xff]
        %v2068 = vld [vmem:[%s2066 + $0x8] sm:$0xff]
        %v2069 = vld [vmem:[%s2066 + $0x10] sm:$0xff]
        %v2070 = vld [vmem:[%s2066 + $0x18] sm:$0xff]
        %v2071 = vld [vmem:[%s2066 + $0x20] sm:$0xff]
        %v2072 = vld [vmem:[%s2066 + $0x28] sm:$0xff]
        %v2073 = vld [vmem:[%s2066 + $0x30] sm:$0xff]
        %v2074 = vld [vmem:[%s2066 + $0x38] sm:$0xff]
        %v2075 = vld [vmem:[#allocation3] sm:$0xff]
        %v2076 = vld [vmem:[#allocation3 + $0x8] sm:$0xff]
        %v2077 = vld [vmem:[#allocation3 + $0x10] sm:$0xff]
        %v2078 = vld [vmem:[#allocation3 + $0x18] sm:$0xff]
        %v2079 = vld [vmem:[#allocation3 + $0x20] sm:$0xff]
        %v2080 = vld [vmem:[#allocation3 + $0x28] sm:$0xff]
        %v2081 = vld [vmem:[#allocation3 + $0x30] sm:$0xff]
        %v2082 = vld [vmem:[#allocation3 + $0x38] sm:$0xff]
        %v2083 = vld [vmem:[#allocation3 + $0x40] sm:$0xff]
        %v2084 = vld [vmem:[#allocation3 + $0x48] sm:$0xff]
        %v2085 = vld [vmem:[#allocation3 + $0x50] sm:$0xff]
        %v2086 = vld [vmem:[#allocation3 + $0x58] sm:$0xff]
        %v2087 = vld [vmem:[#allocation3 + $0x60] sm:$0xff]
        %v2088 = vld [vmem:[#allocation3 + $0x68] sm:$0xff]
        %v2089 = vld [vmem:[#allocation3 + $0x70] sm:$0xff]
        %v2090 = vld [vmem:[#allocation3 + $0x78] sm:$0xff]
        %s2091 = scalar_lea.vmem %s5, 128
        %v2092 = vld [vmem:[%s2091] sm:$0xff]
        %v2093 = vld [vmem:[%s2091 + $0x8] sm:$0xff]
        %v2094 = vld [vmem:[%s2091 + $0x10] sm:$0xff]
        %v2095 = vld [vmem:[%s2091 + $0x18] sm:$0xff]
        %v2096 = vld [vmem:[%s2091 + $0x20] sm:$0xff]
        %v2097 = vld [vmem:[%s2091 + $0x28] sm:$0xff]
        %v2098 = vld [vmem:[%s2091 + $0x30] sm:$0xff]
        %v2099 = vld [vmem:[%s2091 + $0x38] sm:$0xff]
        %2101 = vset.pattern.permute.xlu0 0
        %2102 = vperm.xlu0 %2101, %v2092
        %v2103 = vpop.permute.xlu0 %2102
        %2106 = vset.pattern.permute.xlu0 0
        %2107 = vperm.xlu0 %2106, %v2093
        %v2108 = vpop.permute.xlu0 %2107
        %2111 = vset.pattern.permute.xlu0 0
        %2112 = vperm.xlu0 %2111, %v2094
        %v2113 = vpop.permute.xlu0 %2112
        %2116 = vset.pattern.permute.xlu0 0
        %2117 = vperm.xlu0 %2116, %v2095
        %v2118 = vpop.permute.xlu0 %2117
        %2121 = vset.pattern.permute.xlu0 0
        %2122 = vperm.xlu0 %2121, %v2096
        %v2123 = vpop.permute.xlu0 %2122
        %2126 = vset.pattern.permute.xlu0 0
        %2127 = vperm.xlu0 %2126, %v2097
        %v2128 = vpop.permute.xlu0 %2127
        %2131 = vset.pattern.permute.xlu0 0
        %2132 = vperm.xlu0 %2131, %v2098
        %v2133 = vpop.permute.xlu0 %2132
        %2136 = vset.pattern.permute.xlu0 0
        %2137 = vperm.xlu0 %2136, %v2099
        %v2138 = vpop.permute.xlu0 %2137
        %2140 = vmatprep.subr.mxu0 0.0
        %2141 = vmatpush1.msra.mxu0 %v2075
        %2142 = vmatprep.subr.mxu0 0.0
        %2143 = vmatpush1.msra.mxu0 %v2076
        %2144 = vmatprep.subr.mxu0 0.0
        %2145 = vmatpush1.msra.mxu0 %v2077
        %2146 = vmatprep.subr.mxu0 0.0
        %2147 = vmatpush1.msra.mxu0 %v2078
        %2148 = vmatprep.subr.mxu0 0.0
        %2149 = vmatpush1.msra.mxu0 %v2079
        %2150 = vmatprep.subr.mxu0 0.0
        %2151 = vmatpush1.msra.mxu0 %v2080
        %2152 = vmatprep.subr.mxu0 0.0
        %2153 = vmatpush1.msra.mxu0 %v2081
        %2154 = vmatprep.subr.mxu0 0.0
        %2155 = vmatpush1.msra.mxu0 %v2082
        %2156 = vmatprep.subr.mxu0 0.0
        %2157 = vmatpush1.msra.mxu0 %v2083
        %2158 = vmatprep.subr.mxu0 0.0
        %2159 = vmatpush1.msra.mxu0 %v2084
        %2160 = vmatprep.subr.mxu0 0.0
        %2161 = vmatpush1.msra.mxu0 %v2085
        %2162 = vmatprep.subr.mxu0 0.0
        %2163 = vmatpush1.msra.mxu0 %v2086
        %2164 = vmatprep.subr.mxu0 0.0
        %2165 = vmatpush1.msra.mxu0 %v2087
        %2166 = vmatprep.subr.mxu0 0.0
        %2167 = vmatpush1.msra.mxu0 %v2088
        %2168 = vmatprep.subr.mxu0 0.0
        %2169 = vmatpush1.msra.mxu0 %v2089
        %2170 = vmatprep.subr.mxu0 0.0
        %2171 = vmatpush1.msra.mxu0 %v2090
        %2172 = vmatprep.subr.mxu0 0.0
        %2173 = vmatpush1.msra.mxu0 0.0
        %2174 = vmatprep.subr.mxu0 0.0
        %2175 = vmatpush1.msra.mxu0 0.0
        %2176 = vmatprep.subr.mxu0 0.0
        %2177 = vmatpush1.msra.mxu0 0.0
        %2178 = vmatprep.subr.mxu0 0.0
        %2179 = vmatpush1.msra.mxu0 0.0
        %2180 = vmatprep.subr.mxu0 0.0
        %2181 = vmatpush1.msra.mxu0 0.0
        %2182 = vmatprep.subr.mxu0 0.0
        %2183 = vmatpush1.msra.mxu0 0.0
        %2184 = vmatprep.subr.mxu0 0.0
        %2185 = vmatpush1.msra.mxu0 0.0
        %2186 = vmatprep.subr.mxu0 0.0
        %2187 = vmatpush1.msra.mxu0 0.0
        %2188 = vmatprep.subr.mxu0 0.0
        %2189 = vmatpush1.msra.mxu0 0.0
        %2190 = vmatprep.subr.mxu0 0.0
        %2191 = vmatpush1.msra.mxu0 0.0
        %2192 = vmatprep.subr.mxu0 0.0
        %2193 = vmatpush1.msra.mxu0 0.0
        %2194 = vmatprep.subr.mxu0 0.0
        %2195 = vmatpush1.msra.mxu0 0.0
        %2196 = vmatprep.subr.mxu0 0.0
        %2197 = vmatpush1.msra.mxu0 0.0
        %2198 = vmatprep.subr.mxu0 0.0
        %2199 = vmatpush1.msra.mxu0 0.0
        %2200 = vmatprep.subr.mxu0 0.0
        %2201 = vmatpush1.msra.mxu0 0.0
        %2202 = vmatprep.subr.mxu0 0.0
        %2203 = vmatpush1.msra.mxu0 0.0
        %2204 = vmatprep.mubr.f32.mxu0 0.0
        %2205 = vmatmul.mubr.f32.gmra.mrb[0].mxu0 %v2067
        %v2206 = vpop.f32.mrb[0].mxu0
        %v2207 = vadd.f32 %v2103, %v2206
        %v2208 = vpop.f32.mrb[0].mxu0
        %2209 = vmatprep.mubr.f32.mxu0 0.0
        %2210 = vmatmul.mubr.f32.gmra.mrb[0].mxu0 %v2068
        %v2211 = vpop.f32.mrb[0].mxu0
        %v2212 = vadd.f32 %v2108, %v2211
        %v2213 = vpop.f32.mrb[0].mxu0
        %2214 = vmatprep.mubr.f32.mxu0 0.0
        %2215 = vmatmul.mubr.f32.gmra.mrb[0].mxu0 %v2069
        %v2216 = vpop.f32.mrb[0].mxu0
        %v2217 = vadd.f32 %v2113, %v2216
        %v2218 = vpop.f32.mrb[0].mxu0
        %2219 = vmatprep.mubr.f32.mxu0 0.0
        %2220 = vmatmul.mubr.f32.gmra.mrb[0].mxu0 %v2070
        %v2221 = vpop.f32.mrb[0].mxu0
        %v2222 = vadd.f32 %v2118, %v2221
        %v2223 = vpop.f32.mrb[0].mxu0
        %2224 = vmatprep.mubr.f32.mxu0 0.0
        %2225 = vmatmul.mubr.f32.gmra.mrb[0].mxu0 %v2071
        %v2226 = vpop.f32.mrb[0].mxu0
        %v2227 = vadd.f32 %v2123, %v2226
        %v2228 = vpop.f32.mrb[0].mxu0
        %2229 = vmatprep.mubr.f32.mxu0 0.0
        %2230 = vmatmul.mubr.f32.gmra.mrb[0].mxu0 %v2072
        %v2231 = vpop.f32.mrb[0].mxu0
        %v2232 = vadd.f32 %v2128, %v2231
        %v2233 = vpop.f32.mrb[0].mxu0
        %2234 = vmatprep.mubr.f32.mxu0 0.0
        %2235 = vmatmul.mubr.f32.gmra.mrb[0].mxu0 %v2073
        %v2236 = vpop.f32.mrb[0].mxu0
        %v2237 = vadd.f32 %v2133, %v2236
        %v2238 = vpop.f32.mrb[0].mxu0
        %2239 = vmatprep.mubr.f32.mxu0 0.0
        %2240 = vmatmul.mubr.f32.gmra.mrb[0].mxu0 %v2074
        %v2241 = vpop.f32.mrb[0].mxu0
        %v2242 = vadd.f32 %v2138, %v2241
        %v2243 = vpop.f32.mrb[0].mxu0
        %2244 = vdwg.mxu0
        %v2245 = vtanh.pop %v2207
        %v2246 = vtanh.pop %v2212
        %v2247 = vtanh.pop %v2217
        %v2248 = vtanh.pop %v2222
        %v2249 = vxor.u32 %v2227, 2147483648
        %v2250 = vxor.u32 %v2232, 2147483648
        %v2251 = vxor.u32 %v2237, 2147483648
        %v2252 = vxor.u32 %v2242, 2147483648
        %v2253 = vmul.f32 %v2249, 1.442695
        %v2254 = vpow.pop %v2253
        %v2255 = vmul.f32 %v2250, 1.442695
        %v2256 = vpow.pop %v2255
        %v2257 = vmul.f32 %v2251, 1.442695
        %v2258 = vpow.pop %v2257
        %v2259 = vmul.f32 %v2252, 1.442695
        %v2260 = vpow.pop %v2259
        %v2261 = vadd.f32 %v2254, 1.0
        %v2262 = vadd.f32 %v2256, 1.0
        %v2263 = vadd.f32 %v2258, 1.0
        %v2264 = vadd.f32 %v2260, 1.0
        %v2265 = vrcp.pop %v2261
        %v2266 = vmul.f32 1.0, %v2265
        %v2267 = vrcp.pop %v2262
        %v2268 = vmul.f32 1.0, %v2267
        %v2269 = vrcp.pop %v2263
        %v2270 = vmul.f32 1.0, %v2269
        %v2271 = vrcp.pop %v2264
        %v2272 = vmul.f32 1.0, %v2271
        %v2273 = vmul.f32 %v2245, %v2266
        %v2274 = vmul.f32 %v2246, %v2268
        %v2275 = vmul.f32 %v2247, %v2270
        %v2276 = vmul.f32 %v2248, %v2272
        %s2277 = scalar_lea.vmem %s6, 128
        %v2278 = vld [vmem:[%s2277] sm:$0xff]
        %v2279 = vld [vmem:[%s2277 + $0x8] sm:$0xff]
        %v2280 = vld [vmem:[%s2277 + $0x10] sm:$0xff]
        %v2281 = vld [vmem:[%s2277 + $0x18] sm:$0xff]
        %v2282 = vld [vmem:[%s2277 + $0x20] sm:$0xff]
        %v2283 = vld [vmem:[%s2277 + $0x28] sm:$0xff]
        %v2284 = vld [vmem:[%s2277 + $0x30] sm:$0xff]
        %v2285 = vld [vmem:[%s2277 + $0x38] sm:$0xff]
        %s2286 = scalar_lea.vmem %s7, 128
        %v2287 = vld [vmem:[%s2286] sm:$0xff]
        %v2288 = vld [vmem:[%s2286 + $0x8] sm:$0xff]
        %v2289 = vld [vmem:[%s2286 + $0x10] sm:$0xff]
        %v2290 = vld [vmem:[%s2286 + $0x18] sm:$0xff]
        %v2291 = vld [vmem:[%s2286 + $0x20] sm:$0xff]
        %v2292 = vld [vmem:[%s2286 + $0x28] sm:$0xff]
        %v2293 = vld [vmem:[%s2286 + $0x30] sm:$0xff]
        %v2294 = vld [vmem:[%s2286 + $0x38] sm:$0xff]
        %2296 = vset.pattern.permute.xlu0 0
        %2297 = vperm.xlu0 %2296, %v2287
        %v2298 = vpop.permute.xlu0 %2297
        %2301 = vset.pattern.permute.xlu0 0
        %2302 = vperm.xlu0 %2301, %v2288
        %v2303 = vpop.permute.xlu0 %2302
        %2306 = vset.pattern.permute.xlu0 0
        %2307 = vperm.xlu0 %2306, %v2289
        %v2308 = vpop.permute.xlu0 %2307
        %2311 = vset.pattern.permute.xlu0 0
        %2312 = vperm.xlu0 %2311, %v2290
        %v2313 = vpop.permute.xlu0 %2312
        %2316 = vset.pattern.permute.xlu0 0
        %2317 = vperm.xlu0 %2316, %v2291
        %v2318 = vpop.permute.xlu0 %2317
        %2321 = vset.pattern.permute.xlu0 0
        %2322 = vperm.xlu0 %2321, %v2292
        %v2323 = vpop.permute.xlu0 %2322
        %2326 = vset.pattern.permute.xlu0 0
        %2327 = vperm.xlu0 %2326, %v2293
        %v2328 = vpop.permute.xlu0 %2327
        %2331 = vset.pattern.permute.xlu0 0
        %2332 = vperm.xlu0 %2331, %v2294
        %v2333 = vpop.permute.xlu0 %2332
        %v2336 = vsel %vm1312, %v2278, 0
        %v2339 = vsel %vm1312, %v2279, 0
        %v2342 = vsel %vm1312, %v2280, 0
        %v2345 = vsel %vm1312, %v2281, 0
        %v2348 = vsel %vm1312, %v2282, 0
        %v2351 = vsel %vm1312, %v2283, 0
        %v2354 = vsel %vm1312, %v2284, 0
        %v2357 = vsel %vm1312, %v2285, 0
        %2359 = vmatprep.subr.mxu0 0.0
        %2360 = vmatpush1.msra.mxu0 %v2273
        %2361 = vmatprep.subr.mxu0 0.0
        %2362 = vmatpush1.msra.mxu0 %v2274
        %2363 = vmatprep.subr.mxu0 0.0
        %2364 = vmatpush1.msra.mxu0 %v2275
        %2365 = vmatprep.subr.mxu0 0.0
        %2366 = vmatpush1.msra.mxu0 %v2276
        %2367 = vmatprep.subr.mxu0 0.0
        %2368 = vmatpush1.msra.mxu0 0.0
        %2369 = vmatprep.subr.mxu0 0.0
        %2370 = vmatpush1.msra.mxu0 0.0
        %2371 = vmatprep.subr.mxu0 0.0
        %2372 = vmatpush1.msra.mxu0 0.0
        %2373 = vmatprep.subr.mxu0 0.0
        %2374 = vmatpush1.msra.mxu0 0.0
        %2375 = vmatprep.subr.mxu0 0.0
        %2376 = vmatpush1.msra.mxu0 0.0
        %2377 = vmatprep.subr.mxu0 0.0
        %2378 = vmatpush1.msra.mxu0 0.0
        %2379 = vmatprep.subr.mxu0 0.0
        %2380 = vmatpush1.msra.mxu0 0.0
        %2381 = vmatprep.subr.mxu0 0.0
        %2382 = vmatpush1.msra.mxu0 0.0
        %2383 = vmatprep.subr.mxu0 0.0
        %2384 = vmatpush1.msra.mxu0 0.0
        %2385 = vmatprep.subr.mxu0 0.0
        %2386 = vmatpush1.msra.mxu0 0.0
        %2387 = vmatprep.subr.mxu0 0.0
        %2388 = vmatpush1.msra.mxu0 0.0
        %2389 = vmatprep.subr.mxu0 0.0
        %2390 = vmatpush1.msra.mxu0 0.0
        %2391 = vmatprep.subr.mxu0 0.0
        %2392 = vmatpush1.msra.mxu0 0.0
        %2393 = vmatprep.subr.mxu0 0.0
        %2394 = vmatpush1.msra.mxu0 0.0
        %2395 = vmatprep.subr.mxu0 0.0
        %2396 = vmatpush1.msra.mxu0 0.0
        %2397 = vmatprep.subr.mxu0 0.0
        %2398 = vmatpush1.msra.mxu0 0.0
        %2399 = vmatprep.subr.mxu0 0.0
        %2400 = vmatpush1.msra.mxu0 0.0
        %2401 = vmatprep.subr.mxu0 0.0
        %2402 = vmatpush1.msra.mxu0 0.0
        %2403 = vmatprep.subr.mxu0 0.0
        %2404 = vmatpush1.msra.mxu0 0.0
        %2405 = vmatprep.subr.mxu0 0.0
        %2406 = vmatpush1.msra.mxu0 0.0
        %2407 = vmatprep.subr.mxu0 0.0
        %2408 = vmatpush1.msra.mxu0 0.0
        %2409 = vmatprep.subr.mxu0 0.0
        %2410 = vmatpush1.msra.mxu0 0.0
        %2411 = vmatprep.subr.mxu0 0.0
        %2412 = vmatpush1.msra.mxu0 0.0
        %2413 = vmatprep.subr.mxu0 0.0
        %2414 = vmatpush1.msra.mxu0 0.0
        %2415 = vmatprep.subr.mxu0 0.0
        %2416 = vmatpush1.msra.mxu0 0.0
        %2417 = vmatprep.subr.mxu0 0.0
        %2418 = vmatpush1.msra.mxu0 0.0
        %2419 = vmatprep.subr.mxu0 0.0
        %2420 = vmatpush1.msra.mxu0 0.0
        %2421 = vmatprep.subr.mxu0 0.0
        %2422 = vmatpush1.msra.mxu0 0.0
        %2423 = vmatprep.mubr.f32.mxu0 0.0
        %2424 = vmatmul.mubr.f32.gmra.mrb[0].mxu0 %v2336
        %v2425 = vpop.f32.mrb[0].mxu0
        %v2426 = vadd.f32 %v2298, %v2425
        %v2427 = vpop.f32.mrb[0].mxu0
        %2428 = vmatprep.mubr.f32.mxu0 0.0
        %2429 = vmatmul.mubr.f32.gmra.mrb[0].mxu0 %v2339
        %v2430 = vpop.f32.mrb[0].mxu0
        %v2431 = vadd.f32 %v2303, %v2430
        %v2432 = vpop.f32.mrb[0].mxu0
        %2433 = vmatprep.mubr.f32.mxu0 0.0
        %2434 = vmatmul.mubr.f32.gmra.mrb[0].mxu0 %v2342
        %v2435 = vpop.f32.mrb[0].mxu0
        %v2436 = vadd.f32 %v2308, %v2435
        %v2437 = vpop.f32.mrb[0].mxu0
        %2438 = vmatprep.mubr.f32.mxu0 0.0
        %2439 = vmatmul.mubr.f32.gmra.mrb[0].mxu0 %v2345
        %v2440 = vpop.f32.mrb[0].mxu0
        %v2441 = vadd.f32 %v2313, %v2440
        %v2442 = vpop.f32.mrb[0].mxu0
        %2443 = vmatprep.mubr.f32.mxu0 0.0
        %2444 = vmatmul.mubr.f32.gmra.mrb[0].mxu0 %v2348
        %v2445 = vpop.f32.mrb[0].mxu0
        %v2446 = vadd.f32 %v2318, %v2445
        %v2447 = vpop.f32.mrb[0].mxu0
        %2448 = vmatprep.mubr.f32.mxu0 0.0
        %2449 = vmatmul.mubr.f32.gmra.mrb[0].mxu0 %v2351
        %v2450 = vpop.f32.mrb[0].mxu0
        %v2451 = vadd.f32 %v2323, %v2450
        %v2452 = vpop.f32.mrb[0].mxu0
        %2453 = vmatprep.mubr.f32.mxu0 0.0
        %2454 = vmatmul.mubr.f32.gmra.mrb[0].mxu0 %v2354
        %v2455 = vpop.f32.mrb[0].mxu0
        %v2456 = vadd.f32 %v2328, %v2455
        %v2457 = vpop.f32.mrb[0].mxu0
        %2458 = vmatprep.mubr.f32.mxu0 0.0
        %2459 = vmatmul.mubr.f32.gmra.mrb[0].mxu0 %v2357
        %v2460 = vpop.f32.mrb[0].mxu0
        %v2461 = vadd.f32 %v2333, %v2460
        %v2462 = vpop.f32.mrb[0].mxu0
        %2463 = vdwg.mxu0
        %v2464 = vadd.f32 %v1957, %v2426
        %v2465 = vadd.f32 %v1958, %v2431
        %v2466 = vadd.f32 %v1959, %v2436
        %v2467 = vadd.f32 %v1960, %v2441
        %v2468 = vmul.f32 %v2464, 0.70710677
        %v2469 = vmul.f32 %v2465, 0.70710677
        %v2470 = vmul.f32 %v2466, 0.70710677
        %v2471 = vmul.f32 %v2467, 0.70710677
        %v2472 = vadd.f32 %v1961, %v2446
        %v2473 = vadd.f32 %v1962, %v2451
        %v2474 = vadd.f32 %v1963, %v2456
        %v2475 = vadd.f32 %v1964, %v2461
        %2476 = vst [vmem:[#allocation2 + $0x8] sm:$0xff] %v2468
        %2477 = vst [vmem:[#allocation2 + $0x18] sm:$0xff] %v2469
        %2478 = vst [vmem:[#allocation2 + $0x28] sm:$0xff] %v2470
        %2479 = vst [vmem:[#allocation2 + $0x38] sm:$0xff] %v2471
        %v2480 = vld [vmem:[#allocation2] sm:$0xff]
        %v2481 = vld [vmem:[#allocation2 + $0x8] sm:$0xff]
        %v2482 = vld [vmem:[#allocation2 + $0x10] sm:$0xff]
        %v2483 = vld [vmem:[#allocation2 + $0x18] sm:$0xff]
        %v2484 = vld [vmem:[#allocation2 + $0x20] sm:$0xff]
        %v2485 = vld [vmem:[#allocation2 + $0x28] sm:$0xff]
        %v2486 = vld [vmem:[#allocation2 + $0x30] sm:$0xff]
        %v2487 = vld [vmem:[#allocation2 + $0x38] sm:$0xff]
        %2496 = vrot.lane.b32.xlu0 %v2480, 16
        %v2497 = vpop.permute.xlu0 %2496
        %2498 = vrot.lane.b32.xlu0 %v2481, 16
        %v2499 = vpop.permute.xlu0 %2498
        %2500 = vrot.lane.b32.xlu0 %v2482, 16
        %v2501 = vpop.permute.xlu0 %2500
        %2502 = vrot.lane.b32.xlu0 %v2483, 16
        %v2503 = vpop.permute.xlu0 %2502
        %2504 = vrot.lane.b32.xlu0 %v2484, 16
        %v2505 = vpop.permute.xlu0 %2504
        %2506 = vrot.lane.b32.xlu0 %v2485, 16
        %v2507 = vpop.permute.xlu0 %2506
        %2508 = vrot.lane.b32.xlu0 %v2486, 16
        %v2509 = vpop.permute.xlu0 %2508
        %2510 = vrot.lane.b32.xlu0 %v2487, 16
        %v2511 = vpop.permute.xlu0 %2510
        %vm2512 = vcmask 130048
        %v2513 = vsel %vm2512, %v2497, %v2499
        %v2514 = vsel %vm2512, %v2501, %v2503
        %v2515 = vsel %vm2512, %v2505, %v2507
        %v2516 = vsel %vm2512, %v2509, %v2511
        %2521 = vst [vmem:[#allocation3] sm:$0xff] %v2513
        %2522 = vst [vmem:[#allocation3 + $0x8] sm:$0xff] %v2514
        %2523 = vst [vmem:[#allocation3 + $0x10] sm:$0xff] %v2515
        %2524 = vst [vmem:[#allocation3 + $0x18] sm:$0xff] %v2516
        %v2525 = vld [vmem:[#allocation2] sm:$0xff]
        %v2526 = vld [vmem:[#allocation2 + $0x8] sm:$0xff]
        %v2527 = vld [vmem:[#allocation2 + $0x10] sm:$0xff]
        %v2528 = vld [vmem:[#allocation2 + $0x18] sm:$0xff]
        %v2529 = vld [vmem:[#allocation2 + $0x20] sm:$0xff]
        %v2530 = vld [vmem:[#allocation2 + $0x28] sm:$0xff]
        %v2531 = vld [vmem:[#allocation2 + $0x30] sm:$0xff]
        %v2532 = vld [vmem:[#allocation2 + $0x38] sm:$0xff]
        %2541 = vrot.lane.b32.xlu0 %v2525, 8
        %v2542 = vpop.permute.xlu0 %2541
        %2543 = vrot.lane.b32.xlu0 %v2526, 8
        %v2544 = vpop.permute.xlu0 %2543
        %2545 = vrot.lane.b32.xlu0 %v2527, 8
        %v2546 = vpop.permute.xlu0 %2545
        %2547 = vrot.lane.b32.xlu0 %v2528, 8
        %v2548 = vpop.permute.xlu0 %2547
        %2549 = vrot.lane.b32.xlu0 %v2529, 8
        %v2550 = vpop.permute.xlu0 %2549
        %2551 = vrot.lane.b32.xlu0 %v2530, 8
        %v2552 = vpop.permute.xlu0 %2551
        %2553 = vrot.lane.b32.xlu0 %v2531, 8
        %v2554 = vpop.permute.xlu0 %2553
        %2555 = vrot.lane.b32.xlu0 %v2532, 8
        %v2556 = vpop.permute.xlu0 %2555
        %v2557 = vsel %vm2001, %v2542, %v2544
        %v2558 = vsel %vm2001, %v2546, %v2548
        %v2559 = vsel %vm2001, %v2550, %v2552
        %v2560 = vsel %vm2001, %v2554, %v2556
        %2565 = vst [vmem:[#allocation3 + $0x20] sm:$0xff] %v2557
        %2566 = vst [vmem:[#allocation3 + $0x28] sm:$0xff] %v2558
        %2567 = vst [vmem:[#allocation3 + $0x30] sm:$0xff] %v2559
        %2568 = vst [vmem:[#allocation3 + $0x38] sm:$0xff] %v2560
        %v2569 = vld [vmem:[#allocation2 + $0x8] sm:$0xff]
        %v2570 = vld [vmem:[#allocation2 + $0x18] sm:$0xff]
        %v2571 = vld [vmem:[#allocation2 + $0x28] sm:$0xff]
        %v2572 = vld [vmem:[#allocation2 + $0x38] sm:$0xff]
        %2573 = vst [vmem:[#allocation3 + $0x40] sm:$0xff] %v2569
        %2574 = vst [vmem:[#allocation3 + $0x48] sm:$0xff] %v2570
        %2575 = vst [vmem:[#allocation3 + $0x50] sm:$0xff] %v2571
        %2576 = vst [vmem:[#allocation3 + $0x58] sm:$0xff] %v2572
        %s2577 = scalar_lea.vmem %s4, 192
        %v2578 = vld [vmem:[%s2577] sm:$0xff]
        %v2579 = vld [vmem:[%s2577 + $0x8] sm:$0xff]
        %v2580 = vld [vmem:[%s2577 + $0x10] sm:$0xff]
        %v2581 = vld [vmem:[%s2577 + $0x18] sm:$0xff]
        %v2582 = vld [vmem:[%s2577 + $0x20] sm:$0xff]
        %v2583 = vld [vmem:[%s2577 + $0x28] sm:$0xff]
        %v2584 = vld [vmem:[%s2577 + $0x30] sm:$0xff]
        %v2585 = vld [vmem:[%s2577 + $0x38] sm:$0xff]
        %v2586 = vld [vmem:[#allocation3] sm:$0xff]
        %v2587 = vld [vmem:[#allocation3 + $0x8] sm:$0xff]
        %v2588 = vld [vmem:[#allocation3 + $0x10] sm:$0xff]
        %v2589 = vld [vmem:[#allocation3 + $0x18] sm:$0xff]
        %v2590 = vld [vmem:[#allocation3 + $0x20] sm:$0xff]
        %v2591 = vld [vmem:[#allocation3 + $0x28] sm:$0xff]
        %v2592 = vld [vmem:[#allocation3 + $0x30] sm:$0xff]
        %v2593 = vld [vmem:[#allocation3 + $0x38] sm:$0xff]
        %v2594 = vld [vmem:[#allocation3 + $0x40] sm:$0xff]
        %v2595 = vld [vmem:[#allocation3 + $0x48] sm:$0xff]
        %v2596 = vld [vmem:[#allocation3 + $0x50] sm:$0xff]
        %v2597 = vld [vmem:[#allocation3 + $0x58] sm:$0xff]
        %v2598 = vld [vmem:[#allocation3 + $0x60] sm:$0xff]
        %v2599 = vld [vmem:[#allocation3 + $0x68] sm:$0xff]
        %v2600 = vld [vmem:[#allocation3 + $0x70] sm:$0xff]
        %v2601 = vld [vmem:[#allocation3 + $0x78] sm:$0xff]
        %s2602 = scalar_lea.vmem %s5, 192
        %v2603 = vld [vmem:[%s2602] sm:$0xff]
        %v2604 = vld [vmem:[%s2602 + $0x8] sm:$0xff]
        %v2605 = vld [vmem:[%s2602 + $0x10] sm:$0xff]
        %v2606 = vld [vmem:[%s2602 + $0x18] sm:$0xff]
        %v2607 = vld [vmem:[%s2602 + $0x20] sm:$0xff]
        %v2608 = vld [vmem:[%s2602 + $0x28] sm:$0xff]
        %v2609 = vld [vmem:[%s2602 + $0x30] sm:$0xff]
        %v2610 = vld [vmem:[%s2602 + $0x38] sm:$0xff]
        %2612 = vset.pattern.permute.xlu0 0
        %2613 = vperm.xlu0 %2612, %v2603
        %v2614 = vpop.permute.xlu0 %2613
        %2617 = vset.pattern.permute.xlu0 0
        %2618 = vperm.xlu0 %2617, %v2604
        %v2619 = vpop.permute.xlu0 %2618
        %2622 = vset.pattern.permute.xlu0 0
        %2623 = vperm.xlu0 %2622, %v2605
        %v2624 = vpop.permute.xlu0 %2623
        %2627 = vset.pattern.permute.xlu0 0
        %2628 = vperm.xlu0 %2627, %v2606
        %v2629 = vpop.permute.xlu0 %2628
        %2632 = vset.pattern.permute.xlu0 0
        %2633 = vperm.xlu0 %2632, %v2607
        %v2634 = vpop.permute.xlu0 %2633
        %2637 = vset.pattern.permute.xlu0 0
        %2638 = vperm.xlu0 %2637, %v2608
        %v2639 = vpop.permute.xlu0 %2638
        %2642 = vset.pattern.permute.xlu0 0
        %2643 = vperm.xlu0 %2642, %v2609
        %v2644 = vpop.permute.xlu0 %2643
        %2647 = vset.pattern.permute.xlu0 0
        %2648 = vperm.xlu0 %2647, %v2610
        %v2649 = vpop.permute.xlu0 %2648
        %2651 = vmatprep.subr.mxu0 0.0
        %2652 = vmatpush1.msra.mxu0 %v2586
        %2653 = vmatprep.subr.mxu0 0.0
        %2654 = vmatpush1.msra.mxu0 %v2587
        %2655 = vmatprep.subr.mxu0 0.0
        %2656 = vmatpush1.msra.mxu0 %v2588
        %2657 = vmatprep.subr.mxu0 0.0
        %2658 = vmatpush1.msra.mxu0 %v2589
        %2659 = vmatprep.subr.mxu0 0.0
        %2660 = vmatpush1.msra.mxu0 %v2590
        %2661 = vmatprep.subr.mxu0 0.0
        %2662 = vmatpush1.msra.mxu0 %v2591
        %2663 = vmatprep.subr.mxu0 0.0
        %2664 = vmatpush1.msra.mxu0 %v2592
        %2665 = vmatprep.subr.mxu0 0.0
        %2666 = vmatpush1.msra.mxu0 %v2593
        %2667 = vmatprep.subr.mxu0 0.0
        %2668 = vmatpush1.msra.mxu0 %v2594
        %2669 = vmatprep.subr.mxu0 0.0
        %2670 = vmatpush1.msra.mxu0 %v2595
        %2671 = vmatprep.subr.mxu0 0.0
        %2672 = vmatpush1.msra.mxu0 %v2596
        %2673 = vmatprep.subr.mxu0 0.0
        %2674 = vmatpush1.msra.mxu0 %v2597
        %2675 = vmatprep.subr.mxu0 0.0
        %2676 = vmatpush1.msra.mxu0 %v2598
        %2677 = vmatprep.subr.mxu0 0.0
        %2678 = vmatpush1.msra.mxu0 %v2599
        %2679 = vmatprep.subr.mxu0 0.0
        %2680 = vmatpush1.msra.mxu0 %v2600
        %2681 = vmatprep.subr.mxu0 0.0
        %2682 = vmatpush1.msra.mxu0 %v2601
        %2683 = vmatprep.subr.mxu0 0.0
        %2684 = vmatpush1.msra.mxu0 0.0
        %2685 = vmatprep.subr.mxu0 0.0
        %2686 = vmatpush1.msra.mxu0 0.0
        %2687 = vmatprep.subr.mxu0 0.0
        %2688 = vmatpush1.msra.mxu0 0.0
        %2689 = vmatprep.subr.mxu0 0.0
        %2690 = vmatpush1.msra.mxu0 0.0
        %2691 = vmatprep.subr.mxu0 0.0
        %2692 = vmatpush1.msra.mxu0 0.0
        %2693 = vmatprep.subr.mxu0 0.0
        %2694 = vmatpush1.msra.mxu0 0.0
        %2695 = vmatprep.subr.mxu0 0.0
        %2696 = vmatpush1.msra.mxu0 0.0
        %2697 = vmatprep.subr.mxu0 0.0
        %2698 = vmatpush1.msra.mxu0 0.0
        %2699 = vmatprep.subr.mxu0 0.0
        %2700 = vmatpush1.msra.mxu0 0.0
        %2701 = vmatprep.subr.mxu0 0.0
        %2702 = vmatpush1.msra.mxu0 0.0
        %2703 = vmatprep.subr.mxu0 0.0
        %2704 = vmatpush1.msra.mxu0 0.0
        %2705 = vmatprep.subr.mxu0 0.0
        %2706 = vmatpush1.msra.mxu0 0.0
        %2707 = vmatprep.subr.mxu0 0.0
        %2708 = vmatpush1.msra.mxu0 0.0
        %2709 = vmatprep.subr.mxu0 0.0
        %2710 = vmatpush1.msra.mxu0 0.0
        %2711 = vmatprep.subr.mxu0 0.0
        %2712 = vmatpush1.msra.mxu0 0.0
        %2713 = vmatprep.subr.mxu0 0.0
        %2714 = vmatpush1.msra.mxu0 0.0
        %2715 = vmatprep.mubr.f32.mxu0 0.0
        %2716 = vmatmul.mubr.f32.gmra.mrb[0].mxu0 %v2578
        %v2717 = vpop.f32.mrb[0].mxu0
        %v2718 = vadd.f32 %v2614, %v2717
        %v2719 = vpop.f32.mrb[0].mxu0
        %2720 = vmatprep.mubr.f32.mxu0 0.0
        %2721 = vmatmul.mubr.f32.gmra.mrb[0].mxu0 %v2579
        %v2722 = vpop.f32.mrb[0].mxu0
        %v2723 = vadd.f32 %v2619, %v2722
        %v2724 = vpop.f32.mrb[0].mxu0
        %2725 = vmatprep.mubr.f32.mxu0 0.0
        %2726 = vmatmul.mubr.f32.gmra.mrb[0].mxu0 %v2580
        %v2727 = vpop.f32.mrb[0].mxu0
        %v2728 = vadd.f32 %v2624, %v2727
        %v2729 = vpop.f32.mrb[0].mxu0
        %2730 = vmatprep.mubr.f32.mxu0 0.0
        %2731 = vmatmul.mubr.f32.gmra.mrb[0].mxu0 %v2581
        %v2732 = vpop.f32.mrb[0].mxu0
        %v2733 = vadd.f32 %v2629, %v2732
        %v2734 = vpop.f32.mrb[0].mxu0
        %2735 = vmatprep.mubr.f32.mxu0 0.0
        %2736 = vmatmul.mubr.f32.gmra.mrb[0].mxu0 %v2582
        %v2737 = vpop.f32.mrb[0].mxu0
        %v2738 = vadd.f32 %v2634, %v2737
        %v2739 = vpop.f32.mrb[0].mxu0
        %2740 = vmatprep.mubr.f32.mxu0 0.0
        %2741 = vmatmul.mubr.f32.gmra.mrb[0].mxu0 %v2583
        %v2742 = vpop.f32.mrb[0].mxu0
        %v2743 = vadd.f32 %v2639, %v2742
        %v2744 = vpop.f32.mrb[0].mxu0
        %2745 = vmatprep.mubr.f32.mxu0 0.0
        %2746 = vmatmul.mubr.f32.gmra.mrb[0].mxu0 %v2584
        %v2747 = vpop.f32.mrb[0].mxu0
        %v2748 = vadd.f32 %v2644, %v2747
        %v2749 = vpop.f32.mrb[0].mxu0
        %2750 = vmatprep.mubr.f32.mxu0 0.0
        %2751 = vmatmul.mubr.f32.gmra.mrb[0].mxu0 %v2585
        %v2752 = vpop.f32.mrb[0].mxu0
        %v2753 = vadd.f32 %v2649, %v2752
        %v2754 = vpop.f32.mrb[0].mxu0
        %2755 = vdwg.mxu0
        %v2756 = vtanh.pop %v2718
        %v2757 = vtanh.pop %v2723
        %v2758 = vtanh.pop %v2728
        %v2759 = vtanh.pop %v2733
        %v2760 = vxor.u32 %v2738, 2147483648
        %v2761 = vxor.u32 %v2743, 2147483648
        %v2762 = vxor.u32 %v2748, 2147483648
        %v2763 = vxor.u32 %v2753, 2147483648
        %v2764 = vmul.f32 %v2760, 1.442695
        %v2765 = vpow.pop %v2764
        %v2766 = vmul.f32 %v2761, 1.442695
        %v2767 = vpow.pop %v2766
        %v2768 = vmul.f32 %v2762, 1.442695
        %v2769 = vpow.pop %v2768
        %v2770 = vmul.f32 %v2763, 1.442695
        %v2771 = vpow.pop %v2770
        %v2772 = vadd.f32 %v2765, 1.0
        %v2773 = vadd.f32 %v2767, 1.0
        %v2774 = vadd.f32 %v2769, 1.0
        %v2775 = vadd.f32 %v2771, 1.0
        %v2776 = vrcp.pop %v2772
        %v2777 = vmul.f32 1.0, %v2776
        %v2778 = vrcp.pop %v2773
        %v2779 = vmul.f32 1.0, %v2778
        %v2780 = vrcp.pop %v2774
        %v2781 = vmul.f32 1.0, %v2780
        %v2782 = vrcp.pop %v2775
        %v2783 = vmul.f32 1.0, %v2782
        %v2784 = vmul.f32 %v2756, %v2777
        %v2785 = vmul.f32 %v2757, %v2779
        %v2786 = vmul.f32 %v2758, %v2781
        %v2787 = vmul.f32 %v2759, %v2783
        %s2788 = scalar_lea.vmem %s6, 192
        %v2789 = vld [vmem:[%s2788] sm:$0xff]
        %v2790 = vld [vmem:[%s2788 + $0x8] sm:$0xff]
        %v2791 = vld [vmem:[%s2788 + $0x10] sm:$0xff]
        %v2792 = vld [vmem:[%s2788 + $0x18] sm:$0xff]
        %v2793 = vld [vmem:[%s2788 + $0x20] sm:$0xff]
        %v2794 = vld [vmem:[%s2788 + $0x28] sm:$0xff]
        %v2795 = vld [vmem:[%s2788 + $0x30] sm:$0xff]
        %v2796 = vld [vmem:[%s2788 + $0x38] sm:$0xff]
        %s2797 = scalar_lea.vmem %s7, 192
        %v2798 = vld [vmem:[%s2797] sm:$0xff]
        %v2799 = vld [vmem:[%s2797 + $0x8] sm:$0xff]
        %v2800 = vld [vmem:[%s2797 + $0x10] sm:$0xff]
        %v2801 = vld [vmem:[%s2797 + $0x18] sm:$0xff]
        %v2802 = vld [vmem:[%s2797 + $0x20] sm:$0xff]
        %v2803 = vld [vmem:[%s2797 + $0x28] sm:$0xff]
        %v2804 = vld [vmem:[%s2797 + $0x30] sm:$0xff]
        %v2805 = vld [vmem:[%s2797 + $0x38] sm:$0xff]
        %2807 = vset.pattern.permute.xlu0 0
        %2808 = vperm.xlu0 %2807, %v2798
        %v2809 = vpop.permute.xlu0 %2808
        %2811 = vset.pattern.permute.xlu0 0
        %2812 = vperm.xlu0 %2811, %v2799
        %v2813 = vpop.permute.xlu0 %2812
        %2815 = vset.pattern.permute.xlu0 0
        %2816 = vperm.xlu0 %2815, %v2800
        %v2817 = vpop.permute.xlu0 %2816
        %2819 = vset.pattern.permute.xlu0 0
        %2820 = vperm.xlu0 %2819, %v2801
        %v2821 = vpop.permute.xlu0 %2820
        %2823 = vset.pattern.permute.xlu0 0
        %2824 = vperm.xlu0 %2823, %v2802
        %v2825 = vpop.permute.xlu0 %2824
        %2828 = vset.pattern.permute.xlu0 0
        %2829 = vperm.xlu0 %2828, %v2803
        %v2830 = vpop.permute.xlu0 %2829
        %2833 = vset.pattern.permute.xlu0 0
        %2834 = vperm.xlu0 %2833, %v2804
        %v2835 = vpop.permute.xlu0 %2834
        %2838 = vset.pattern.permute.xlu0 0
        %2839 = vperm.xlu0 %2838, %v2805
        %v2840 = vpop.permute.xlu0 %2839
        %v2843 = vsel %vm1312, %v2789, 0
        %v2846 = vsel %vm1312, %v2790, 0
        %v2849 = vsel %vm1312, %v2791, 0
        %v2852 = vsel %vm1312, %v2792, 0
        %v2855 = vsel %vm1312, %v2793, 0
        %v2858 = vsel %vm1312, %v2794, 0
        %v2861 = vsel %vm1312, %v2795, 0
        %v2864 = vsel %vm1312, %v2796, 0
        %2866 = vmatprep.subr.mxu0 0.0
        %2867 = vmatpush1.msra.mxu0 %v2784
        %2868 = vmatprep.subr.mxu0 0.0
        %2869 = vmatpush1.msra.mxu0 %v2785
        %2870 = vmatprep.subr.mxu0 0.0
        %2871 = vmatpush1.msra.mxu0 %v2786
        %2872 = vmatprep.subr.mxu0 0.0
        %2873 = vmatpush1.msra.mxu0 %v2787
        %2874 = vmatprep.subr.mxu0 0.0
        %2875 = vmatpush1.msra.mxu0 0.0
        %2876 = vmatprep.subr.mxu0 0.0
        %2877 = vmatpush1.msra.mxu0 0.0
        %2878 = vmatprep.subr.mxu0 0.0
        %2879 = vmatpush1.msra.mxu0 0.0
        %2880 = vmatprep.subr.mxu0 0.0
        %2881 = vmatpush1.msra.mxu0 0.0
        %2882 = vmatprep.subr.mxu0 0.0
        %2883 = vmatpush1.msra.mxu0 0.0
        %2884 = vmatprep.subr.mxu0 0.0
        %2885 = vmatpush1.msra.mxu0 0.0
        %2886 = vmatprep.subr.mxu0 0.0
        %2887 = vmatpush1.msra.mxu0 0.0
        %2888 = vmatprep.subr.mxu0 0.0
        %2889 = vmatpush1.msra.mxu0 0.0
        %2890 = vmatprep.subr.mxu0 0.0
        %2891 = vmatpush1.msra.mxu0 0.0
        %2892 = vmatprep.subr.mxu0 0.0
        %2893 = vmatpush1.msra.mxu0 0.0
        %2894 = vmatprep.subr.mxu0 0.0
        %2895 = vmatpush1.msra.mxu0 0.0
        %2896 = vmatprep.subr.mxu0 0.0
        %2897 = vmatpush1.msra.mxu0 0.0
        %2898 = vmatprep.subr.mxu0 0.0
        %2899 = vmatpush1.msra.mxu0 0.0
        %2900 = vmatprep.subr.mxu0 0.0
        %2901 = vmatpush1.msra.mxu0 0.0
        %2902 = vmatprep.subr.mxu0 0.0
        %2903 = vmatpush1.msra.mxu0 0.0
        %2904 = vmatprep.subr.mxu0 0.0
        %2905 = vmatpush1.msra.mxu0 0.0
        %2906 = vmatprep.subr.mxu0 0.0
        %2907 = vmatpush1.msra.mxu0 0.0
        %2908 = vmatprep.subr.mxu0 0.0
        %2909 = vmatpush1.msra.mxu0 0.0
        %2910 = vmatprep.subr.mxu0 0.0
        %2911 = vmatpush1.msra.mxu0 0.0
        %2912 = vmatprep.subr.mxu0 0.0
        %2913 = vmatpush1.msra.mxu0 0.0
        %2914 = vmatprep.subr.mxu0 0.0
        %2915 = vmatpush1.msra.mxu0 0.0
        %2916 = vmatprep.subr.mxu0 0.0
        %2917 = vmatpush1.msra.mxu0 0.0
        %2918 = vmatprep.subr.mxu0 0.0
        %2919 = vmatpush1.msra.mxu0 0.0
        %2920 = vmatprep.subr.mxu0 0.0
        %2921 = vmatpush1.msra.mxu0 0.0
        %2922 = vmatprep.subr.mxu0 0.0
        %2923 = vmatpush1.msra.mxu0 0.0
        %2924 = vmatprep.subr.mxu0 0.0
        %2925 = vmatpush1.msra.mxu0 0.0
        %2926 = vmatprep.subr.mxu0 0.0
        %2927 = vmatpush1.msra.mxu0 0.0
        %2928 = vmatprep.subr.mxu0 0.0
        %2929 = vmatpush1.msra.mxu0 0.0
        %2930 = vmatprep.mubr.f32.mxu0 0.0
        %2931 = vmatmul.mubr.f32.gmra.mrb[0].mxu0 %v2843
        %v2932 = vpop.f32.mrb[0].mxu0
        %v2933 = vpop.f32.mrb[0].mxu0
        %2934 = vmatprep.mubr.f32.mxu0 0.0
        %2935 = vmatmul.mubr.f32.gmra.mrb[0].mxu0 %v2846
        %v2936 = vpop.f32.mrb[0].mxu0
        %v2937 = vpop.f32.mrb[0].mxu0
        %2938 = vmatprep.mubr.f32.mxu0 0.0
        %2939 = vmatmul.mubr.f32.gmra.mrb[0].mxu0 %v2849
        %v2940 = vpop.f32.mrb[0].mxu0
        %v2941 = vpop.f32.mrb[0].mxu0
        %2942 = vmatprep.mubr.f32.mxu0 0.0
        %2943 = vmatmul.mubr.f32.gmra.mrb[0].mxu0 %v2852
        %v2944 = vpop.f32.mrb[0].mxu0
        %v2945 = vpop.f32.mrb[0].mxu0
        %2946 = vmatprep.mubr.f32.mxu0 0.0
        %2947 = vmatmul.mubr.f32.gmra.mrb[0].mxu0 %v2855
        %v2948 = vpop.f32.mrb[0].mxu0
        %v2949 = vadd.f32 %v2825, %v2948
        %v2950 = vpop.f32.mrb[0].mxu0
        %2951 = vmatprep.mubr.f32.mxu0 0.0
        %2952 = vmatmul.mubr.f32.gmra.mrb[0].mxu0 %v2858
        %v2953 = vpop.f32.mrb[0].mxu0
        %v2954 = vadd.f32 %v2830, %v2953
        %v2955 = vpop.f32.mrb[0].mxu0
        %2956 = vmatprep.mubr.f32.mxu0 0.0
        %2957 = vmatmul.mubr.f32.gmra.mrb[0].mxu0 %v2861
        %v2958 = vpop.f32.mrb[0].mxu0
        %v2959 = vadd.f32 %v2835, %v2958
        %v2960 = vpop.f32.mrb[0].mxu0
        %2961 = vmatprep.mubr.f32.mxu0 0.0
        %2962 = vmatmul.mubr.f32.gmra.mrb[0].mxu0 %v2864
        %v2963 = vpop.f32.mrb[0].mxu0
        %v2964 = vadd.f32 %v2840, %v2963
        %v2965 = vpop.f32.mrb[0].mxu0
        %2966 = vdwg.mxu0
        %v2967 = vadd.f32 %v2472, %v2949
        %v2968 = vadd.f32 %v2473, %v2954
        %v2969 = vadd.f32 %v2474, %v2959
        %v2970 = vadd.f32 %v2475, %v2964
        %v2971 = vmax.f32 %v2967, 0.0
        %v2972 = vmax.f32 %v2968, 0.0
        %v2973 = vmax.f32 %v2969, 0.0
        %v2974 = vmax.f32 %v2970, 0.0
        %v2975 = vld [vmem:[%s8] sm:$0xff]
        %v2976 = vld [vmem:[%s8 + $0x8] sm:$0xff]
        %v2977 = vld [vmem:[%s8 + $0x10] sm:$0xff]
        %v2978 = vld [vmem:[%s8 + $0x18] sm:$0xff]
        %v2979 = vld [vmem:[%s9] sm:$0xff]
        %v2980 = vld [vmem:[%s9 + $0x8] sm:$0xff]
        %v2981 = vld [vmem:[%s9 + $0x10] sm:$0xff]
        %v2982 = vld [vmem:[%s9 + $0x18] sm:$0xff]
        %2984 = vset.pattern.permute.xlu0 0
        %2985 = vperm.xlu0 %2984, %v2979
        %v2986 = vpop.permute.xlu0 %2985
        %2989 = vset.pattern.permute.xlu0 0
        %2990 = vperm.xlu0 %2989, %v2980
        %v2991 = vpop.permute.xlu0 %2990
        %2994 = vset.pattern.permute.xlu0 0
        %2995 = vperm.xlu0 %2994, %v2981
        %v2996 = vpop.permute.xlu0 %2995
        %2999 = vset.pattern.permute.xlu0 0
        %3000 = vperm.xlu0 %2999, %v2982
        %v3001 = vpop.permute.xlu0 %3000
        %v3004 = vsel %vm1312, %v2975, 0
        %v3007 = vsel %vm1312, %v2976, 0
        %v3010 = vsel %vm1312, %v2977, 0
        %v3013 = vsel %vm1312, %v2978, 0
        %3015 = vmatprep.subr.mxu0 0.0
        %3016 = vmatpush1.msra.mxu0 %v2971
        %3017 = vmatprep.subr.mxu0 0.0
        %3018 = vmatpush1.msra.mxu0 %v2972
        %3019 = vmatprep.subr.mxu0 0.0
        %3020 = vmatpush1.msra.mxu0 %v2973
        %3021 = vmatprep.subr.mxu0 0.0
        %3022 = vmatpush1.msra.mxu0 %v2974
        %3023 = vmatprep.subr.mxu0 0.0
        %3024 = vmatpush1.msra.mxu0 0.0
        %3025 = vmatprep.subr.mxu0 0.0
        %3026 = vmatpush1.msra.mxu0 0.0
        %3027 = vmatprep.subr.mxu0 0.0
        %3028 = vmatpush1.msra.mxu0 0.0
        %3029 = vmatprep.subr.mxu0 0.0
        %3030 = vmatpush1.msra.mxu0 0.0
        %3031 = vmatprep.subr.mxu0 0.0
        %3032 = vmatpush1.msra.mxu0 0.0
        %3033 = vmatprep.subr.mxu0 0.0
        %3034 = vmatpush1.msra.mxu0 0.0
        %3035 = vmatprep.subr.mxu0 0.0
        %3036 = vmatpush1.msra.mxu0 0.0
        %3037 = vmatprep.subr.mxu0 0.0
        %3038 = vmatpush1.msra.mxu0 0.0
        %3039 = vmatprep.subr.mxu0 0.0
        %3040 = vmatpush1.msra.mxu0 0.0
        %3041 = vmatprep.subr.mxu0 0.0
        %3042 = vmatpush1.msra.mxu0 0.0
        %3043 = vmatprep.subr.mxu0 0.0
        %3044 = vmatpush1.msra.mxu0 0.0
        %3045 = vmatprep.subr.mxu0 0.0
        %3046 = vmatpush1.msra.mxu0 0.0
        %3047 = vmatprep.subr.mxu0 0.0
        %3048 = vmatpush1.msra.mxu0 0.0
        %3049 = vmatprep.subr.mxu0 0.0
        %3050 = vmatpush1.msra.mxu0 0.0
        %3051 = vmatprep.subr.mxu0 0.0
        %3052 = vmatpush1.msra.mxu0 0.0
        %3053 = vmatprep.subr.mxu0 0.0
        %3054 = vmatpush1.msra.mxu0 0.0
        %3055 = vmatprep.subr.mxu0 0.0
        %3056 = vmatpush1.msra.mxu0 0.0
        %3057 = vmatprep.subr.mxu0 0.0
        %3058 = vmatpush1.msra.mxu0 0.0
        %3059 = vmatprep.subr.mxu0 0.0
        %3060 = vmatpush1.msra.mxu0 0.0
        %3061 = vmatprep.subr.mxu0 0.0
        %3062 = vmatpush1.msra.mxu0 0.0
        %3063 = vmatprep.subr.mxu0 0.0
        %3064 = vmatpush1.msra.mxu0 0.0
        %3065 = vmatprep.subr.mxu0 0.0
        %3066 = vmatpush1.msra.mxu0 0.0
        %3067 = vmatprep.subr.mxu0 0.0
        %3068 = vmatpush1.msra.mxu0 0.0
        %3069 = vmatprep.subr.mxu0 0.0
        %3070 = vmatpush1.msra.mxu0 0.0
        %3071 = vmatprep.subr.mxu0 0.0
        %3072 = vmatpush1.msra.mxu0 0.0
        %3073 = vmatprep.subr.mxu0 0.0
        %3074 = vmatpush1.msra.mxu0 0.0
        %3075 = vmatprep.subr.mxu0 0.0
        %3076 = vmatpush1.msra.mxu0 0.0
        %3077 = vmatprep.subr.mxu0 0.0
        %3078 = vmatpush1.msra.mxu0 0.0
        %3079 = vmatprep.mubr.f32.mxu0 0.0
        %3080 = vmatmul.mubr.f32.gmra.mrb[0].mxu0 %v3004
        %v3081 = vpop.f32.mrb[0].mxu0
        %v3082 = vadd.f32 %v2986, %v3081
        %v3083 = vpop.f32.mrb[0].mxu0
        %3084 = vmatprep.mubr.f32.mxu0 0.0
        %3085 = vmatmul.mubr.f32.gmra.mrb[0].mxu0 %v3007
        %v3086 = vpop.f32.mrb[0].mxu0
        %v3087 = vadd.f32 %v2991, %v3086
        %v3088 = vpop.f32.mrb[0].mxu0
        %3089 = vmatprep.mubr.f32.mxu0 0.0
        %3090 = vmatmul.mubr.f32.gmra.mrb[0].mxu0 %v3010
        %v3091 = vpop.f32.mrb[0].mxu0
        %v3092 = vadd.f32 %v2996, %v3091
        %v3093 = vpop.f32.mrb[0].mxu0
        %3094 = vmatprep.mubr.f32.mxu0 0.0
        %3095 = vmatmul.mubr.f32.gmra.mrb[0].mxu0 %v3013
        %v3096 = vpop.f32.mrb[0].mxu0
        %v3097 = vadd.f32 %v3001, %v3096
        %v3098 = vpop.f32.mrb[0].mxu0
        %3099 = vdwg.mxu0
        %v3100 = vmax.f32 %v3082, 0.0
        %v3101 = vmax.f32 %v3087, 0.0
        %v3102 = vmax.f32 %v3092, 0.0
        %v3103 = vmax.f32 %v3097, 0.0
        %v3104 = vld [vmem:[%s10] sm:$0x1]
        %v3105 = vld [vmem:[#allocation4] sm:$0x1]
        %3107 = vset.pattern.permute.xlu0 0
        %3108 = vperm.xlu0 %3107, %v3105
        %v3109 = vpop.permute.xlu0 %3108
        %v3111 = vlaneseq
        %v3112 = vshrl.u32 %v3111, 7
        %v3113 = vsub.s32 0, %v3112
        %v3114 = vrot.slane %v3109, %v3113
        %v3116 = vsel %vm1312, %v3104, 0
        %3118 = vmatprep.subr.mxu0 0.0
        %3119 = vmatpush1.msra.mxu0 %v3100
        %3120 = vmatprep.subr.mxu0 0.0
        %3121 = vmatpush1.msra.mxu0 %v3101
        %3122 = vmatprep.subr.mxu0 0.0
        %3123 = vmatpush1.msra.mxu0 %v3102
        %3124 = vmatprep.subr.mxu0 0.0
        %3125 = vmatpush1.msra.mxu0 %v3103
        %3126 = vmatprep.subr.mxu0 0.0
        %3127 = vmatpush1.msra.mxu0 0.0
        %3128 = vmatprep.subr.mxu0 0.0
        %3129 = vmatpush1.msra.mxu0 0.0
        %3130 = vmatprep.subr.mxu0 0.0
        %3131 = vmatpush1.msra.mxu0 0.0
        %3132 = vmatprep.subr.mxu0 0.0
        %3133 = vmatpush1.msra.mxu0 0.0
        %3134 = vmatprep.subr.mxu0 0.0
        %3135 = vmatpush1.msra.mxu0 0.0
        %3136 = vmatprep.subr.mxu0 0.0
        %3137 = vmatpush1.msra.mxu0 0.0
        %3138 = vmatprep.subr.mxu0 0.0
        %3139 = vmatpush1.msra.mxu0 0.0
        %3140 = vmatprep.subr.mxu0 0.0
        %3141 = vmatpush1.msra.mxu0 0.0
        %3142 = vmatprep.subr.mxu0 0.0
        %3143 = vmatpush1.msra.mxu0 0.0
        %3144 = vmatprep.subr.mxu0 0.0
        %3145 = vmatpush1.msra.mxu0 0.0
        %3146 = vmatprep.subr.mxu0 0.0
        %3147 = vmatpush1.msra.mxu0 0.0
        %3148 = vmatprep.subr.mxu0 0.0
        %3149 = vmatpush1.msra.mxu0 0.0
        %3150 = vmatprep.subr.mxu0 0.0
        %3151 = vmatpush1.msra.mxu0 0.0
        %3152 = vmatprep.subr.mxu0 0.0
        %3153 = vmatpush1.msra.mxu0 0.0
        %3154 = vmatprep.subr.mxu0 0.0
        %3155 = vmatpush1.msra.mxu0 0.0
        %3156 = vmatprep.subr.mxu0 0.0
        %3157 = vmatpush1.msra.mxu0 0.0
        %3158 = vmatprep.subr.mxu0 0.0
        %3159 = vmatpush1.msra.mxu0 0.0
        %3160 = vmatprep.subr.mxu0 0.0
        %3161 = vmatpush1.msra.mxu0 0.0
        %3162 = vmatprep.subr.mxu0 0.0
        %3163 = vmatpush1.msra.mxu0 0.0
        %3164 = vmatprep.subr.mxu0 0.0
        %3165 = vmatpush1.msra.mxu0 0.0
        %3166 = vmatprep.subr.mxu0 0.0
        %3167 = vmatpush1.msra.mxu0 0.0
        %3168 = vmatprep.subr.mxu0 0.0
        %3169 = vmatpush1.msra.mxu0 0.0
        %3170 = vmatprep.subr.mxu0 0.0
        %3171 = vmatpush1.msra.mxu0 0.0
        %3172 = vmatprep.subr.mxu0 0.0
        %3173 = vmatpush1.msra.mxu0 0.0
        %3174 = vmatprep.subr.mxu0 0.0
        %3175 = vmatpush1.msra.mxu0 0.0
        %3176 = vmatprep.subr.mxu0 0.0
        %3177 = vmatpush1.msra.mxu0 0.0
        %3178 = vmatprep.subr.mxu0 0.0
        %3179 = vmatpush1.msra.mxu0 0.0
        %3180 = vmatprep.subr.mxu0 0.0
        %3181 = vmatpush1.msra.mxu0 0.0
        %3182 = vmatprep.mubr.f32.mxu0 0.0
        %3183 = vmatmul.mubr.f32.gmra.mrb[0].mxu0 %v3116
        %v3184 = vpop.f32.mrb[0].mxu0
        %v3185 = vadd.f32 %v3114, %v3184
        %v3186 = vpop.f32.mrb[0].mxu0
        %3187 = vdwg.mxu0
        %3188 = vst [vmem:[%s420] sm:$0x1] %v3185
        %s3189 = sand.u32 %s298, 1
        %s3190 = scalar_lea.sflag [#allocation6], %s3189
        %s3191 = sand.u32 %s298, 1
        %s3192 = scalar_lea.vmem [#allocation5], %s3191
        // Predicated region
        $region69: #{_lambda_.1} parent=67 // pred_check
          %p3193 = pneg %p308
        $region70: #{_lambda_.1} parent=67 // pred_check_branch
          %3195 = sbr.rel (%p3193) target = $region72
        $region71: #{_lambda_.1} parent=67 // pred_region
          %s3197 = ssub.s32 16, 16
          %3198 = vsyncadd %s3190, %s3197
          %s3199 = smul.addr %s28, 16
          %s3200 = scalar_lea.hbm %s12, %s3199
          %s3202 = sshll.u32 %s3192, 4
          %s3203 = int_to_ptr.vmem [resolvable:$true] %s3202
          %3205 = dma.vmem_to_hbm [thread:$0]  %s3203, 16, %s3200, %s3190
        $region72: #{_lambda_.1} parent=67 // pred_fallthru
          _
      $region68: #{_lambda_.1} parent=5 // pred_fallthru
        _
      %p3206 = scmp.le.s32.totalorder 2, %s23
      // Predicated region
      $region73: #{_lambda_.1} parent=5 // pred_check
        %p3207 = pneg %p3206
      $region74: #{_lambda_.1} parent=5 // pred_check_branch
        %3209 = sbr.rel (%p3207) target = $region76
      $region75: #{_lambda_.1} parent=5 // pred_region
        %s3210 = ssub.s32 %s23, 2
        // Predicated region
        $region77: #{_lambda_.1} parent=75 // pred_check
          %p3211 = pneg %p314
        $region78: #{_lambda_.1} parent=75 // pred_check_branch
          %3213 = sbr.rel (%p3211) target = $region80
        $region79: #{_lambda_.1} parent=75 // pred_region
          %s3214 = sand.u32 %s299, 1
          %s3215 = scalar_lea.sflag [#allocation6], %s3214
          %s3216 = sand.u32 %s299, 1
          %s3217 = scalar_lea.vmem [#allocation5], %s3216
          %3218 = dma.done %s3215, 16
        $region80: #{_lambda_.1} parent=75 // pred_fallthru
          _
      $region76: #{_lambda_.1} parent=5 // pred_fallthru
        _
    $region6: #{_lambda_.1} parent=1 // loop_footer
      %s27 = sadd.s32 1, %s23
    $region7: #{_lambda_.1} parent=1 // loop_footer_branch
      %22 = sbr.rel target = $region3
    $region8: #{_lambda_.1} parent=1 // loop_exit
      _
    %3219 = vsyncpa [#allocation6], 1
    %s3220 = scalar_lea.sflag [#allocation6], 1
    %3221 = vsyncpa %s3220, 1

</llo_original>
